<compile_context>
chip_gen: v7x
topology: tpu7x:2x2x1
jax: 0.10.0
libtpu: 0.0.40
codegen_flags: <defaults>
</compile_context>

<pallas_src>
import numpy as np
import jax
import jax.numpy as jnp
from jax import lax
from jax.experimental import pallas as pl
from jax.experimental.pallas import tpu as pltpu

# ----------------------------- small synthetic config -----------------------------
B = 2            # batch
S = 8            # sequence length
H = 32           # hidden_size
NH = 4           # num_attention_heads
DH = H // NH     # head_size = 8
FF = 64          # intermediate_size
K = 5            # conv_depthwise_kernel_size (odd)
PAD = (K - 1) // 2
LN_EPS = 1e-5
BN_EPS = 1e-5
SCALING = DH ** (-0.5)
R = B * S        # folded batch*time rows

f32 = jnp.float32
bf16 = jnp.bfloat16


# ----------------------------------- kernel ---------------------------------------
def _layer_norm(x, g, b):
    mu = jnp.mean(x, axis=-1, keepdims=True)
    var = jnp.mean((x - mu) ** 2, axis=-1, keepdims=True)
    return (x - mu) * lax.rsqrt(var + LN_EPS) * g + b


def _swish(x):
    return x * jax.nn.sigmoid(x)


def conformer_layer_kernel(
    x_ref, cos_ref, sin_ref,
    ln1_g, ln1_b, f1_wi, f1_bi, f1_wo, f1_bo,
    lna_g, lna_b, wqkv, bqkv, wo, bo,
    lnc_g, lnc_b, pw1, dww, bnb, pw2,
    ln2_g, ln2_b, f2_wi, f2_bi, f2_wo, f2_bo,
    lnf_g, lnf_b,
    out_ref, attw_ref,
):
    x = x_ref[...].reshape(R, H)                       # fold batch into sublanes

    def mm(a, w_ref):
        # bf16 operands, f32 accumulation on the MXU
        return jnp.dot(a.astype(bf16), w_ref[...], preferred_element_type=f32)

    def ffn(h, wi, bi, wo_, bo_):
        h = mm(h, wi) + bi[...]
        h = _swish(h)
        return mm(h, wo_) + bo_[...]

    # ---------------- FFN1 (half-step residual) ----------------
    residual = x
    h = _layer_norm(x, ln1_g[...], ln1_b[...])
    h = ffn(h, f1_wi, f1_bi, f1_wo, f1_bo)
    h = h * 0.5 + residual

    # ---------------- rotary self-attention ----------------
    residual = h
    hs = _layer_norm(h, lna_g[...], lna_b[...])
    qkv = mm(hs, wqkv) + bqkv[...]                     # fused QKV projection, (R, 3H)
    q = qkv[:, 0:H]
    k = qkv[:, H:2 * H]
    v = qkv[:, 2 * H:3 * H]

    # rotary tables broadcast across the folded batch rows (hoisted out of head loop)
    cos_bs = jnp.concatenate([cos_ref[...]] * B, axis=0)   # (R, DH)
    sin_bs = jnp.concatenate([sin_ref[...]] * B, axis=0)
    half = DH // 2

    ctx_parts = []
    w_parts = []
    for hd in range(NH):                               # static head loop; lane slices only
        lo = hd * DH
        qh = q[:, lo:lo + DH]                          # (R, DH)
        kh = k[:, lo:lo + DH]
        vh = v[:, lo:lo + DH]
        # rotate_half via lane slices (exact permutation, no MXU)
        qh = qh * cos_bs + jnp.concatenate([-qh[:, half:], qh[:, :half]], axis=-1) * sin_bs
        kh = kh * cos_bs + jnp.concatenate([-kh[:, half:], kh[:, :half]], axis=-1) * sin_bs
        qb = qh.reshape(B, S, DH)
        kb = kh.reshape(B, S, DH)
        vb = vh.reshape(B, S, DH)
        # scores = Q @ K^T / scaling (literal division from the source module)
        scores = jnp.einsum("bqd,bkd->bqk", qb.astype(bf16), kb.astype(bf16),
                            preferred_element_type=f32) / SCALING
        m = jnp.max(scores, axis=-1, keepdims=True)
        e = jnp.exp(scores - m)
        w = e * pl.reciprocal(jnp.sum(e, axis=-1, keepdims=True), approx=True)
        w_parts.append(w)                              # (B, S, S)
        ctx = jnp.einsum("bqk,bkd->bqd", w.astype(bf16), vb.astype(bf16),
                         preferred_element_type=f32)
        ctx_parts.append(ctx.reshape(R, DH))

    attw_ref[...] = jnp.concatenate(w_parts, axis=-1)  # (B, S, NH*S) lane-packed
    attn_ctx = jnp.concatenate(ctx_parts, axis=-1)     # (R, H), heads back on lanes
    h = mm(attn_ctx, wo) + bo[...] + residual

    # ---------------- convolution module ----------------
    residual = h
    c = _layer_norm(h, lnc_g[...], lnc_b[...])
    ag = mm(c, pw1)                                    # fused pointwise_conv1 (no bias)
    c = ag[:, :H] * jax.nn.sigmoid(ag[:, H:])          # GLU
    # depthwise conv (SAME padding) per batch: zero-padded time slices, no matmuls.
    c3 = c.reshape(B, S, H)
    zpad = jnp.zeros((B, PAD, H), f32)
    cpad = jnp.concatenate([zpad, c3, zpad], axis=1)   # (B, S + 2*PAD, H)
    dw = dww[...]                                      # (K, 1, H), BN scale pre-folded
    dconv = jnp.zeros((B, S, H), f32)
    for kk in range(K):
        dconv = dconv + cpad[:, kk:kk + S, :] * dw[kk]
    c = dconv.reshape(R, H) + bnb[...]                 # BatchNorm1d (eval) shift
    c = _swish(c)
    c = mm(c, pw2)                                     # pointwise_conv2 (no bias)
    h = residual + c

    # ---------------- FFN2 (half-step residual) ----------------
    residual = h
    h2 = _layer_norm(h, ln2_g[...], ln2_b[...])
    h2 = ffn(h2, f2_wi, f2_bi, f2_wo, f2_bo)
    h = h2 * 0.5 + residual

    # ---------------- final layer norm ----------------
    out_ref[...] = _layer_norm(h, lnf_g[...], lnf_b[...]).reshape(B, S, H)


# ----------------------------------- wrapper ---------------------------------------
KERNEL_PARAM_ORDER = [
    "ln1_g", "ln1_b", "f1_wi", "f1_bi", "f1_wo", "f1_bo",
    "lna_g", "lna_b", "wqkv", "bqkv", "wo", "bo",
    "lnc_g", "lnc_b", "pw1", "dww_f", "bnb_f", "pw2",
    "ln2_g", "ln2_b", "f2_wi", "f2_bi", "f2_wo", "f2_bo",
    "lnf_g", "lnf_b",
]

_F32_PASSTHROUGH = (
    "ln1_g", "ln1_b", "lna_g", "lna_b", "lnc_g", "lnc_b", "ln2_g", "ln2_b",
    "lnf_g", "lnf_b", "f1_bi", "f1_bo", "f2_bi", "f2_bo", "bo",
)
_BF16_WEIGHTS = ("f1_wi", "f1_wo", "f2_wi", "f2_wo", "wo", "pw2")


def prepare_params(p):
    """Fuse / fold / cast logical parameters for the kernel (done once, outside)."""
    kp = {name: p[name] for name in _F32_PASSTHROUGH}
    for name in _BF16_WEIGHTS:
        kp[name] = p[name].astype(bf16)
    kp["wqkv"] = jnp.concatenate([p["wq"], p["wk"], p["wv"]], axis=1).astype(bf16)
    kp["bqkv"] = jnp.concatenate([p["bq"], p["bk"], p["bv"]], axis=1)
    kp["pw1"] = jnp.concatenate([p["pw1a"], p["pw1b"]], axis=1).astype(bf16)
    kp["dww_f"] = p["dww"] * p["bns"]        # fold BatchNorm (eval) scale into depthwise w
    kp["bnb_f"] = p["bnb"]
    return kp


def _full_spec(shape):
    nd = len(shape)
    return pl.BlockSpec(shape, lambda i, _nd=nd: (0,) * _nd)


def run_layer(x, cos, sin, params):
    kp = prepare_params(params)
    inputs = [x, cos, sin] + [kp[name] for name in KERNEL_PARAM_ORDER]
    in_specs = [_full_spec(a.shape) for a in inputs]
    out_shape = (
        jax.ShapeDtypeStruct((B, S, H), jnp.float32),
        jax.ShapeDtypeStruct((B, S, NH * S), jnp.float32),   # heads packed on lanes
    )
    out_specs = (
        _full_spec((B, S, H)),
        _full_spec((B, S, NH * S)),
    )
    fn = pl.pallas_call(
        conformer_layer_kernel,
        grid=(1,),                       # batch folded into the block: single grid step
        in_specs=in_specs,
        out_specs=out_specs,
        out_shape=out_shape,
        compiler_params=pltpu.CompilerParams(dimension_semantics=("arbitrary",)),
    )
    out, attw_packed = fn(*inputs)
    # unpack lane-packed attention weights -> (B, NH, S, S) to match the module
    attw = attw_packed.reshape(B, S, NH, S).transpose(0, 2, 1, 3)
    return out, attw


# -------------------------- deterministic parameter init ---------------------------
def init_params(key):
    keys = jax.random.split(key, 64)
    it = iter(keys)

    def n(shape, scale):
        return scale * jax.random.normal(next(it), shape, dtype=jnp.float32)

    p = {}
    for ln in ("ln1", "lna", "lnc", "ln2", "lnf"):
        p[ln + "_g"] = 1.0 + n((1, H), 0.02)
        p[ln + "_b"] = n((1, H), 0.02)
    for f in ("f1", "f2"):
        p[f + "_wi"] = n((H, FF), 0.05)
        p[f + "_bi"] = n((1, FF), 0.02)
        p[f + "_wo"] = n((FF, H), 0.05)
        p[f + "_bo"] = n((1, H), 0.02)
    for name in ("wq", "wk", "wv", "wo"):
        p[name] = n((H, H), 0.05)     # torch Linear weight, pre-transposed (in, out)
    for name in ("bq", "bk", "bv", "bo"):
        p[name] = n((1, H), 0.02)
    # conv module
    p["pw1a"] = n((H, H), 0.05)       # pointwise_conv1 weight, GLU first half (in, out)
    p["pw1b"] = n((H, H), 0.05)       # pointwise_conv1 weight, GLU gate half
    p["dww"] = n((K, 1, H), 0.1)      # depthwise weight: torch (C,1,K) -> (K,1,C)
    p["pw2"] = n((H, H), 0.05)
    # BatchNorm1d (eval): fold gamma/beta/running stats into scale & shift
    gamma = 1.0 + n((1, H), 0.02)
    beta = n((1, H), 0.02)
    rmean = n((1, H), 0.02)
    rvar = 1.0 + 0.1 * jnp.abs(n((1, H), 1.0))
    bscale = gamma / jnp.sqrt(rvar + BN_EPS)
    p["bns"] = bscale
    p["bnb"] = beta - rmean * bscale
    return p


def make_rope(seq, dim):
    inv_freq = 1.0 / (10000.0 ** (np.arange(0, dim, 2, dtype=np.float32) / dim))
    t = np.arange(seq, dtype=np.float32)
    freqs = np.outer(t, inv_freq)                   # (S, dim/2)
    emb = np.concatenate([freqs, freqs], axis=-1)   # (S, dim)
    return jnp.asarray(np.cos(emb)), jnp.asarray(np.sin(emb))


# -------------------------- pure-JAX reference (for checking) ----------------------
# Matmuls use the same bf16-operand / f32-accumulate convention as the kernel so the
# self-check isolates implementation errors rather than dtype policy.
def reference_forward(x, cos, sin, p):
    def mmr(a, w):
        return jnp.dot(a.astype(bf16), w.astype(bf16), preferred_element_type=f32)

    def ln(v, g, b):
        mu = jnp.mean(v, axis=-1, keepdims=True)
        var = jnp.mean((v - mu) ** 2, axis=-1, keepdims=True)
        return (v - mu) / jnp.sqrt(var + LN_EPS) * g + b

    def ffn(v, wi, bi, wo_, bo_):
        h = mmr(v, wi) + bi
        h = h * jax.nn.sigmoid(h)
        return mmr(h, wo_) + bo_

    residual = x
    h = ln(x, p["ln1_g"], p["ln1_b"])
    h = ffn(h, p["f1_wi"], p["f1_bi"], p["f1_wo"], p["f1_bo"])
    h = h * 0.5 + residual

    residual = h
    hs = ln(h, p["lna_g"], p["lna_b"])
    q = (mmr(hs, p["wq"]) + p["bq"]).reshape(B, S, NH, DH).transpose(0, 2, 1, 3)
    k = (mmr(hs, p["wk"]) + p["bk"]).reshape(B, S, NH, DH).transpose(0, 2, 1, 3)
    v = (mmr(hs, p["wv"]) + p["bv"]).reshape(B, S, NH, DH).transpose(0, 2, 1, 3)
    c4, s4 = cos[None, None], sin[None, None]

    def rh(t):
        t1, t2 = t[..., : DH // 2], t[..., DH // 2:]
        return jnp.concatenate([-t2, t1], axis=-1)

    q = q * c4 + rh(q) * s4
    k = k * c4 + rh(k) * s4
    scores = jnp.einsum("bhqd,bhkd->bhqk", q.astype(bf16), k.astype(bf16),
                        preferred_element_type=f32) / SCALING
    w = jax.nn.softmax(scores, axis=-1)
    ctx = jnp.einsum("bhqk,bhkd->bhqd", w.astype(bf16), v.astype(bf16),
                     preferred_element_type=f32)
    ctx = ctx.transpose(0, 2, 1, 3).reshape(B, S, H)
    h = (mmr(ctx, p["wo"]) + p["bo"]) + residual

    residual = h
    c = ln(h, p["lnc_g"], p["lnc_b"])
    c = mmr(c, p["pw1a"]) * jax.nn.sigmoid(mmr(c, p["pw1b"]))
    cpad = jnp.pad(c, ((0, 0), (PAD, PAD), (0, 0)))
    dconv = jnp.zeros_like(c)
    for kk in range(K):
        dconv = dconv + cpad[:, kk:kk + S, :] * p["dww"][kk]
    c = dconv * p["bns"] + p["bnb"]
    c = c * jax.nn.sigmoid(c)
    c = mmr(c, p["pw2"])
    h = residual + c

    residual = h
    h2 = ln(h, p["ln2_g"], p["ln2_b"])
    h2 = ffn(h2, p["f2_wi"], p["f2_bi"], p["f2_wo"], p["f2_bo"])
    h = h2 * 0.5 + residual
    return ln(h, p["lnf_g"], p["lnf_b"]), w


# -------------------------------------- main ---------------------------------------
if __name__ == "__main__":
    key = jax.random.PRNGKey(0)
    kx, kp = jax.random.split(key)
    hidden_states = jax.random.normal(kx, (B, S, H), dtype=jnp.float32)
    params = init_params(kp)
    cos, sin = make_rope(S, DH)

    out, attw = run_layer(hidden_states, cos, sin, params)
    out = jax.block_until_ready(out)
    attw = jax.block_until_ready(attw)

    ref_out, ref_w = reference_forward(hidden_states, cos, sin, params)
    assert out.shape == (B, S, H) and attw.shape == (B, NH, S, S)
    assert jnp.allclose(out, ref_out, rtol=2e-2, atol=2e-2), float(
        jnp.max(jnp.abs(out - ref_out)))
    assert jnp.allclose(attw, ref_w, rtol=2e-2, atol=2e-2), float(
        jnp.max(jnp.abs(attw - ref_w)))
    print("KERNEL_OK")
</pallas_src>

<mosaic_0001>
module attributes {stable_mosaic.version = 11 : i64} {
  func.func @conformer_layer_kernel(%arg0: i32, %arg1: memref<2x8x32xf32, #tpu.memory_space<vmem>>, %arg2: memref<8x8xf32, #tpu.memory_space<vmem>>, %arg3: memref<8x8xf32, #tpu.memory_space<vmem>>, %arg4: memref<1x32xf32, #tpu.memory_space<vmem>>, %arg5: memref<1x32xf32, #tpu.memory_space<vmem>>, %arg6: memref<32x64xbf16, #tpu.memory_space<vmem>>, %arg7: memref<1x64xf32, #tpu.memory_space<vmem>>, %arg8: memref<64x32xbf16, #tpu.memory_space<vmem>>, %arg9: memref<1x32xf32, #tpu.memory_space<vmem>>, %arg10: memref<1x32xf32, #tpu.memory_space<vmem>>, %arg11: memref<1x32xf32, #tpu.memory_space<vmem>>, %arg12: memref<32x96xbf16, #tpu.memory_space<vmem>>, %arg13: memref<1x96xf32, #tpu.memory_space<vmem>>, %arg14: memref<32x32xbf16, #tpu.memory_space<vmem>>, %arg15: memref<1x32xf32, #tpu.memory_space<vmem>>, %arg16: memref<1x32xf32, #tpu.memory_space<vmem>>, %arg17: memref<1x32xf32, #tpu.memory_space<vmem>>, %arg18: memref<32x64xbf16, #tpu.memory_space<vmem>>, %arg19: memref<5x1x32xf32, #tpu.memory_space<vmem>>, %arg20: memref<1x32xf32, #tpu.memory_space<vmem>>, %arg21: memref<32x32xbf16, #tpu.memory_space<vmem>>, %arg22: memref<1x32xf32, #tpu.memory_space<vmem>>, %arg23: memref<1x32xf32, #tpu.memory_space<vmem>>, %arg24: memref<32x64xbf16, #tpu.memory_space<vmem>>, %arg25: memref<1x64xf32, #tpu.memory_space<vmem>>, %arg26: memref<64x32xbf16, #tpu.memory_space<vmem>>, %arg27: memref<1x32xf32, #tpu.memory_space<vmem>>, %arg28: memref<1x32xf32, #tpu.memory_space<vmem>>, %arg29: memref<1x32xf32, #tpu.memory_space<vmem>>, %arg30: memref<2x8x32xf32, #tpu.memory_space<vmem>>, %arg31: memref<2x8x32xf32, #tpu.memory_space<vmem>>) attributes {dimension_semantics = [#tpu.dimension_semantics<arbitrary>], iteration_bounds = array<i64: 1>, scalar_prefetch = 0 : i64, scratch_operands = 0 : i64, tpu.core_type = #tpu.core_type<tc>, window_params = [{pipeline_mode = #tpu.pipeline_mode<synchronous>, transform_indices = @transform_0, window_bounds = array<i64: 2, 8, 32>}, {pipeline_mode = #tpu.pipeline_mode<synchronous>, transform_indices = @transform_1, window_bounds = array<i64: 8, 8>}, {pipeline_mode = #tpu.pipeline_mode<synchronous>, transform_indices = @transform_2, window_bounds = array<i64: 8, 8>}, {pipeline_mode = #tpu.pipeline_mode<synchronous>, transform_indices = @transform_3, window_bounds = array<i64: 1, 32>}, {pipeline_mode = #tpu.pipeline_mode<synchronous>, transform_indices = @transform_4, window_bounds = array<i64: 1, 32>}, {pipeline_mode = #tpu.pipeline_mode<synchronous>, transform_indices = @transform_5, window_bounds = array<i64: 32, 64>}, {pipeline_mode = #tpu.pipeline_mode<synchronous>, transform_indices = @transform_6, window_bounds = array<i64: 1, 64>}, {pipeline_mode = #tpu.pipeline_mode<synchronous>, transform_indices = @transform_7, window_bounds = array<i64: 64, 32>}, {pipeline_mode = #tpu.pipeline_mode<synchronous>, transform_indices = @transform_8, window_bounds = array<i64: 1, 32>}, {pipeline_mode = #tpu.pipeline_mode<synchronous>, transform_indices = @transform_9, window_bounds = array<i64: 1, 32>}, {pipeline_mode = #tpu.pipeline_mode<synchronous>, transform_indices = @transform_10, window_bounds = array<i64: 1, 32>}, {pipeline_mode = #tpu.pipeline_mode<synchronous>, transform_indices = @transform_11, window_bounds = array<i64: 32, 96>}, {pipeline_mode = #tpu.pipeline_mode<synchronous>, transform_indices = @transform_12, window_bounds = array<i64: 1, 96>}, {pipeline_mode = #tpu.pipeline_mode<synchronous>, transform_indices = @transform_13, window_bounds = array<i64: 32, 32>}, {pipeline_mode = #tpu.pipeline_mode<synchronous>, transform_indices = @transform_14, window_bounds = array<i64: 1, 32>}, {pipeline_mode = #tpu.pipeline_mode<synchronous>, transform_indices = @transform_15, window_bounds = array<i64: 1, 32>}, {pipeline_mode = #tpu.pipeline_mode<synchronous>, transform_indices = @transform_16, window_bounds = array<i64: 1, 32>}, {pipeline_mode = #tpu.pipeline_mode<synchronous>, transform_indices = @transform_17, window_bounds = array<i64: 32, 64>}, {pipeline_mode = #tpu.pipeline_mode<synchronous>, transform_indices = @transform_18, window_bounds = array<i64: 5, 1, 32>}, {pipeline_mode = #tpu.pipeline_mode<synchronous>, transform_indices = @transform_19, window_bounds = array<i64: 1, 32>}, {pipeline_mode = #tpu.pipeline_mode<synchronous>, transform_indices = @transform_20, window_bounds = array<i64: 32, 32>}, {pipeline_mode = #tpu.pipeline_mode<synchronous>, transform_indices = @transform_21, window_bounds = array<i64: 1, 32>}, {pipeline_mode = #tpu.pipeline_mode<synchronous>, transform_indices = @transform_22, window_bounds = array<i64: 1, 32>}, {pipeline_mode = #tpu.pipeline_mode<synchronous>, transform_indices = @transform_23, window_bounds = array<i64: 32, 64>}, {pipeline_mode = #tpu.pipeline_mode<synchronous>, transform_indices = @transform_24, window_bounds = array<i64: 1, 64>}, {pipeline_mode = #tpu.pipeline_mode<synchronous>, transform_indices = @transform_25, window_bounds = array<i64: 64, 32>}, {pipeline_mode = #tpu.pipeline_mode<synchronous>, transform_indices = @transform_26, window_bounds = array<i64: 1, 32>}, {pipeline_mode = #tpu.pipeline_mode<synchronous>, transform_indices = @transform_27, window_bounds = array<i64: 1, 32>}, {pipeline_mode = #tpu.pipeline_mode<synchronous>, transform_indices = @transform_28, window_bounds = array<i64: 1, 32>}, {pipeline_mode = #tpu.pipeline_mode<synchronous>, transform_indices = @transform_29, window_bounds = array<i64: 2, 8, 32>}, {pipeline_mode = #tpu.pipeline_mode<synchronous>, transform_indices = @transform_30, window_bounds = array<i64: 2, 8, 32>}]} {
    %c0 = arith.constant 0 : index
    %c0_0 = arith.constant 0 : index
    %c0_1 = arith.constant 0 : index
    %0 = vector.load %arg1[%c0, %c0_0, %c0_1] : memref<2x8x32xf32, #tpu.memory_space<vmem>>, vector<2x8x32xf32>
    %1 = vector.shape_cast %0 : vector<2x8x32xf32> to vector<16x32xf32>
    %c0_2 = arith.constant 0 : index
    %c0_3 = arith.constant 0 : index
    %2 = vector.load %arg4[%c0_2, %c0_3] : memref<1x32xf32, #tpu.memory_space<vmem>>, vector<1x32xf32>
    %c0_4 = arith.constant 0 : index
    %c0_5 = arith.constant 0 : index
    %3 = vector.load %arg5[%c0_4, %c0_5] : memref<1x32xf32, #tpu.memory_space<vmem>>, vector<1x32xf32>
    %cst = arith.constant dense<0.000000e+00> : vector<16xf32>
    %4 = vector.multi_reduction <add>, %1, %cst [1] : vector<16x32xf32> to vector<16xf32>
    %5 = vector.shape_cast %4 : vector<16xf32> to vector<16x1xf32>
    %cst_6 = arith.constant 3.200000e+01 : f32
    %6 = vector.broadcast %cst_6 : f32 to vector<16x1xf32>
    %7 = arith.divf %5, %6 : vector<16x1xf32>
    %8 = vector.broadcast %7 : vector<16x1xf32> to vector<16x32xf32>
    %9 = arith.subf %1, %8 : vector<16x32xf32>
    %10 = arith.mulf %9, %9 : vector<16x32xf32>
    %cst_7 = arith.constant dense<0.000000e+00> : vector<16xf32>
    %11 = vector.multi_reduction <add>, %10, %cst_7 [1] : vector<16x32xf32> to vector<16xf32>
    %12 = vector.shape_cast %11 : vector<16xf32> to vector<16x1xf32>
    %cst_8 = arith.constant 3.200000e+01 : f32
    %13 = vector.broadcast %cst_8 : f32 to vector<16x1xf32>
    %14 = arith.divf %12, %13 : vector<16x1xf32>
    %15 = vector.broadcast %7 : vector<16x1xf32> to vector<16x32xf32>
    %16 = arith.subf %1, %15 : vector<16x32xf32>
    %cst_9 = arith.constant 9.99999974E-6 : f32
    %17 = vector.broadcast %cst_9 : f32 to vector<16x1xf32>
    %18 = arith.addf %14, %17 : vector<16x1xf32>
    %19 = math.rsqrt %18 : vector<16x1xf32>
    %20 = vector.broadcast %19 : vector<16x1xf32> to vector<16x32xf32>
    %21 = arith.mulf %16, %20 : vector<16x32xf32>
    %22 = vector.broadcast %2 : vector<1x32xf32> to vector<16x32xf32>
    %23 = arith.mulf %21, %22 : vector<16x32xf32>
    %24 = vector.broadcast %3 : vector<1x32xf32> to vector<16x32xf32>
    %25 = arith.addf %23, %24 : vector<16x32xf32>
    %26 = arith.truncf %25 : vector<16x32xf32> to vector<16x32xbf16>
    %c0_10 = arith.constant 0 : index
    %c0_11 = arith.constant 0 : index
    %27 = vector.load %arg6[%c0_10, %c0_11] : memref<32x64xbf16, #tpu.memory_space<vmem>>, vector<32x64xbf16>
    %cst_12 = arith.constant dense<0.000000e+00> : vector<16x64xf32>
    %28 = tpu.matmul %26, %27, %cst_12 {dimension_numbers = #tpu.dot_dimension_numbers<[1], [0], [0], [1], [0, 0, 1, 1], [], []>} : vector<16x32xbf16>, vector<32x64xbf16>, vector<16x64xf32> -> vector<16x64xf32>
    %c0_13 = arith.constant 0 : index
    %c0_14 = arith.constant 0 : index
    %29 = vector.load %arg7[%c0_13, %c0_14] : memref<1x64xf32, #tpu.memory_space<vmem>>, vector<1x64xf32>
    %30 = vector.broadcast %29 : vector<1x64xf32> to vector<16x64xf32>
    %31 = arith.addf %28, %30 : vector<16x64xf32>
    %32 = arith.negf %31 : vector<16x64xf32>
    %33 = math.exp %32 : vector<16x64xf32>
    %cst_15 = arith.constant 1.000000e+00 : f32
    %34 = vector.broadcast %cst_15 : f32 to vector<16x64xf32>
    %35 = arith.addf %34, %33 : vector<16x64xf32>
    %36 = arith.divf %34, %35 : vector<16x64xf32>
    %37 = arith.mulf %31, %36 : vector<16x64xf32>
    %38 = arith.truncf %37 : vector<16x64xf32> to vector<16x64xbf16>
    %c0_16 = arith.constant 0 : index
    %c0_17 = arith.constant 0 : index
    %39 = vector.load %arg8[%c0_16, %c0_17] : memref<64x32xbf16, #tpu.memory_space<vmem>>, vector<64x32xbf16>
    %cst_18 = arith.constant dense<0.000000e+00> : vector<16x32xf32>
    %40 = tpu.matmul %38, %39, %cst_18 {dimension_numbers = #tpu.dot_dimension_numbers<[1], [0], [0], [1], [0, 0, 1, 1], [], []>} : vector<16x64xbf16>, vector<64x32xbf16>, vector<16x32xf32> -> vector<16x32xf32>
    %c0_19 = arith.constant 0 : index
    %c0_20 = arith.constant 0 : index
    %41 = vector.load %arg9[%c0_19, %c0_20] : memref<1x32xf32, #tpu.memory_space<vmem>>, vector<1x32xf32>
    %42 = vector.broadcast %41 : vector<1x32xf32> to vector<16x32xf32>
    %43 = arith.addf %40, %42 : vector<16x32xf32>
    %cst_21 = arith.constant 5.000000e-01 : f32
    %44 = vector.broadcast %cst_21 : f32 to vector<16x32xf32>
    %45 = arith.mulf %43, %44 : vector<16x32xf32>
    %46 = arith.addf %45, %1 : vector<16x32xf32>
    %c0_22 = arith.constant 0 : index
    %c0_23 = arith.constant 0 : index
    %47 = vector.load %arg10[%c0_22, %c0_23] : memref<1x32xf32, #tpu.memory_space<vmem>>, vector<1x32xf32>
    %c0_24 = arith.constant 0 : index
    %c0_25 = arith.constant 0 : index
    %48 = vector.load %arg11[%c0_24, %c0_25] : memref<1x32xf32, #tpu.memory_space<vmem>>, vector<1x32xf32>
    %cst_26 = arith.constant dense<0.000000e+00> : vector<16xf32>
    %49 = vector.multi_reduction <add>, %46, %cst_26 [1] : vector<16x32xf32> to vector<16xf32>
    %50 = vector.shape_cast %49 : vector<16xf32> to vector<16x1xf32>
    %cst_27 = arith.constant 3.200000e+01 : f32
    %51 = vector.broadcast %cst_27 : f32 to vector<16x1xf32>
    %52 = arith.divf %50, %51 : vector<16x1xf32>
    %53 = vector.broadcast %52 : vector<16x1xf32> to vector<16x32xf32>
    %54 = arith.subf %46, %53 : vector<16x32xf32>
    %55 = arith.mulf %54, %54 : vector<16x32xf32>
    %cst_28 = arith.constant dense<0.000000e+00> : vector<16xf32>
    %56 = vector.multi_reduction <add>, %55, %cst_28 [1] : vector<16x32xf32> to vector<16xf32>
    %57 = vector.shape_cast %56 : vector<16xf32> to vector<16x1xf32>
    %cst_29 = arith.constant 3.200000e+01 : f32
    %58 = vector.broadcast %cst_29 : f32 to vector<16x1xf32>
    %59 = arith.divf %57, %58 : vector<16x1xf32>
    %60 = vector.broadcast %52 : vector<16x1xf32> to vector<16x32xf32>
    %61 = arith.subf %46, %60 : vector<16x32xf32>
    %cst_30 = arith.constant 9.99999974E-6 : f32
    %62 = vector.broadcast %cst_30 : f32 to vector<16x1xf32>
    %63 = arith.addf %59, %62 : vector<16x1xf32>
    %64 = math.rsqrt %63 : vector<16x1xf32>
    %65 = vector.broadcast %64 : vector<16x1xf32> to vector<16x32xf32>
    %66 = arith.mulf %61, %65 : vector<16x32xf32>
    %67 = vector.broadcast %47 : vector<1x32xf32> to vector<16x32xf32>
    %68 = arith.mulf %66, %67 : vector<16x32xf32>
    %69 = vector.broadcast %48 : vector<1x32xf32> to vector<16x32xf32>
    %70 = arith.addf %68, %69 : vector<16x32xf32>
    %71 = arith.truncf %70 : vector<16x32xf32> to vector<16x32xbf16>
    %c0_31 = arith.constant 0 : index
    %c0_32 = arith.constant 0 : index
    %72 = vector.load %arg12[%c0_31, %c0_32] : memref<32x96xbf16, #tpu.memory_space<vmem>>, vector<32x96xbf16>
    %cst_33 = arith.constant dense<0.000000e+00> : vector<16x96xf32>
    %73 = tpu.matmul %71, %72, %cst_33 {dimension_numbers = #tpu.dot_dimension_numbers<[1], [0], [0], [1], [0, 0, 1, 1], [], []>} : vector<16x32xbf16>, vector<32x96xbf16>, vector<16x96xf32> -> vector<16x96xf32>
    %c0_34 = arith.constant 0 : index
    %c0_35 = arith.constant 0 : index
    %74 = vector.load %arg13[%c0_34, %c0_35] : memref<1x96xf32, #tpu.memory_space<vmem>>, vector<1x96xf32>
    %75 = vector.broadcast %74 : vector<1x96xf32> to vector<16x96xf32>
    %76 = arith.addf %73, %75 : vector<16x96xf32>
    %77 = vector.extract_strided_slice %76 {offsets = [0, 0], sizes = [16, 32], strides = [1, 1]} : vector<16x96xf32> to vector<16x32xf32>
    %78 = vector.extract_strided_slice %76 {offsets = [0, 32], sizes = [16, 32], strides = [1, 1]} : vector<16x96xf32> to vector<16x32xf32>
    %79 = vector.extract_strided_slice %76 {offsets = [0, 64], sizes = [16, 32], strides = [1, 1]} : vector<16x96xf32> to vector<16x32xf32>
    %c0_36 = arith.constant 0 : index
    %c0_37 = arith.constant 0 : index
    %80 = vector.load %arg2[%c0_36, %c0_37] : memref<8x8xf32, #tpu.memory_space<vmem>>, vector<8x8xf32>
    %81 = tpu.concatenate %80, %80 in 0 : vector<8x8xf32>, vector<8x8xf32> -> vector<16x8xf32>
    %c0_38 = arith.constant 0 : index
    %c0_39 = arith.constant 0 : index
    %82 = vector.load %arg3[%c0_38, %c0_39] : memref<8x8xf32, #tpu.memory_space<vmem>>, vector<8x8xf32>
    %83 = tpu.concatenate %82, %82 in 0 : vector<8x8xf32>, vector<8x8xf32> -> vector<16x8xf32>
    %84 = vector.extract_strided_slice %77 {offsets = [0, 0], sizes = [16, 8], strides = [1, 1]} : vector<16x32xf32> to vector<16x8xf32>
    %85 = vector.extract_strided_slice %78 {offsets = [0, 0], sizes = [16, 8], strides = [1, 1]} : vector<16x32xf32> to vector<16x8xf32>
    %86 = vector.extract_strided_slice %79 {offsets = [0, 0], sizes = [16, 8], strides = [1, 1]} : vector<16x32xf32> to vector<16x8xf32>
    %87 = arith.mulf %84, %81 : vector<16x8xf32>
    %88 = vector.extract_strided_slice %84 {offsets = [0, 4], sizes = [16, 4], strides = [1, 1]} : vector<16x8xf32> to vector<16x4xf32>
    %cst_40 = arith.constant 0.000000e+00 : f32
    %89 = vector.broadcast %cst_40 : f32 to vector<16x4xf32>
    %90 = arith.subf %89, %88 : vector<16x4xf32>
    %91 = vector.extract_strided_slice %84 {offsets = [0, 0], sizes = [16, 4], strides = [1, 1]} : vector<16x8xf32> to vector<16x4xf32>
    %92 = tpu.concatenate %90, %91 in 1 : vector<16x4xf32>, vector<16x4xf32> -> vector<16x8xf32>
    %93 = arith.mulf %92, %83 : vector<16x8xf32>
    %94 = arith.addf %87, %93 : vector<16x8xf32>
    %95 = arith.mulf %85, %81 : vector<16x8xf32>
    %96 = vector.extract_strided_slice %85 {offsets = [0, 4], sizes = [16, 4], strides = [1, 1]} : vector<16x8xf32> to vector<16x4xf32>
    %cst_41 = arith.constant 0.000000e+00 : f32
    %97 = vector.broadcast %cst_41 : f32 to vector<16x4xf32>
    %98 = arith.subf %97, %96 : vector<16x4xf32>
    %99 = vector.extract_strided_slice %85 {offsets = [0, 0], sizes = [16, 4], strides = [1, 1]} : vector<16x8xf32> to vector<16x4xf32>
    %100 = tpu.concatenate %98, %99 in 1 : vector<16x4xf32>, vector<16x4xf32> -> vector<16x8xf32>
    %101 = arith.mulf %100, %83 : vector<16x8xf32>
    %102 = arith.addf %95, %101 : vector<16x8xf32>
    %103 = vector.shape_cast %94 : vector<16x8xf32> to vector<2x8x8xf32>
    %104 = vector.shape_cast %102 : vector<16x8xf32> to vector<2x8x8xf32>
    %105 = vector.shape_cast %86 : vector<16x8xf32> to vector<2x8x8xf32>
    %106 = arith.truncf %103 : vector<2x8x8xf32> to vector<2x8x8xbf16>
    %107 = arith.truncf %104 : vector<2x8x8xf32> to vector<2x8x8xbf16>
    "tpu.trace_start"() <{level = 10 : i32, message = "bqd,bkd->bqk"}> : () -> ()
    %cst_42 = arith.constant dense<0.000000e+00> : vector<2x8x8xf32>
    %108 = tpu.matmul %106, %107, %cst_42 {dimension_numbers = #tpu.dot_dimension_numbers<[2], [2], [1], [1], [0, 0, 0, 1, 1, 1], [0], [0]>} : vector<2x8x8xbf16>, vector<2x8x8xbf16>, vector<2x8x8xf32> -> vector<2x8x8xf32>
    "tpu.trace_stop"() : () -> ()
    %cst_43 = arith.constant 0.353553385 : f32
    %109 = vector.broadcast %cst_43 : f32 to vector<2x8x8xf32>
    %110 = arith.divf %108, %109 : vector<2x8x8xf32>
    %cst_44 = arith.constant dense<0xFF800000> : vector<2x8xf32>
    %111 = vector.multi_reduction <maximumf>, %110, %cst_44 [2] : vector<2x8x8xf32> to vector<2x8xf32>
    %112 = vector.shape_cast %111 : vector<2x8xf32> to vector<2x8x1xf32>
    %113 = vector.broadcast %112 : vector<2x8x1xf32> to vector<2x8x8xf32>
    %114 = arith.subf %110, %113 : vector<2x8x8xf32>
    %115 = math.exp %114 : vector<2x8x8xf32>
    %cst_45 = arith.constant dense<0.000000e+00> : vector<2x8xf32>
    %116 = vector.multi_reduction <add>, %115, %cst_45 [2] : vector<2x8x8xf32> to vector<2x8xf32>
    %117 = vector.shape_cast %116 : vector<2x8xf32> to vector<2x8x1xf32>
    %118 = tpu.reciprocal %117 {approx = true} : vector<2x8x1xf32> -> vector<2x8x1xf32>
    %119 = vector.broadcast %118 : vector<2x8x1xf32> to vector<2x8x8xf32>
    %120 = arith.mulf %115, %119 : vector<2x8x8xf32>
    %121 = arith.truncf %120 : vector<2x8x8xf32> to vector<2x8x8xbf16>
    %122 = arith.truncf %105 : vector<2x8x8xf32> to vector<2x8x8xbf16>
    "tpu.trace_start"() <{level = 10 : i32, message = "bqk,bkd->bqd"}> : () -> ()
    %cst_46 = arith.constant dense<0.000000e+00> : vector<2x8x8xf32>
    %123 = tpu.matmul %121, %122, %cst_46 {dimension_numbers = #tpu.dot_dimension_numbers<[2], [1], [1], [2], [0, 0, 0, 1, 1, 2], [0], [0]>} : vector<2x8x8xbf16>, vector<2x8x8xbf16>, vector<2x8x8xf32> -> vector<2x8x8xf32>
    "tpu.trace_stop"() : () -> ()
    %124 = vector.shape_cast %123 : vector<2x8x8xf32> to vector<16x8xf32>
    %125 = vector.extract_strided_slice %77 {offsets = [0, 8], sizes = [16, 8], strides = [1, 1]} : vector<16x32xf32> to vector<16x8xf32>
    %126 = vector.extract_strided_slice %78 {offsets = [0, 8], sizes = [16, 8], strides = [1, 1]} : vector<16x32xf32> to vector<16x8xf32>
    %127 = vector.extract_strided_slice %79 {offsets = [0, 8], sizes = [16, 8], strides = [1, 1]} : vector<16x32xf32> to vector<16x8xf32>
    %128 = arith.mulf %125, %81 : vector<16x8xf32>
    %129 = vector.extract_strided_slice %125 {offsets = [0, 4], sizes = [16, 4], strides = [1, 1]} : vector<16x8xf32> to vector<16x4xf32>
    %cst_47 = arith.constant 0.000000e+00 : f32
    %130 = vector.broadcast %cst_47 : f32 to vector<16x4xf32>
    %131 = arith.subf %130, %129 : vector<16x4xf32>
    %132 = vector.extract_strided_slice %125 {offsets = [0, 0], sizes = [16, 4], strides = [1, 1]} : vector<16x8xf32> to vector<16x4xf32>
    %133 = tpu.concatenate %131, %132 in 1 : vector<16x4xf32>, vector<16x4xf32> -> vector<16x8xf32>
    %134 = arith.mulf %133, %83 : vector<16x8xf32>
    %135 = arith.addf %128, %134 : vector<16x8xf32>
    %136 = arith.mulf %126, %81 : vector<16x8xf32>
    %137 = vector.extract_strided_slice %126 {offsets = [0, 4], sizes = [16, 4], strides = [1, 1]} : vector<16x8xf32> to vector<16x4xf32>
    %cst_48 = arith.constant 0.000000e+00 : f32
    %138 = vector.broadcast %cst_48 : f32 to vector<16x4xf32>
    %139 = arith.subf %138, %137 : vector<16x4xf32>
    %140 = vector.extract_strided_slice %126 {offsets = [0, 0], sizes = [16, 4], strides = [1, 1]} : vector<16x8xf32> to vector<16x4xf32>
    %141 = tpu.concatenate %139, %140 in 1 : vector<16x4xf32>, vector<16x4xf32> -> vector<16x8xf32>
    %142 = arith.mulf %141, %83 : vector<16x8xf32>
    %143 = arith.addf %136, %142 : vector<16x8xf32>
    %144 = vector.shape_cast %135 : vector<16x8xf32> to vector<2x8x8xf32>
    %145 = vector.shape_cast %143 : vector<16x8xf32> to vector<2x8x8xf32>
    %146 = vector.shape_cast %127 : vector<16x8xf32> to vector<2x8x8xf32>
    %147 = arith.truncf %144 : vector<2x8x8xf32> to vector<2x8x8xbf16>
    %148 = arith.truncf %145 : vector<2x8x8xf32> to vector<2x8x8xbf16>
    "tpu.trace_start"() <{level = 10 : i32, message = "bqd,bkd->bqk"}> : () -> ()
    %cst_49 = arith.constant dense<0.000000e+00> : vector<2x8x8xf32>
    %149 = tpu.matmul %147, %148, %cst_49 {dimension_numbers = #tpu.dot_dimension_numbers<[2], [2], [1], [1], [0, 0, 0, 1, 1, 1], [0], [0]>} : vector<2x8x8xbf16>, vector<2x8x8xbf16>, vector<2x8x8xf32> -> vector<2x8x8xf32>
    "tpu.trace_stop"() : () -> ()
    %cst_50 = arith.constant 0.353553385 : f32
    %150 = vector.broadcast %cst_50 : f32 to vector<2x8x8xf32>
    %151 = arith.divf %149, %150 : vector<2x8x8xf32>
    %cst_51 = arith.constant dense<0xFF800000> : vector<2x8xf32>
    %152 = vector.multi_reduction <maximumf>, %151, %cst_51 [2] : vector<2x8x8xf32> to vector<2x8xf32>
    %153 = vector.shape_cast %152 : vector<2x8xf32> to vector<2x8x1xf32>
    %154 = vector.broadcast %153 : vector<2x8x1xf32> to vector<2x8x8xf32>
    %155 = arith.subf %151, %154 : vector<2x8x8xf32>
    %156 = math.exp %155 : vector<2x8x8xf32>
    %cst_52 = arith.constant dense<0.000000e+00> : vector<2x8xf32>
    %157 = vector.multi_reduction <add>, %156, %cst_52 [2] : vector<2x8x8xf32> to vector<2x8xf32>
    %158 = vector.shape_cast %157 : vector<2x8xf32> to vector<2x8x1xf32>
    %159 = tpu.reciprocal %158 {approx = true} : vector<2x8x1xf32> -> vector<2x8x1xf32>
    %160 = vector.broadcast %159 : vector<2x8x1xf32> to vector<2x8x8xf32>
    %161 = arith.mulf %156, %160 : vector<2x8x8xf32>
    %162 = arith.truncf %161 : vector<2x8x8xf32> to vector<2x8x8xbf16>
    %163 = arith.truncf %146 : vector<2x8x8xf32> to vector<2x8x8xbf16>
    "tpu.trace_start"() <{level = 10 : i32, message = "bqk,bkd->bqd"}> : () -> ()
    %cst_53 = arith.constant dense<0.000000e+00> : vector<2x8x8xf32>
    %164 = tpu.matmul %162, %163, %cst_53 {dimension_numbers = #tpu.dot_dimension_numbers<[2], [1], [1], [2], [0, 0, 0, 1, 1, 2], [0], [0]>} : vector<2x8x8xbf16>, vector<2x8x8xbf16>, vector<2x8x8xf32> -> vector<2x8x8xf32>
    "tpu.trace_stop"() : () -> ()
    %165 = vector.shape_cast %164 : vector<2x8x8xf32> to vector<16x8xf32>
    %166 = vector.extract_strided_slice %77 {offsets = [0, 16], sizes = [16, 8], strides = [1, 1]} : vector<16x32xf32> to vector<16x8xf32>
    %167 = vector.extract_strided_slice %78 {offsets = [0, 16], sizes = [16, 8], strides = [1, 1]} : vector<16x32xf32> to vector<16x8xf32>
    %168 = vector.extract_strided_slice %79 {offsets = [0, 16], sizes = [16, 8], strides = [1, 1]} : vector<16x32xf32> to vector<16x8xf32>
    %169 = arith.mulf %166, %81 : vector<16x8xf32>
    %170 = vector.extract_strided_slice %166 {offsets = [0, 4], sizes = [16, 4], strides = [1, 1]} : vector<16x8xf32> to vector<16x4xf32>
    %cst_54 = arith.constant 0.000000e+00 : f32
    %171 = vector.broadcast %cst_54 : f32 to vector<16x4xf32>
    %172 = arith.subf %171, %170 : vector<16x4xf32>
    %173 = vector.extract_strided_slice %166 {offsets = [0, 0], sizes = [16, 4], strides = [1, 1]} : vector<16x8xf32> to vector<16x4xf32>
    %174 = tpu.concatenate %172, %173 in 1 : vector<16x4xf32>, vector<16x4xf32> -> vector<16x8xf32>
    %175 = arith.mulf %174, %83 : vector<16x8xf32>
    %176 = arith.addf %169, %175 : vector<16x8xf32>
    %177 = arith.mulf %167, %81 : vector<16x8xf32>
    %178 = vector.extract_strided_slice %167 {offsets = [0, 4], sizes = [16, 4], strides = [1, 1]} : vector<16x8xf32> to vector<16x4xf32>
    %cst_55 = arith.constant 0.000000e+00 : f32
    %179 = vector.broadcast %cst_55 : f32 to vector<16x4xf32>
    %180 = arith.subf %179, %178 : vector<16x4xf32>
    %181 = vector.extract_strided_slice %167 {offsets = [0, 0], sizes = [16, 4], strides = [1, 1]} : vector<16x8xf32> to vector<16x4xf32>
    %182 = tpu.concatenate %180, %181 in 1 : vector<16x4xf32>, vector<16x4xf32> -> vector<16x8xf32>
    %183 = arith.mulf %182, %83 : vector<16x8xf32>
    %184 = arith.addf %177, %183 : vector<16x8xf32>
    %185 = vector.shape_cast %176 : vector<16x8xf32> to vector<2x8x8xf32>
    %186 = vector.shape_cast %184 : vector<16x8xf32> to vector<2x8x8xf32>
    %187 = vector.shape_cast %168 : vector<16x8xf32> to vector<2x8x8xf32>
    %188 = arith.truncf %185 : vector<2x8x8xf32> to vector<2x8x8xbf16>
    %189 = arith.truncf %186 : vector<2x8x8xf32> to vector<2x8x8xbf16>
    "tpu.trace_start"() <{level = 10 : i32, message = "bqd,bkd->bqk"}> : () -> ()
    %cst_56 = arith.constant dense<0.000000e+00> : vector<2x8x8xf32>
    %190 = tpu.matmul %188, %189, %cst_56 {dimension_numbers = #tpu.dot_dimension_numbers<[2], [2], [1], [1], [0, 0, 0, 1, 1, 1], [0], [0]>} : vector<2x8x8xbf16>, vector<2x8x8xbf16>, vector<2x8x8xf32> -> vector<2x8x8xf32>
    "tpu.trace_stop"() : () -> ()
    %cst_57 = arith.constant 0.353553385 : f32
    %191 = vector.broadcast %cst_57 : f32 to vector<2x8x8xf32>
    %192 = arith.divf %190, %191 : vector<2x8x8xf32>
    %cst_58 = arith.constant dense<0xFF800000> : vector<2x8xf32>
    %193 = vector.multi_reduction <maximumf>, %192, %cst_58 [2] : vector<2x8x8xf32> to vector<2x8xf32>
    %194 = vector.shape_cast %193 : vector<2x8xf32> to vector<2x8x1xf32>
    %195 = vector.broadcast %194 : vector<2x8x1xf32> to vector<2x8x8xf32>
    %196 = arith.subf %192, %195 : vector<2x8x8xf32>
    %197 = math.exp %196 : vector<2x8x8xf32>
    %cst_59 = arith.constant dense<0.000000e+00> : vector<2x8xf32>
    %198 = vector.multi_reduction <add>, %197, %cst_59 [2] : vector<2x8x8xf32> to vector<2x8xf32>
    %199 = vector.shape_cast %198 : vector<2x8xf32> to vector<2x8x1xf32>
    %200 = tpu.reciprocal %199 {approx = true} : vector<2x8x1xf32> -> vector<2x8x1xf32>
    %201 = vector.broadcast %200 : vector<2x8x1xf32> to vector<2x8x8xf32>
    %202 = arith.mulf %197, %201 : vector<2x8x8xf32>
    %203 = arith.truncf %202 : vector<2x8x8xf32> to vector<2x8x8xbf16>
    %204 = arith.truncf %187 : vector<2x8x8xf32> to vector<2x8x8xbf16>
    "tpu.trace_start"() <{level = 10 : i32, message = "bqk,bkd->bqd"}> : () -> ()
    %cst_60 = arith.constant dense<0.000000e+00> : vector<2x8x8xf32>
    %205 = tpu.matmul %203, %204, %cst_60 {dimension_numbers = #tpu.dot_dimension_numbers<[2], [1], [1], [2], [0, 0, 0, 1, 1, 2], [0], [0]>} : vector<2x8x8xbf16>, vector<2x8x8xbf16>, vector<2x8x8xf32> -> vector<2x8x8xf32>
    "tpu.trace_stop"() : () -> ()
    %206 = vector.shape_cast %205 : vector<2x8x8xf32> to vector<16x8xf32>
    %207 = vector.extract_strided_slice %77 {offsets = [0, 24], sizes = [16, 8], strides = [1, 1]} : vector<16x32xf32> to vector<16x8xf32>
    %208 = vector.extract_strided_slice %78 {offsets = [0, 24], sizes = [16, 8], strides = [1, 1]} : vector<16x32xf32> to vector<16x8xf32>
    %209 = vector.extract_strided_slice %79 {offsets = [0, 24], sizes = [16, 8], strides = [1, 1]} : vector<16x32xf32> to vector<16x8xf32>
    %210 = arith.mulf %207, %81 : vector<16x8xf32>
    %211 = vector.extract_strided_slice %207 {offsets = [0, 4], sizes = [16, 4], strides = [1, 1]} : vector<16x8xf32> to vector<16x4xf32>
    %cst_61 = arith.constant 0.000000e+00 : f32
    %212 = vector.broadcast %cst_61 : f32 to vector<16x4xf32>
    %213 = arith.subf %212, %211 : vector<16x4xf32>
    %214 = vector.extract_strided_slice %207 {offsets = [0, 0], sizes = [16, 4], strides = [1, 1]} : vector<16x8xf32> to vector<16x4xf32>
    %215 = tpu.concatenate %213, %214 in 1 : vector<16x4xf32>, vector<16x4xf32> -> vector<16x8xf32>
    %216 = arith.mulf %215, %83 : vector<16x8xf32>
    %217 = arith.addf %210, %216 : vector<16x8xf32>
    %218 = arith.mulf %208, %81 : vector<16x8xf32>
    %219 = vector.extract_strided_slice %208 {offsets = [0, 4], sizes = [16, 4], strides = [1, 1]} : vector<16x8xf32> to vector<16x4xf32>
    %cst_62 = arith.constant 0.000000e+00 : f32
    %220 = vector.broadcast %cst_62 : f32 to vector<16x4xf32>
    %221 = arith.subf %220, %219 : vector<16x4xf32>
    %222 = vector.extract_strided_slice %208 {offsets = [0, 0], sizes = [16, 4], strides = [1, 1]} : vector<16x8xf32> to vector<16x4xf32>
    %223 = tpu.concatenate %221, %222 in 1 : vector<16x4xf32>, vector<16x4xf32> -> vector<16x8xf32>
    %224 = arith.mulf %223, %83 : vector<16x8xf32>
    %225 = arith.addf %218, %224 : vector<16x8xf32>
    %226 = vector.shape_cast %217 : vector<16x8xf32> to vector<2x8x8xf32>
    %227 = vector.shape_cast %225 : vector<16x8xf32> to vector<2x8x8xf32>
    %228 = vector.shape_cast %209 : vector<16x8xf32> to vector<2x8x8xf32>
    %229 = arith.truncf %226 : vector<2x8x8xf32> to vector<2x8x8xbf16>
    %230 = arith.truncf %227 : vector<2x8x8xf32> to vector<2x8x8xbf16>
    "tpu.trace_start"() <{level = 10 : i32, message = "bqd,bkd->bqk"}> : () -> ()
    %cst_63 = arith.constant dense<0.000000e+00> : vector<2x8x8xf32>
    %231 = tpu.matmul %229, %230, %cst_63 {dimension_numbers = #tpu.dot_dimension_numbers<[2], [2], [1], [1], [0, 0, 0, 1, 1, 1], [0], [0]>} : vector<2x8x8xbf16>, vector<2x8x8xbf16>, vector<2x8x8xf32> -> vector<2x8x8xf32>
    "tpu.trace_stop"() : () -> ()
    %cst_64 = arith.constant 0.353553385 : f32
    %232 = vector.broadcast %cst_64 : f32 to vector<2x8x8xf32>
    %233 = arith.divf %231, %232 : vector<2x8x8xf32>
    %cst_65 = arith.constant dense<0xFF800000> : vector<2x8xf32>
    %234 = vector.multi_reduction <maximumf>, %233, %cst_65 [2] : vector<2x8x8xf32> to vector<2x8xf32>
    %235 = vector.shape_cast %234 : vector<2x8xf32> to vector<2x8x1xf32>
    %236 = vector.broadcast %235 : vector<2x8x1xf32> to vector<2x8x8xf32>
    %237 = arith.subf %233, %236 : vector<2x8x8xf32>
    %238 = math.exp %237 : vector<2x8x8xf32>
    %cst_66 = arith.constant dense<0.000000e+00> : vector<2x8xf32>
    %239 = vector.multi_reduction <add>, %238, %cst_66 [2] : vector<2x8x8xf32> to vector<2x8xf32>
    %240 = vector.shape_cast %239 : vector<2x8xf32> to vector<2x8x1xf32>
    %241 = tpu.reciprocal %240 {approx = true} : vector<2x8x1xf32> -> vector<2x8x1xf32>
    %242 = vector.broadcast %241 : vector<2x8x1xf32> to vector<2x8x8xf32>
    %243 = arith.mulf %238, %242 : vector<2x8x8xf32>
    %244 = arith.truncf %243 : vector<2x8x8xf32> to vector<2x8x8xbf16>
    %245 = arith.truncf %228 : vector<2x8x8xf32> to vector<2x8x8xbf16>
    "tpu.trace_start"() <{level = 10 : i32, message = "bqk,bkd->bqd"}> : () -> ()
    %cst_67 = arith.constant dense<0.000000e+00> : vector<2x8x8xf32>
    %246 = tpu.matmul %244, %245, %cst_67 {dimension_numbers = #tpu.dot_dimension_numbers<[2], [1], [1], [2], [0, 0, 0, 1, 1, 2], [0], [0]>} : vector<2x8x8xbf16>, vector<2x8x8xbf16>, vector<2x8x8xf32> -> vector<2x8x8xf32>
    "tpu.trace_stop"() : () -> ()
    %247 = vector.shape_cast %246 : vector<2x8x8xf32> to vector<16x8xf32>
    %248 = tpu.concatenate %120, %161, %202, %243 in 2 : vector<2x8x8xf32>, vector<2x8x8xf32>, vector<2x8x8xf32>, vector<2x8x8xf32> -> vector<2x8x32xf32>
    %c0_68 = arith.constant 0 : index
    %c0_69 = arith.constant 0 : index
    %c0_70 = arith.constant 0 : index
    %249 = vector.load %arg31[%c0_68, %c0_69, %c0_70] : memref<2x8x32xf32, #tpu.memory_space<vmem>>, vector<2x8x32xf32>
    tpu.vector_store %arg31[%c0_68, %c0_69, %c0_70], %248 {strides = array<i32>} : memref<2x8x32xf32, #tpu.memory_space<vmem>>, vector<2x8x32xf32>,
    %250 = tpu.concatenate %124, %165, %206, %247 in 1 : vector<16x8xf32>, vector<16x8xf32>, vector<16x8xf32>, vector<16x8xf32> -> vector<16x32xf32>
    %251 = arith.truncf %250 : vector<16x32xf32> to vector<16x32xbf16>
    %c0_71 = arith.constant 0 : index
    %c0_72 = arith.constant 0 : index
    %252 = vector.load %arg14[%c0_71, %c0_72] : memref<32x32xbf16, #tpu.memory_space<vmem>>, vector<32x32xbf16>
    %cst_73 = arith.constant dense<0.000000e+00> : vector<16x32xf32>
    %253 = tpu.matmul %251, %252, %cst_73 {dimension_numbers = #tpu.dot_dimension_numbers<[1], [0], [0], [1], [0, 0, 1, 1], [], []>} : vector<16x32xbf16>, vector<32x32xbf16>, vector<16x32xf32> -> vector<16x32xf32>
    %c0_74 = arith.constant 0 : index
    %c0_75 = arith.constant 0 : index
    %254 = vector.load %arg15[%c0_74, %c0_75] : memref<1x32xf32, #tpu.memory_space<vmem>>, vector<1x32xf32>
    %255 = vector.broadcast %254 : vector<1x32xf32> to vector<16x32xf32>
    %256 = arith.addf %253, %255 : vector<16x32xf32>
    %257 = arith.addf %256, %46 : vector<16x32xf32>
    %c0_76 = arith.constant 0 : index
    %c0_77 = arith.constant 0 : index
    %258 = vector.load %arg16[%c0_76, %c0_77] : memref<1x32xf32, #tpu.memory_space<vmem>>, vector<1x32xf32>
    %c0_78 = arith.constant 0 : index
    %c0_79 = arith.constant 0 : index
    %259 = vector.load %arg17[%c0_78, %c0_79] : memref<1x32xf32, #tpu.memory_space<vmem>>, vector<1x32xf32>
    %cst_80 = arith.constant dense<0.000000e+00> : vector<16xf32>
    %260 = vector.multi_reduction <add>, %257, %cst_80 [1] : vector<16x32xf32> to vector<16xf32>
    %261 = vector.shape_cast %260 : vector<16xf32> to vector<16x1xf32>
    %cst_81 = arith.constant 3.200000e+01 : f32
    %262 = vector.broadcast %cst_81 : f32 to vector<16x1xf32>
    %263 = arith.divf %261, %262 : vector<16x1xf32>
    %264 = vector.broadcast %263 : vector<16x1xf32> to vector<16x32xf32>
    %265 = arith.subf %257, %264 : vector<16x32xf32>
    %266 = arith.mulf %265, %265 : vector<16x32xf32>
    %cst_82 = arith.constant dense<0.000000e+00> : vector<16xf32>
    %267 = vector.multi_reduction <add>, %266, %cst_82 [1] : vector<16x32xf32> to vector<16xf32>
    %268 = vector.shape_cast %267 : vector<16xf32> to vector<16x1xf32>
    %cst_83 = arith.constant 3.200000e+01 : f32
    %269 = vector.broadcast %cst_83 : f32 to vector<16x1xf32>
    %270 = arith.divf %268, %269 : vector<16x1xf32>
    %271 = vector.broadcast %263 : vector<16x1xf32> to vector<16x32xf32>
    %272 = arith.subf %257, %271 : vector<16x32xf32>
    %cst_84 = arith.constant 9.99999974E-6 : f32
    %273 = vector.broadcast %cst_84 : f32 to vector<16x1xf32>
    %274 = arith.addf %270, %273 : vector<16x1xf32>
    %275 = math.rsqrt %274 : vector<16x1xf32>
    %276 = vector.broadcast %275 : vector<16x1xf32> to vector<16x32xf32>
    %277 = arith.mulf %272, %276 : vector<16x32xf32>
    %278 = vector.broadcast %258 : vector<1x32xf32> to vector<16x32xf32>
    %279 = arith.mulf %277, %278 : vector<16x32xf32>
    %280 = vector.broadcast %259 : vector<1x32xf32> to vector<16x32xf32>
    %281 = arith.addf %279, %280 : vector<16x32xf32>
    %282 = arith.truncf %281 : vector<16x32xf32> to vector<16x32xbf16>
    %c0_85 = arith.constant 0 : index
    %c0_86 = arith.constant 0 : index
    %283 = vector.load %arg18[%c0_85, %c0_86] : memref<32x64xbf16, #tpu.memory_space<vmem>>, vector<32x64xbf16>
    %cst_87 = arith.constant dense<0.000000e+00> : vector<16x64xf32>
    %284 = tpu.matmul %282, %283, %cst_87 {dimension_numbers = #tpu.dot_dimension_numbers<[1], [0], [0], [1], [0, 0, 1, 1], [], []>} : vector<16x32xbf16>, vector<32x64xbf16>, vector<16x64xf32> -> vector<16x64xf32>
    %285 = vector.extract_strided_slice %284 {offsets = [0, 0], sizes = [16, 32], strides = [1, 1]} : vector<16x64xf32> to vector<16x32xf32>
    %286 = vector.extract_strided_slice %284 {offsets = [0, 32], sizes = [16, 32], strides = [1, 1]} : vector<16x64xf32> to vector<16x32xf32>
    %287 = arith.negf %286 : vector<16x32xf32>
    %288 = math.exp %287 : vector<16x32xf32>
    %cst_88 = arith.constant 1.000000e+00 : f32
    %289 = vector.broadcast %cst_88 : f32 to vector<16x32xf32>
    %290 = arith.addf %289, %288 : vector<16x32xf32>
    %291 = arith.divf %289, %290 : vector<16x32xf32>
    %292 = arith.mulf %285, %291 : vector<16x32xf32>
    %293 = vector.shape_cast %292 : vector<16x32xf32> to vector<2x8x32xf32>
    %cst_89 = arith.constant 0.000000e+00 : f32
    %294 = vector.broadcast %cst_89 : f32 to vector<2x2x32xf32>
    %295 = tpu.concatenate %294, %293, %294 in 1 : vector<2x2x32xf32>, vector<2x8x32xf32>, vector<2x2x32xf32> -> vector<2x12x32xf32>
    %c0_90 = arith.constant 0 : index
    %c0_91 = arith.constant 0 : index
    %c0_92 = arith.constant 0 : index
    %296 = vector.load %arg19[%c0_90, %c0_91, %c0_92] : memref<5x1x32xf32, #tpu.memory_space<vmem>>, vector<5x1x32xf32>
    %cst_93 = arith.constant 0.000000e+00 : f32
    %297 = vector.broadcast %cst_93 : f32 to vector<2x8x32xf32>
    %298 = vector.extract_strided_slice %295 {offsets = [0, 0, 0], sizes = [2, 8, 32], strides = [1, 1, 1]} : vector<2x12x32xf32> to vector<2x8x32xf32>
    %299 = vector.extract_strided_slice %296 {offsets = [0, 0, 0], sizes = [1, 1, 32], strides = [1, 1, 1]} : vector<5x1x32xf32> to vector<1x1x32xf32>
    %300 = vector.shape_cast %299 : vector<1x1x32xf32> to vector<1x32xf32>
    %301 = vector.shape_cast %300 : vector<1x32xf32> to vector<1x1x32xf32>
    %302 = vector.broadcast %301 : vector<1x1x32xf32> to vector<2x8x32xf32>
    %303 = arith.mulf %298, %302 : vector<2x8x32xf32>
    %304 = arith.addf %297, %303 : vector<2x8x32xf32>
    %305 = vector.extract_strided_slice %295 {offsets = [0, 1, 0], sizes = [2, 8, 32], strides = [1, 1, 1]} : vector<2x12x32xf32> to vector<2x8x32xf32>
    %306 = vector.extract_strided_slice %296 {offsets = [1, 0, 0], sizes = [1, 1, 32], strides = [1, 1, 1]} : vector<5x1x32xf32> to vector<1x1x32xf32>
    %307 = vector.shape_cast %306 : vector<1x1x32xf32> to vector<1x32xf32>
    %308 = vector.shape_cast %307 : vector<1x32xf32> to vector<1x1x32xf32>
    %309 = vector.broadcast %308 : vector<1x1x32xf32> to vector<2x8x32xf32>
    %310 = arith.mulf %305, %309 : vector<2x8x32xf32>
    %311 = arith.addf %304, %310 : vector<2x8x32xf32>
    %312 = vector.extract_strided_slice %295 {offsets = [0, 2, 0], sizes = [2, 8, 32], strides = [1, 1, 1]} : vector<2x12x32xf32> to vector<2x8x32xf32>
    %313 = vector.extract_strided_slice %296 {offsets = [2, 0, 0], sizes = [1, 1, 32], strides = [1, 1, 1]} : vector<5x1x32xf32> to vector<1x1x32xf32>
    %314 = vector.shape_cast %313 : vector<1x1x32xf32> to vector<1x32xf32>
    %315 = vector.shape_cast %314 : vector<1x32xf32> to vector<1x1x32xf32>
    %316 = vector.broadcast %315 : vector<1x1x32xf32> to vector<2x8x32xf32>
    %317 = arith.mulf %312, %316 : vector<2x8x32xf32>
    %318 = arith.addf %311, %317 : vector<2x8x32xf32>
    %319 = vector.extract_strided_slice %295 {offsets = [0, 3, 0], sizes = [2, 8, 32], strides = [1, 1, 1]} : vector<2x12x32xf32> to vector<2x8x32xf32>
    %320 = vector.extract_strided_slice %296 {offsets = [3, 0, 0], sizes = [1, 1, 32], strides = [1, 1, 1]} : vector<5x1x32xf32> to vector<1x1x32xf32>
    %321 = vector.shape_cast %320 : vector<1x1x32xf32> to vector<1x32xf32>
    %322 = vector.shape_cast %321 : vector<1x32xf32> to vector<1x1x32xf32>
    %323 = vector.broadcast %322 : vector<1x1x32xf32> to vector<2x8x32xf32>
    %324 = arith.mulf %319, %323 : vector<2x8x32xf32>
    %325 = arith.addf %318, %324 : vector<2x8x32xf32>
    %326 = vector.extract_strided_slice %295 {offsets = [0, 4, 0], sizes = [2, 8, 32], strides = [1, 1, 1]} : vector<2x12x32xf32> to vector<2x8x32xf32>
    %327 = vector.extract_strided_slice %296 {offsets = [4, 0, 0], sizes = [1, 1, 32], strides = [1, 1, 1]} : vector<5x1x32xf32> to vector<1x1x32xf32>
    %328 = vector.shape_cast %327 : vector<1x1x32xf32> to vector<1x32xf32>
    %329 = vector.shape_cast %328 : vector<1x32xf32> to vector<1x1x32xf32>
    %330 = vector.broadcast %329 : vector<1x1x32xf32> to vector<2x8x32xf32>
    %331 = arith.mulf %326, %330 : vector<2x8x32xf32>
    %332 = arith.addf %325, %331 : vector<2x8x32xf32>
    %333 = vector.shape_cast %332 : vector<2x8x32xf32> to vector<16x32xf32>
    %c0_94 = arith.constant 0 : index
    %c0_95 = arith.constant 0 : index
    %334 = vector.load %arg20[%c0_94, %c0_95] : memref<1x32xf32, #tpu.memory_space<vmem>>, vector<1x32xf32>
    %335 = vector.broadcast %334 : vector<1x32xf32> to vector<16x32xf32>
    %336 = arith.addf %333, %335 : vector<16x32xf32>
    %337 = arith.negf %336 : vector<16x32xf32>
    %338 = math.exp %337 : vector<16x32xf32>
    %cst_96 = arith.constant 1.000000e+00 : f32
    %339 = vector.broadcast %cst_96 : f32 to vector<16x32xf32>
    %340 = arith.addf %339, %338 : vector<16x32xf32>
    %341 = arith.divf %339, %340 : vector<16x32xf32>
    %342 = arith.mulf %336, %341 : vector<16x32xf32>
    %343 = arith.truncf %342 : vector<16x32xf32> to vector<16x32xbf16>
    %c0_97 = arith.constant 0 : index
    %c0_98 = arith.constant 0 : index
    %344 = vector.load %arg21[%c0_97, %c0_98] : memref<32x32xbf16, #tpu.memory_space<vmem>>, vector<32x32xbf16>
    %cst_99 = arith.constant dense<0.000000e+00> : vector<16x32xf32>
    %345 = tpu.matmul %343, %344, %cst_99 {dimension_numbers = #tpu.dot_dimension_numbers<[1], [0], [0], [1], [0, 0, 1, 1], [], []>} : vector<16x32xbf16>, vector<32x32xbf16>, vector<16x32xf32> -> vector<16x32xf32>
    %346 = arith.addf %257, %345 : vector<16x32xf32>
    %c0_100 = arith.constant 0 : index
    %c0_101 = arith.constant 0 : index
    %347 = vector.load %arg22[%c0_100, %c0_101] : memref<1x32xf32, #tpu.memory_space<vmem>>, vector<1x32xf32>
    %c0_102 = arith.constant 0 : index
    %c0_103 = arith.constant 0 : index
    %348 = vector.load %arg23[%c0_102, %c0_103] : memref<1x32xf32, #tpu.memory_space<vmem>>, vector<1x32xf32>
    %cst_104 = arith.constant dense<0.000000e+00> : vector<16xf32>
    %349 = vector.multi_reduction <add>, %346, %cst_104 [1] : vector<16x32xf32> to vector<16xf32>
    %350 = vector.shape_cast %349 : vector<16xf32> to vector<16x1xf32>
    %cst_105 = arith.constant 3.200000e+01 : f32
    %351 = vector.broadcast %cst_105 : f32 to vector<16x1xf32>
    %352 = arith.divf %350, %351 : vector<16x1xf32>
    %353 = vector.broadcast %352 : vector<16x1xf32> to vector<16x32xf32>
    %354 = arith.subf %346, %353 : vector<16x32xf32>
    %355 = arith.mulf %354, %354 : vector<16x32xf32>
    %cst_106 = arith.constant dense<0.000000e+00> : vector<16xf32>
    %356 = vector.multi_reduction <add>, %355, %cst_106 [1] : vector<16x32xf32> to vector<16xf32>
    %357 = vector.shape_cast %356 : vector<16xf32> to vector<16x1xf32>
    %cst_107 = arith.constant 3.200000e+01 : f32
    %358 = vector.broadcast %cst_107 : f32 to vector<16x1xf32>
    %359 = arith.divf %357, %358 : vector<16x1xf32>
    %360 = vector.broadcast %352 : vector<16x1xf32> to vector<16x32xf32>
    %361 = arith.subf %346, %360 : vector<16x32xf32>
    %cst_108 = arith.constant 9.99999974E-6 : f32
    %362 = vector.broadcast %cst_108 : f32 to vector<16x1xf32>
    %363 = arith.addf %359, %362 : vector<16x1xf32>
    %364 = math.rsqrt %363 : vector<16x1xf32>
    %365 = vector.broadcast %364 : vector<16x1xf32> to vector<16x32xf32>
    %366 = arith.mulf %361, %365 : vector<16x32xf32>
    %367 = vector.broadcast %347 : vector<1x32xf32> to vector<16x32xf32>
    %368 = arith.mulf %366, %367 : vector<16x32xf32>
    %369 = vector.broadcast %348 : vector<1x32xf32> to vector<16x32xf32>
    %370 = arith.addf %368, %369 : vector<16x32xf32>
    %371 = arith.truncf %370 : vector<16x32xf32> to vector<16x32xbf16>
    %c0_109 = arith.constant 0 : index
    %c0_110 = arith.constant 0 : index
    %372 = vector.load %arg24[%c0_109, %c0_110] : memref<32x64xbf16, #tpu.memory_space<vmem>>, vector<32x64xbf16>
    %cst_111 = arith.constant dense<0.000000e+00> : vector<16x64xf32>
    %373 = tpu.matmul %371, %372, %cst_111 {dimension_numbers = #tpu.dot_dimension_numbers<[1], [0], [0], [1], [0, 0, 1, 1], [], []>} : vector<16x32xbf16>, vector<32x64xbf16>, vector<16x64xf32> -> vector<16x64xf32>
    %c0_112 = arith.constant 0 : index
    %c0_113 = arith.constant 0 : index
    %374 = vector.load %arg25[%c0_112, %c0_113] : memref<1x64xf32, #tpu.memory_space<vmem>>, vector<1x64xf32>
    %375 = vector.broadcast %374 : vector<1x64xf32> to vector<16x64xf32>
    %376 = arith.addf %373, %375 : vector<16x64xf32>
    %377 = arith.negf %376 : vector<16x64xf32>
    %378 = math.exp %377 : vector<16x64xf32>
    %cst_114 = arith.constant 1.000000e+00 : f32
    %379 = vector.broadcast %cst_114 : f32 to vector<16x64xf32>
    %380 = arith.addf %379, %378 : vector<16x64xf32>
    %381 = arith.divf %379, %380 : vector<16x64xf32>
    %382 = arith.mulf %376, %381 : vector<16x64xf32>
    %383 = arith.truncf %382 : vector<16x64xf32> to vector<16x64xbf16>
    %c0_115 = arith.constant 0 : index
    %c0_116 = arith.constant 0 : index
    %384 = vector.load %arg26[%c0_115, %c0_116] : memref<64x32xbf16, #tpu.memory_space<vmem>>, vector<64x32xbf16>
    %cst_117 = arith.constant dense<0.000000e+00> : vector<16x32xf32>
    %385 = tpu.matmul %383, %384, %cst_117 {dimension_numbers = #tpu.dot_dimension_numbers<[1], [0], [0], [1], [0, 0, 1, 1], [], []>} : vector<16x64xbf16>, vector<64x32xbf16>, vector<16x32xf32> -> vector<16x32xf32>
    %c0_118 = arith.constant 0 : index
    %c0_119 = arith.constant 0 : index
    %386 = vector.load %arg27[%c0_118, %c0_119] : memref<1x32xf32, #tpu.memory_space<vmem>>, vector<1x32xf32>
    %387 = vector.broadcast %386 : vector<1x32xf32> to vector<16x32xf32>
    %388 = arith.addf %385, %387 : vector<16x32xf32>
    %cst_120 = arith.constant 5.000000e-01 : f32
    %389 = vector.broadcast %cst_120 : f32 to vector<16x32xf32>
    %390 = arith.mulf %388, %389 : vector<16x32xf32>
    %391 = arith.addf %390, %346 : vector<16x32xf32>
    %c0_121 = arith.constant 0 : index
    %c0_122 = arith.constant 0 : index
    %392 = vector.load %arg28[%c0_121, %c0_122] : memref<1x32xf32, #tpu.memory_space<vmem>>, vector<1x32xf32>
    %c0_123 = arith.constant 0 : index
    %c0_124 = arith.constant 0 : index
    %393 = vector.load %arg29[%c0_123, %c0_124] : memref<1x32xf32, #tpu.memory_space<vmem>>, vector<1x32xf32>
    %cst_125 = arith.constant dense<0.000000e+00> : vector<16xf32>
    %394 = vector.multi_reduction <add>, %391, %cst_125 [1] : vector<16x32xf32> to vector<16xf32>
    %395 = vector.shape_cast %394 : vector<16xf32> to vector<16x1xf32>
    %cst_126 = arith.constant 3.200000e+01 : f32
    %396 = vector.broadcast %cst_126 : f32 to vector<16x1xf32>
    %397 = arith.divf %395, %396 : vector<16x1xf32>
    %398 = vector.broadcast %397 : vector<16x1xf32> to vector<16x32xf32>
    %399 = arith.subf %391, %398 : vector<16x32xf32>
    %400 = arith.mulf %399, %399 : vector<16x32xf32>
    %cst_127 = arith.constant dense<0.000000e+00> : vector<16xf32>
    %401 = vector.multi_reduction <add>, %400, %cst_127 [1] : vector<16x32xf32> to vector<16xf32>
    %402 = vector.shape_cast %401 : vector<16xf32> to vector<16x1xf32>
    %cst_128 = arith.constant 3.200000e+01 : f32
    %403 = vector.broadcast %cst_128 : f32 to vector<16x1xf32>
    %404 = arith.divf %402, %403 : vector<16x1xf32>
    %405 = vector.broadcast %397 : vector<16x1xf32> to vector<16x32xf32>
    %406 = arith.subf %391, %405 : vector<16x32xf32>
    %cst_129 = arith.constant 9.99999974E-6 : f32
    %407 = vector.broadcast %cst_129 : f32 to vector<16x1xf32>
    %408 = arith.addf %404, %407 : vector<16x1xf32>
    %409 = math.rsqrt %408 : vector<16x1xf32>
    %410 = vector.broadcast %409 : vector<16x1xf32> to vector<16x32xf32>
    %411 = arith.mulf %406, %410 : vector<16x32xf32>
    %412 = vector.broadcast %392 : vector<1x32xf32> to vector<16x32xf32>
    %413 = arith.mulf %411, %412 : vector<16x32xf32>
    %414 = vector.broadcast %393 : vector<1x32xf32> to vector<16x32xf32>
    %415 = arith.addf %413, %414 : vector<16x32xf32>
    %416 = vector.shape_cast %415 : vector<16x32xf32> to vector<2x8x32xf32>
    %c0_130 = arith.constant 0 : index
    %c0_131 = arith.constant 0 : index
    %c0_132 = arith.constant 0 : index
    %417 = vector.load %arg30[%c0_130, %c0_131, %c0_132] : memref<2x8x32xf32, #tpu.memory_space<vmem>>, vector<2x8x32xf32>
    tpu.vector_store %arg30[%c0_130, %c0_131, %c0_132], %416 {strides = array<i32>} : memref<2x8x32xf32, #tpu.memory_space<vmem>>, vector<2x8x32xf32>,
    return
  }
  func.func @transform_0(%arg0: i32) -> (i32, i32, i32) {
    %c0_i32 = arith.constant 0 : i32
    %c0_i32_0 = arith.constant 0 : i32
    %c0_i32_1 = arith.constant 0 : i32
    %c0_i32_2 = arith.constant 0 : i32
    return %c0_i32, %c0_i32_0, %c0_i32_1 : i32, i32, i32
  }
  func.func @transform_1(%arg0: i32) -> (i32, i32) {
    %c0_i32 = arith.constant 0 : i32
    %c0_i32_0 = arith.constant 0 : i32
    %c0_i32_1 = arith.constant 0 : i32
    return %c0_i32, %c0_i32_0 : i32, i32
  }
  func.func @transform_2(%arg0: i32) -> (i32, i32) {
    %c0_i32 = arith.constant 0 : i32
    %c0_i32_0 = arith.constant 0 : i32
    %c0_i32_1 = arith.constant 0 : i32
    return %c0_i32, %c0_i32_0 : i32, i32
  }
  func.func @transform_3(%arg0: i32) -> (i32, i32) {
    %c0_i32 = arith.constant 0 : i32
    %c0_i32_0 = arith.constant 0 : i32
    %c0_i32_1 = arith.constant 0 : i32
    return %c0_i32, %c0_i32_0 : i32, i32
  }
  func.func @transform_4(%arg0: i32) -> (i32, i32) {
    %c0_i32 = arith.constant 0 : i32
    %c0_i32_0 = arith.constant 0 : i32
    %c0_i32_1 = arith.constant 0 : i32
    return %c0_i32, %c0_i32_0 : i32, i32
  }
  func.func @transform_5(%arg0: i32) -> (i32, i32) {
    %c0_i32 = arith.constant 0 : i32
    %c0_i32_0 = arith.constant 0 : i32
    %c0_i32_1 = arith.constant 0 : i32
    return %c0_i32, %c0_i32_0 : i32, i32
  }
  func.func @transform_6(%arg0: i32) -> (i32, i32) {
    %c0_i32 = arith.constant 0 : i32
    %c0_i32_0 = arith.constant 0 : i32
    %c0_i32_1 = arith.constant 0 : i32
    return %c0_i32, %c0_i32_0 : i32, i32
  }
  func.func @transform_7(%arg0: i32) -> (i32, i32) {
    %c0_i32 = arith.constant 0 : i32
    %c0_i32_0 = arith.constant 0 : i32
    %c0_i32_1 = arith.constant 0 : i32
    return %c0_i32, %c0_i32_0 : i32, i32
  }
  func.func @transform_8(%arg0: i32) -> (i32, i32) {
    %c0_i32 = arith.constant 0 : i32
    %c0_i32_0 = arith.constant 0 : i32
    %c0_i32_1 = arith.constant 0 : i32
    return %c0_i32, %c0_i32_0 : i32, i32
  }
  func.func @transform_9(%arg0: i32) -> (i32, i32) {
    %c0_i32 = arith.constant 0 : i32
    %c0_i32_0 = arith.constant 0 : i32
    %c0_i32_1 = arith.constant 0 : i32
    return %c0_i32, %c0_i32_0 : i32, i32
  }
  func.func @transform_10(%arg0: i32) -> (i32, i32) {
    %c0_i32 = arith.constant 0 : i32
    %c0_i32_0 = arith.constant 0 : i32
    %c0_i32_1 = arith.constant 0 : i32
    return %c0_i32, %c0_i32_0 : i32, i32
  }
  func.func @transform_11(%arg0: i32) -> (i32, i32) {
    %c0_i32 = arith.constant 0 : i32
    %c0_i32_0 = arith.constant 0 : i32
    %c0_i32_1 = arith.constant 0 : i32
    return %c0_i32, %c0_i32_0 : i32, i32
  }
  func.func @transform_12(%arg0: i32) -> (i32, i32) {
    %c0_i32 = arith.constant 0 : i32
    %c0_i32_0 = arith.constant 0 : i32
    %c0_i32_1 = arith.constant 0 : i32
    return %c0_i32, %c0_i32_0 : i32, i32
  }
  func.func @transform_13(%arg0: i32) -> (i32, i32) {
    %c0_i32 = arith.constant 0 : i32
    %c0_i32_0 = arith.constant 0 : i32
    %c0_i32_1 = arith.constant 0 : i32
    return %c0_i32, %c0_i32_0 : i32, i32
  }
  func.func @transform_14(%arg0: i32) -> (i32, i32) {
    %c0_i32 = arith.constant 0 : i32
    %c0_i32_0 = arith.constant 0 : i32
    %c0_i32_1 = arith.constant 0 : i32
    return %c0_i32, %c0_i32_0 : i32, i32
  }
  func.func @transform_15(%arg0: i32) -> (i32, i32) {
    %c0_i32 = arith.constant 0 : i32
    %c0_i32_0 = arith.constant 0 : i32
    %c0_i32_1 = arith.constant 0 : i32
    return %c0_i32, %c0_i32_0 : i32, i32
  }
  func.func @transform_16(%arg0: i32) -> (i32, i32) {
    %c0_i32 = arith.constant 0 : i32
    %c0_i32_0 = arith.constant 0 : i32
    %c0_i32_1 = arith.constant 0 : i32
    return %c0_i32, %c0_i32_0 : i32, i32
  }
  func.func @transform_17(%arg0: i32) -> (i32, i32) {
    %c0_i32 = arith.constant 0 : i32
    %c0_i32_0 = arith.constant 0 : i32
    %c0_i32_1 = arith.constant 0 : i32
    return %c0_i32, %c0_i32_0 : i32, i32
  }
  func.func @transform_18(%arg0: i32) -> (i32, i32, i32) {
    %c0_i32 = arith.constant 0 : i32
    %c0_i32_0 = arith.constant 0 : i32
    %c0_i32_1 = arith.constant 0 : i32
    %c0_i32_2 = arith.constant 0 : i32
    return %c0_i32, %c0_i32_0, %c0_i32_1 : i32, i32, i32
  }
  func.func @transform_19(%arg0: i32) -> (i32, i32) {
    %c0_i32 = arith.constant 0 : i32
    %c0_i32_0 = arith.constant 0 : i32
    %c0_i32_1 = arith.constant 0 : i32
    return %c0_i32, %c0_i32_0 : i32, i32
  }
  func.func @transform_20(%arg0: i32) -> (i32, i32) {
    %c0_i32 = arith.constant 0 : i32
    %c0_i32_0 = arith.constant 0 : i32
    %c0_i32_1 = arith.constant 0 : i32
    return %c0_i32, %c0_i32_0 : i32, i32
  }
  func.func @transform_21(%arg0: i32) -> (i32, i32) {
    %c0_i32 = arith.constant 0 : i32
    %c0_i32_0 = arith.constant 0 : i32
    %c0_i32_1 = arith.constant 0 : i32
    return %c0_i32, %c0_i32_0 : i32, i32
  }
  func.func @transform_22(%arg0: i32) -> (i32, i32) {
    %c0_i32 = arith.constant 0 : i32
    %c0_i32_0 = arith.constant 0 : i32
    %c0_i32_1 = arith.constant 0 : i32
    return %c0_i32, %c0_i32_0 : i32, i32
  }
  func.func @transform_23(%arg0: i32) -> (i32, i32) {
    %c0_i32 = arith.constant 0 : i32
    %c0_i32_0 = arith.constant 0 : i32
    %c0_i32_1 = arith.constant 0 : i32
    return %c0_i32, %c0_i32_0 : i32, i32
  }
  func.func @transform_24(%arg0: i32) -> (i32, i32) {
    %c0_i32 = arith.constant 0 : i32
    %c0_i32_0 = arith.constant 0 : i32
    %c0_i32_1 = arith.constant 0 : i32
    return %c0_i32, %c0_i32_0 : i32, i32
  }
  func.func @transform_25(%arg0: i32) -> (i32, i32) {
    %c0_i32 = arith.constant 0 : i32
    %c0_i32_0 = arith.constant 0 : i32
    %c0_i32_1 = arith.constant 0 : i32
    return %c0_i32, %c0_i32_0 : i32, i32
  }
  func.func @transform_26(%arg0: i32) -> (i32, i32) {
    %c0_i32 = arith.constant 0 : i32
    %c0_i32_0 = arith.constant 0 : i32
    %c0_i32_1 = arith.constant 0 : i32
    return %c0_i32, %c0_i32_0 : i32, i32
  }
  func.func @transform_27(%arg0: i32) -> (i32, i32) {
    %c0_i32 = arith.constant 0 : i32
    %c0_i32_0 = arith.constant 0 : i32
    %c0_i32_1 = arith.constant 0 : i32
    return %c0_i32, %c0_i32_0 : i32, i32
  }
  func.func @transform_28(%arg0: i32) -> (i32, i32) {
    %c0_i32 = arith.constant 0 : i32
    %c0_i32_0 = arith.constant 0 : i32
    %c0_i32_1 = arith.constant 0 : i32
    return %c0_i32, %c0_i32_0 : i32, i32
  }
  func.func @transform_29(%arg0: i32) -> (i32, i32, i32) {
    %c0_i32 = arith.constant 0 : i32
    %c0_i32_0 = arith.constant 0 : i32
    %c0_i32_1 = arith.constant 0 : i32
    %c0_i32_2 = arith.constant 0 : i32
    return %c0_i32, %c0_i32_0, %c0_i32_1 : i32, i32, i32
  }
  func.func @transform_30(%arg0: i32) -> (i32, i32, i32) {
    %c0_i32 = arith.constant 0 : i32
    %c0_i32_0 = arith.constant 0 : i32
    %c0_i32_1 = arith.constant 0 : i32
    %c0_i32_2 = arith.constant 0 : i32
    return %c0_i32, %c0_i32_0, %c0_i32_1 : i32, i32, i32
  }
}

</mosaic_0001>

<llo_original>
// kernel: tpu_custom_call.1
$region0: #{tpu_custom_call.1}
  #allocation0 [shape = 'u32[]', space=smem, size = 0x4, offset = 0x4, fixed_abs, tag = 'smem constant byte address 0x4 - core index']
  #allocation1 [shape = 'u32[144,128]{1,0:T(1,128)}', space=vmem, size = 0x12000, scoped, tag = 'internal scratch']
  %s0 = inlined_call_operand.smem [shape: u32[31], index: -1, kind: input, shape index: {}]
  %s1 = sld [smem:[%s0]]
  %s2 = scalar_lea.smem %s0, 1
  %s3 = sld [smem:[%s2]]
  %s4 = scalar_lea.smem %s0, 2
  %s5 = sld [smem:[%s4]]
  %s6 = scalar_lea.smem %s0, 3
  %s7 = sld [smem:[%s6]]
  %s8 = scalar_lea.smem %s0, 4
  %s9 = sld [smem:[%s8]]
  %s10 = scalar_lea.smem %s0, 5
  %s11 = sld [smem:[%s10]]
  %s12 = scalar_lea.smem %s0, 6
  %s13 = sld [smem:[%s12]]
  %s14 = scalar_lea.smem %s0, 7
  %s15 = sld [smem:[%s14]]
  %s16 = scalar_lea.smem %s0, 8
  %s17 = sld [smem:[%s16]]
  %s18 = scalar_lea.smem %s0, 9
  %s19 = sld [smem:[%s18]]
  %s20 = scalar_lea.smem %s0, 10
  %s21 = sld [smem:[%s20]]
  %s22 = scalar_lea.smem %s0, 11
  %s23 = sld [smem:[%s22]]
  %s24 = scalar_lea.smem %s0, 12
  %s25 = sld [smem:[%s24]]
  %s26 = scalar_lea.smem %s0, 13
  %s27 = sld [smem:[%s26]]
  %s28 = scalar_lea.smem %s0, 14
  %s29 = sld [smem:[%s28]]
  %s30 = scalar_lea.smem %s0, 15
  %s31 = sld [smem:[%s30]]
  %s32 = scalar_lea.smem %s0, 16
  %s33 = sld [smem:[%s32]]
  %s34 = scalar_lea.smem %s0, 17
  %s35 = sld [smem:[%s34]]
  %s36 = scalar_lea.smem %s0, 18
  %s37 = sld [smem:[%s36]]
  %s38 = scalar_lea.smem %s0, 19
  %s39 = sld [smem:[%s38]]
  %s40 = scalar_lea.smem %s0, 20
  %s41 = sld [smem:[%s40]]
  %s42 = scalar_lea.smem %s0, 21
  %s43 = sld [smem:[%s42]]
  %s44 = scalar_lea.smem %s0, 22
  %s45 = sld [smem:[%s44]]
  %s46 = scalar_lea.smem %s0, 23
  %s47 = sld [smem:[%s46]]
  %s48 = scalar_lea.smem %s0, 24
  %s49 = sld [smem:[%s48]]
  %s50 = scalar_lea.smem %s0, 25
  %s51 = sld [smem:[%s50]]
  %s52 = scalar_lea.smem %s0, 26
  %s53 = sld [smem:[%s52]]
  %s54 = scalar_lea.smem %s0, 27
  %s55 = sld [smem:[%s54]]
  %s56 = scalar_lea.smem %s0, 28
  %s57 = sld [smem:[%s56]]
  %s58 = scalar_lea.smem %s0, 29
  %s59 = sld [smem:[%s58]]
  %s60 = scalar_lea.smem %s0, 30
  %s61 = sld [smem:[%s60]]
  %62 = xla_tuple %s59, %s61
  %s63 = sld [smem:[#allocation0]]
  $region174: #{tpu_custom_call.1} parent=0
    _
  %s65 = ssub.s32 1, %s63
  %s66 = scalar_select 0, %s65, %s63
  $region1: #{tpu_custom_call.1} parent=0
    #allocation2 [shape = 'u8[4096]{0}', space=vmem, size = 0x1000, scoped, tag = 'input window, operand 1, single buffered']
    #allocation3 [shape = 's32[1]{0}', space=sflag, size = 0x4, scoped, tag = 'scoped memory for tpu_custom_call.1']
    #allocation4 [shape = 's32[1]{0}', space=sflag, size = 0x4, scoped, tag = 'scoped memory for tpu_custom_call.1']
    #allocation5 [shape = 'u8[4096]{0}', space=vmem, size = 0x1000, scoped, tag = 'input window, operand 2, single buffered']
    #allocation6 [shape = 's32[1]{0}', space=sflag, size = 0x4, scoped, tag = 'scoped memory for tpu_custom_call.1']
    #allocation7 [shape = 'u8[512]{0}', space=vmem, size = 0x400, scoped, tag = 'input window, operand 3, single buffered']
    #allocation8 [shape = 'u8[512]{0}', space=vmem, size = 0x400, scoped, tag = 'input window, operand 4, single buffered']
    #allocation9 [shape = 's32[1]{0}', space=sflag, size = 0x4, scoped, tag = 'scoped memory for tpu_custom_call.1']
    #allocation10 [shape = 'u8[512]{0}', space=vmem, size = 0x400, scoped, tag = 'input window, operand 6, single buffered']
    #allocation11 [shape = 'u8[512]{0}', space=vmem, size = 0x400, scoped, tag = 'input window, operand 8, single buffered']
    #allocation12 [shape = 's32[1]{0}', space=sflag, size = 0x4, scoped, tag = 'scoped memory for tpu_custom_call.1']
    #allocation13 [shape = 'u8[512]{0}', space=vmem, size = 0x400, scoped, tag = 'input window, operand 9, single buffered']
    #allocation14 [shape = 'u8[512]{0}', space=vmem, size = 0x400, scoped, tag = 'input window, operand 10, single buffered']
    #allocation15 [shape = 's32[1]{0}', space=sflag, size = 0x4, scoped, tag = 'scoped memory for tpu_custom_call.1']
    #allocation16 [shape = 'u8[512]{0}', space=vmem, size = 0x400, scoped, tag = 'input window, operand 12, single buffered']
    #allocation17 [shape = 'u8[512]{0}', space=vmem, size = 0x400, scoped, tag = 'input window, operand 14, single buffered']
    #allocation18 [shape = 's32[1]{0}', space=sflag, size = 0x4, scoped, tag = 'scoped memory for tpu_custom_call.1']
    #allocation19 [shape = 'u8[8192]{0}', space=vmem, size = 0x2000, scoped, tag = 'output window, operand 0, single buffered']
    #allocation20 [shape = 'u8[8192]{0}', space=vmem, size = 0x2000, scoped, tag = 'output window, operand 1, single buffered']
    #allocation21 [shape = 's32[1]{0}', space=sflag, size = 0x4, scoped, tag = 'scoped memory for tpu_custom_call.1']
    %67 = vsyncpa [#allocation3], 0
    %68 = vsyncpa [#allocation6], 0
    %69 = vsyncpa [#allocation9], 0
    %70 = vsyncpa [#allocation12], 0
    %71 = vsyncpa [#allocation15], 0
    %72 = vsyncpa [#allocation18], 0
    %73 = vsyncpa [#allocation4], 0
    %74 = vsyncpa [#allocation21], 0
    // Predicated region
    $region2: #{tpu_custom_call.1} parent=1 // pred_check
      _
    $region3: #{tpu_custom_call.1} parent=1 // pred_check_branch
      %76 = sbr.rel (0) target = $region5
    $region4: #{tpu_custom_call.1} parent=1 // pred_region
      _
    $region5: #{tpu_custom_call.1} parent=1 // pred_fallthru
      _
    // Predicated region
    $region6: #{tpu_custom_call.1} parent=1 // pred_check
      _
    $region7: #{tpu_custom_call.1} parent=1 // pred_check_branch
      %78 = sbr.rel (0) target = $region9
    $region8: #{tpu_custom_call.1} parent=1 // pred_region
      %s80 = ssub.s32 128, 128
      %81 = vsyncadd [#allocation3], %s80
      %s83 = sshll.u32 [#allocation2], 4
      %s84 = int_to_ptr.vmem [resolvable:$true] %s83
      %86 = dma.hbm_to_vmem [thread:$0]  %s3, 128, %s84, [#allocation3]
    $region9: #{tpu_custom_call.1} parent=1 // pred_fallthru
      _
    // Predicated region
    $region10: #{tpu_custom_call.1} parent=1 // pred_check
      _
    $region11: #{tpu_custom_call.1} parent=1 // pred_check_branch
      %88 = sbr.rel (0) target = $region13
    $region12: #{tpu_custom_call.1} parent=1 // pred_region
      %s90 = ssub.s32 128, 128
      %91 = vsyncadd [#allocation6], %s90
      %s93 = sshll.u32 [#allocation5], 4
      %s94 = int_to_ptr.vmem [resolvable:$true] %s93
      %96 = dma.hbm_to_vmem [thread:$0]  %s5, 128, %s94, [#allocation6]
    $region13: #{tpu_custom_call.1} parent=1 // pred_fallthru
      _
    // Predicated region
    $region14: #{tpu_custom_call.1} parent=1 // pred_check
      _
    $region15: #{tpu_custom_call.1} parent=1 // pred_check_branch
      %98 = sbr.rel (0) target = $region17
    $region16: #{tpu_custom_call.1} parent=1 // pred_region
      %s100 = ssub.s32 16, 16
      %101 = vsyncadd [#allocation6], %s100
      %s103 = sshll.u32 [#allocation7], 4
      %s104 = int_to_ptr.vmem [resolvable:$true] %s103
      %106 = dma.hbm_to_vmem [thread:$0]  %s7, 16, %s104, [#allocation6]
    $region17: #{tpu_custom_call.1} parent=1 // pred_fallthru
      _
    // Predicated region
    $region18: #{tpu_custom_call.1} parent=1 // pred_check
      _
    $region19: #{tpu_custom_call.1} parent=1 // pred_check_branch
      %108 = sbr.rel (0) target = $region21
    $region20: #{tpu_custom_call.1} parent=1 // pred_region
      %s110 = ssub.s32 16, 16
      %111 = vsyncadd [#allocation9], %s110
      %s113 = sshll.u32 [#allocation8], 4
      %s114 = int_to_ptr.vmem [resolvable:$true] %s113
      %116 = dma.hbm_to_vmem [thread:$0]  %s9, 16, %s114, [#allocation9]
    $region21: #{tpu_custom_call.1} parent=1 // pred_fallthru
      _
    // Predicated region
    $region22: #{tpu_custom_call.1} parent=1 // pred_check
      _
    $region23: #{tpu_custom_call.1} parent=1 // pred_check_branch
      %118 = sbr.rel (0) target = $region25
    $region24: #{tpu_custom_call.1} parent=1 // pred_region
      _
    $region25: #{tpu_custom_call.1} parent=1 // pred_fallthru
      _
    // Predicated region
    $region26: #{tpu_custom_call.1} parent=1 // pred_check
      _
    $region27: #{tpu_custom_call.1} parent=1 // pred_check_branch
      %120 = sbr.rel (0) target = $region29
    $region28: #{tpu_custom_call.1} parent=1 // pred_region
      %s122 = ssub.s32 16, 16
      %123 = vsyncadd [#allocation9], %s122
      %s125 = sshll.u32 [#allocation10], 4
      %s126 = int_to_ptr.vmem [resolvable:$true] %s125
      %128 = dma.hbm_to_vmem [thread:$0]  %s13, 16, %s126, [#allocation9]
    $region29: #{tpu_custom_call.1} parent=1 // pred_fallthru
      _
    // Predicated region
    $region30: #{tpu_custom_call.1} parent=1 // pred_check
      _
    $region31: #{tpu_custom_call.1} parent=1 // pred_check_branch
      %130 = sbr.rel (0) target = $region33
    $region32: #{tpu_custom_call.1} parent=1 // pred_region
      _
    $region33: #{tpu_custom_call.1} parent=1 // pred_fallthru
      _
    // Predicated region
    $region34: #{tpu_custom_call.1} parent=1 // pred_check
      _
    $region35: #{tpu_custom_call.1} parent=1 // pred_check_branch
      %132 = sbr.rel (0) target = $region37
    $region36: #{tpu_custom_call.1} parent=1 // pred_region
      %s134 = ssub.s32 16, 16
      %135 = vsyncadd [#allocation12], %s134
      %s137 = sshll.u32 [#allocation11], 4
      %s138 = int_to_ptr.vmem [resolvable:$true] %s137
      %140 = dma.hbm_to_vmem [thread:$0]  %s17, 16, %s138, [#allocation12]
    $region37: #{tpu_custom_call.1} parent=1 // pred_fallthru
      _
    // Predicated region
    $region38: #{tpu_custom_call.1} parent=1 // pred_check
      _
    $region39: #{tpu_custom_call.1} parent=1 // pred_check_branch
      %142 = sbr.rel (0) target = $region41
    $region40: #{tpu_custom_call.1} parent=1 // pred_region
      %s144 = ssub.s32 16, 16
      %145 = vsyncadd [#allocation12], %s144
      %s147 = sshll.u32 [#allocation13], 4
      %s148 = int_to_ptr.vmem [resolvable:$true] %s147
      %150 = dma.hbm_to_vmem [thread:$0]  %s19, 16, %s148, [#allocation12]
    $region41: #{tpu_custom_call.1} parent=1 // pred_fallthru
      _
    // Predicated region
    $region42: #{tpu_custom_call.1} parent=1 // pred_check
      _
    $region43: #{tpu_custom_call.1} parent=1 // pred_check_branch
      %152 = sbr.rel (0) target = $region45
    $region44: #{tpu_custom_call.1} parent=1 // pred_region
      %s154 = ssub.s32 16, 16
      %155 = vsyncadd [#allocation15], %s154
      %s157 = sshll.u32 [#allocation14], 4
      %s158 = int_to_ptr.vmem [resolvable:$true] %s157
      %160 = dma.hbm_to_vmem [thread:$0]  %s21, 16, %s158, [#allocation15]
    $region45: #{tpu_custom_call.1} parent=1 // pred_fallthru
      _
    // Predicated region
    $region46: #{tpu_custom_call.1} parent=1 // pred_check
      _
    $region47: #{tpu_custom_call.1} parent=1 // pred_check_branch
      %162 = sbr.rel (0) target = $region49
    $region48: #{tpu_custom_call.1} parent=1 // pred_region
      _
    $region49: #{tpu_custom_call.1} parent=1 // pred_fallthru
      _
    // Predicated region
    $region50: #{tpu_custom_call.1} parent=1 // pred_check
      _
    $region51: #{tpu_custom_call.1} parent=1 // pred_check_branch
      %164 = sbr.rel (0) target = $region53
    $region52: #{tpu_custom_call.1} parent=1 // pred_region
      %s166 = ssub.s32 16, 16
      %167 = vsyncadd [#allocation15], %s166
      %s169 = sshll.u32 [#allocation16], 4
      %s170 = int_to_ptr.vmem [resolvable:$true] %s169
      %172 = dma.hbm_to_vmem [thread:$0]  %s25, 16, %s170, [#allocation15]
    $region53: #{tpu_custom_call.1} parent=1 // pred_fallthru
      _
    // Predicated region
    $region54: #{tpu_custom_call.1} parent=1 // pred_check
      _
    $region55: #{tpu_custom_call.1} parent=1 // pred_check_branch
      %174 = sbr.rel (0) target = $region57
    $region56: #{tpu_custom_call.1} parent=1 // pred_region
      _
    $region57: #{tpu_custom_call.1} parent=1 // pred_fallthru
      _
    // Predicated region
    $region58: #{tpu_custom_call.1} parent=1 // pred_check
      _
    $region59: #{tpu_custom_call.1} parent=1 // pred_check_branch
      %176 = sbr.rel (0) target = $region61
    $region60: #{tpu_custom_call.1} parent=1 // pred_region
      %s178 = ssub.s32 16, 16
      %179 = vsyncadd [#allocation18], %s178
      %s181 = sshll.u32 [#allocation17], 4
      %s182 = int_to_ptr.vmem [resolvable:$true] %s181
      %184 = dma.hbm_to_vmem [thread:$0]  %s29, 16, %s182, [#allocation18]
    $region61: #{tpu_custom_call.1} parent=1 // pred_fallthru
      _
    // Predicated region
    $region62: #{tpu_custom_call.1} parent=1 // pred_check
      _
    $region63: #{tpu_custom_call.1} parent=1 // pred_check_branch
      %186 = sbr.rel (0) target = $region65
    $region64: #{tpu_custom_call.1} parent=1 // pred_region
      _
    $region65: #{tpu_custom_call.1} parent=1 // pred_fallthru
      _
    // Predicated region
    $region66: #{tpu_custom_call.1} parent=1 // pred_check
      _
    $region67: #{tpu_custom_call.1} parent=1 // pred_check_branch
      %188 = sbr.rel (0) target = $region69
    $region68: #{tpu_custom_call.1} parent=1 // pred_region
      _
    $region69: #{tpu_custom_call.1} parent=1 // pred_fallthru
      _
    // Predicated region
    $region70: #{tpu_custom_call.1} parent=1 // pred_check
      _
    $region71: #{tpu_custom_call.1} parent=1 // pred_check_branch
      %190 = sbr.rel (0) target = $region73
    $region72: #{tpu_custom_call.1} parent=1 // pred_region
      _
    $region73: #{tpu_custom_call.1} parent=1 // pred_fallthru
      _
    // Predicated region
    $region74: #{tpu_custom_call.1} parent=1 // pred_check
      _
    $region75: #{tpu_custom_call.1} parent=1 // pred_check_branch
      %192 = sbr.rel (0) target = $region77
    $region76: #{tpu_custom_call.1} parent=1 // pred_region
      _
    $region77: #{tpu_custom_call.1} parent=1 // pred_fallthru
      _
    // Predicated region
    $region78: #{tpu_custom_call.1} parent=1 // pred_check
      _
    $region79: #{tpu_custom_call.1} parent=1 // pred_check_branch
      %194 = sbr.rel (0) target = $region81
    $region80: #{tpu_custom_call.1} parent=1 // pred_region
      _
    $region81: #{tpu_custom_call.1} parent=1 // pred_fallthru
      _
    // Predicated region
    $region82: #{tpu_custom_call.1} parent=1 // pred_check
      _
    $region83: #{tpu_custom_call.1} parent=1 // pred_check_branch
      %196 = sbr.rel (0) target = $region85
    $region84: #{tpu_custom_call.1} parent=1 // pred_region
      _
    $region85: #{tpu_custom_call.1} parent=1 // pred_fallthru
      _
    // Predicated region
    $region86: #{tpu_custom_call.1} parent=1 // pred_check
      _
    $region87: #{tpu_custom_call.1} parent=1 // pred_check_branch
      %198 = sbr.rel (0) target = $region89
    $region88: #{tpu_custom_call.1} parent=1 // pred_region
      _
    $region89: #{tpu_custom_call.1} parent=1 // pred_fallthru
      _
    // Predicated region
    $region90: #{tpu_custom_call.1} parent=1 // pred_check
      _
    $region91: #{tpu_custom_call.1} parent=1 // pred_check_branch
      %200 = sbr.rel (0) target = $region93
    $region92: #{tpu_custom_call.1} parent=1 // pred_region
      _
    $region93: #{tpu_custom_call.1} parent=1 // pred_fallthru
      _
    // Predicated region
    $region94: #{tpu_custom_call.1} parent=1 // pred_check
      _
    $region95: #{tpu_custom_call.1} parent=1 // pred_check_branch
      %202 = sbr.rel (0) target = $region97
    $region96: #{tpu_custom_call.1} parent=1 // pred_region
      _
    $region97: #{tpu_custom_call.1} parent=1 // pred_fallthru
      _
    // Predicated region
    $region98: #{tpu_custom_call.1} parent=1 // pred_check
      _
    $region99: #{tpu_custom_call.1} parent=1 // pred_check_branch
      %204 = sbr.rel (0) target = $region101
    $region100: #{tpu_custom_call.1} parent=1 // pred_region
      _
    $region101: #{tpu_custom_call.1} parent=1 // pred_fallthru
      _
    // Predicated region
    $region102: #{tpu_custom_call.1} parent=1 // pred_check
      _
    $region103: #{tpu_custom_call.1} parent=1 // pred_check_branch
      %206 = sbr.rel (0) target = $region105
    $region104: #{tpu_custom_call.1} parent=1 // pred_region
      _
    $region105: #{tpu_custom_call.1} parent=1 // pred_fallthru
      _
    // Predicated region
    $region106: #{tpu_custom_call.1} parent=1 // pred_check
      _
    $region107: #{tpu_custom_call.1} parent=1 // pred_check_branch
      %208 = sbr.rel (0) target = $region109
    $region108: #{tpu_custom_call.1} parent=1 // pred_region
      _
    $region109: #{tpu_custom_call.1} parent=1 // pred_fallthru
      _
    // Predicated region
    $region110: #{tpu_custom_call.1} parent=1 // pred_check
      _
    $region111: #{tpu_custom_call.1} parent=1 // pred_check_branch
      %210 = sbr.rel (0) target = $region113
    $region112: #{tpu_custom_call.1} parent=1 // pred_region
      _
    $region113: #{tpu_custom_call.1} parent=1 // pred_fallthru
      _
    // Predicated region
    $region114: #{tpu_custom_call.1} parent=1 // pred_check
      _
    $region115: #{tpu_custom_call.1} parent=1 // pred_check_branch
      %212 = sbr.rel (0) target = $region117
    $region116: #{tpu_custom_call.1} parent=1 // pred_region
      _
    $region117: #{tpu_custom_call.1} parent=1 // pred_fallthru
      _
    // Predicated region
    $region118: #{tpu_custom_call.1} parent=1 // pred_check
      _
    $region119: #{tpu_custom_call.1} parent=1 // pred_check_branch
      %214 = sbr.rel (0) target = $region121
    $region120: #{tpu_custom_call.1} parent=1 // pred_region
      %215 = dma.done [#allocation3], 128
    $region121: #{tpu_custom_call.1} parent=1 // pred_fallthru
      _
    // Predicated region
    $region122: #{tpu_custom_call.1} parent=1 // pred_check
      _
    $region123: #{tpu_custom_call.1} parent=1 // pred_check_branch
      %217 = sbr.rel (0) target = $region125
    $region124: #{tpu_custom_call.1} parent=1 // pred_region
      %218 = dma.done [#allocation6], 128
    $region125: #{tpu_custom_call.1} parent=1 // pred_fallthru
      _
    // Predicated region
    $region126: #{tpu_custom_call.1} parent=1 // pred_check
      _
    $region127: #{tpu_custom_call.1} parent=1 // pred_check_branch
      %220 = sbr.rel (0) target = $region129
    $region128: #{tpu_custom_call.1} parent=1 // pred_region
      %221 = dma.done [#allocation6], 16
    $region129: #{tpu_custom_call.1} parent=1 // pred_fallthru
      _
    // Predicated region
    $region130: #{tpu_custom_call.1} parent=1 // pred_check
      _
    $region131: #{tpu_custom_call.1} parent=1 // pred_check_branch
      %223 = sbr.rel (0) target = $region133
    $region132: #{tpu_custom_call.1} parent=1 // pred_region
      %224 = dma.done [#allocation9], 16
    $region133: #{tpu_custom_call.1} parent=1 // pred_fallthru
      _
    // Predicated region
    $region134: #{tpu_custom_call.1} parent=1 // pred_check
      _
    $region135: #{tpu_custom_call.1} parent=1 // pred_check_branch
      %226 = sbr.rel (0) target = $region137
    $region136: #{tpu_custom_call.1} parent=1 // pred_region
      %227 = dma.done [#allocation9], 16
    $region137: #{tpu_custom_call.1} parent=1 // pred_fallthru
      _
    // Predicated region
    $region138: #{tpu_custom_call.1} parent=1 // pred_check
      _
    $region139: #{tpu_custom_call.1} parent=1 // pred_check_branch
      %229 = sbr.rel (0) target = $region141
    $region140: #{tpu_custom_call.1} parent=1 // pred_region
      %230 = dma.done [#allocation12], 16
    $region141: #{tpu_custom_call.1} parent=1 // pred_fallthru
      _
    // Predicated region
    $region142: #{tpu_custom_call.1} parent=1 // pred_check
      _
    $region143: #{tpu_custom_call.1} parent=1 // pred_check_branch
      %232 = sbr.rel (0) target = $region145
    $region144: #{tpu_custom_call.1} parent=1 // pred_region
      %233 = dma.done [#allocation12], 16
    $region145: #{tpu_custom_call.1} parent=1 // pred_fallthru
      _
    // Predicated region
    $region146: #{tpu_custom_call.1} parent=1 // pred_check
      _
    $region147: #{tpu_custom_call.1} parent=1 // pred_check_branch
      %235 = sbr.rel (0) target = $region149
    $region148: #{tpu_custom_call.1} parent=1 // pred_region
      %236 = dma.done [#allocation15], 16
    $region149: #{tpu_custom_call.1} parent=1 // pred_fallthru
      _
    // Predicated region
    $region150: #{tpu_custom_call.1} parent=1 // pred_check
      _
    $region151: #{tpu_custom_call.1} parent=1 // pred_check_branch
      %238 = sbr.rel (0) target = $region153
    $region152: #{tpu_custom_call.1} parent=1 // pred_region
      %239 = dma.done [#allocation15], 16
    $region153: #{tpu_custom_call.1} parent=1 // pred_fallthru
      _
    // Predicated region
    $region154: #{tpu_custom_call.1} parent=1 // pred_check
      _
    $region155: #{tpu_custom_call.1} parent=1 // pred_check_branch
      %241 = sbr.rel (0) target = $region157
    $region156: #{tpu_custom_call.1} parent=1 // pred_region
      %242 = dma.done [#allocation18], 16
    $region157: #{tpu_custom_call.1} parent=1 // pred_fallthru
      _
    %v244 = vld [vmem:[%s1] sm:$0xff]
    %v245 = vld [vmem:[%s1 + $0x8] sm:$0xff]
    %v246 = vld [vmem:[#allocation7] sm:$0x1]
    %v247 = vld [vmem:[#allocation8] sm:$0x1]
    %vm248 = vcmask 261120
    %v249 = vsel %vm248, %v244, 0.0
    %250 = vadd.xlane.f32.xlu0 %v249
    %v251 = vpop.xlane.xlu0 %250
    %v252 = vsel %vm248, %v245, 0.0
    %253 = vadd.xlane.f32.xlu0 %v252
    %v254 = vpop.xlane.xlu0 %253
    %v255 = vrcp.pop 32.0
    %v256 = vmul.f32 %v251, %v255
    %v257 = vmul.f32 %v254, %v255
    %v258 = vsub.f32 %v244, %v256
    %v259 = vsub.f32 %v245, %v257
    %v260 = vmul.f32 %v258, %v258
    %v261 = vmul.f32 %v259, %v259
    %v262 = vsel %vm248, %v260, 0.0
    %263 = vadd.xlane.f32.xlu0 %v262
    %v264 = vpop.xlane.xlu0 %263
    %v265 = vsel %vm248, %v261, 0.0
    %266 = vadd.xlane.f32.xlu0 %v265
    %v267 = vpop.xlane.xlu0 %266
    %v268 = vmul.f32 %v264, %v255
    %v269 = vmul.f32 %v267, %v255
    %v270 = vadd.f32 %v268, 1e-05
    %v271 = vadd.f32 %v269, 1e-05
    %v272 = vrsqrt.pop %v270
    %v273 = vrsqrt.pop %v271
    %v274 = vmul.f32 %v258, %v272
    %v275 = vmul.f32 %v259, %v273
    %v277 = vlaneseq
    %v278 = vshrl.u32 %v277, 7
    %v279 = vsub.s32 0, %v278
    %v280 = vrot.slane %v246, %v279
    %v282 = vmul.f32 %v274, %v280
    %v283 = vmul.f32 %v275, %v280
    %v285 = vlaneseq
    %v286 = vshrl.u32 %v285, 7
    %v287 = vsub.s32 0, %v286
    %v288 = vrot.slane %v247, %v287
    %v290 = vadd.f32 %v282, %v288
    %v291 = vadd.f32 %v283, %v288
    %v292 = vpack.c.bf16 %v291, %v290
    %v293 = vld [vmem:[%s11] sm:$0xf]
    %v294 = vld [vmem:[%s11 + $0x4] sm:$0xf]
    %v295 = vld [vmem:[%s11 + $0x8] sm:$0xf]
    %v296 = vld [vmem:[%s11 + $0xc] sm:$0xf]
    %v297 = vld [vmem:[#allocation10] sm:$0x1]
    %v299 = vlaneseq
    %v300 = vshrl.u32 %v299, 7
    %v301 = vsub.s32 0, %v300
    %v302 = vrot.slane %v297, %v301
    %v308 = vunpack.c.l.b16 %v293
    %v309 = vunpack.c.l.b16 %v294
    %v310 = vunpack.c.l.b16 %v295
    %v311 = vunpack.c.l.b16 %v296
    %v312 = vpack.c.b16 %v309, %v308
    %v313 = vpack.c.b16 %v311, %v310
    %v317 = vsel %vm248, %v292, 0
    %319 = vmatprep.subr.bf16.mxu0 0
    %320 = vmatpush1.bf16.msra.mxu0 %v312
    %321 = vmatprep.subr.bf16.mxu0 0
    %322 = vmatpush1.bf16.msra.mxu0 %v313
    %323 = vmatprep.subr.bf16.mxu0 0
    %324 = vmatpush1.bf16.msra.mxu0 0
    %325 = vmatprep.subr.bf16.mxu0 0
    %326 = vmatpush1.bf16.msra.mxu0 0
    %327 = vmatprep.subr.bf16.mxu0 0
    %328 = vmatpush1.bf16.msra.mxu0 0
    %329 = vmatprep.subr.bf16.mxu0 0
    %330 = vmatpush1.bf16.msra.mxu0 0
    %331 = vmatprep.subr.bf16.mxu0 0
    %332 = vmatpush1.bf16.msra.mxu0 0
    %333 = vmatprep.subr.bf16.mxu0 0
    %334 = vmatpush1.bf16.msra.mxu0 0
    %335 = vmatprep.subr.bf16.mxu0 0
    %336 = vmatpush1.bf16.msra.mxu0 0
    %337 = vmatprep.subr.bf16.mxu0 0
    %338 = vmatpush1.bf16.msra.mxu0 0
    %339 = vmatprep.subr.bf16.mxu0 0
    %340 = vmatpush1.bf16.msra.mxu0 0
    %341 = vmatprep.subr.bf16.mxu0 0
    %342 = vmatpush1.bf16.msra.mxu0 0
    %343 = vmatprep.subr.bf16.mxu0 0
    %344 = vmatpush1.bf16.msra.mxu0 0
    %345 = vmatprep.subr.bf16.mxu0 0
    %346 = vmatpush1.bf16.msra.mxu0 0
    %347 = vmatprep.subr.bf16.mxu0 0
    %348 = vmatpush1.bf16.msra.mxu0 0
    %349 = vmatprep.subr.bf16.mxu0 0
    %350 = vmatpush1.bf16.msra.mxu0 0
    %351 = vmatprep.mubr.bf16.mxu0 0
    %352 = vmatmul.mubr.bf16.gmra.mrb[0].mxu0 %v317
    %v353 = vpop.f32.mrb[0].mxu0
    %v354 = vadd.f32 %v302, %v353
    %v355 = vpop.f32.mrb[0].mxu0
    %v356 = vpop.f32.mrb[0].mxu0
    %v357 = vadd.f32 %v302, %v356
    %v358 = vpop.f32.mrb[0].mxu0
    %359 = vdwg.mxu0
    %v360 = vxor.u32 %v354, 2147483648
    %v361 = vxor.u32 %v357, 2147483648
    %v362 = vmul.f32 %v360, 1.442695
    %v363 = vpow.pop %v362
    %v364 = vmul.f32 %v361, 1.442695
    %v365 = vpow.pop %v364
    %v366 = vadd.f32 %v363, 1.0
    %v367 = vadd.f32 %v365, 1.0
    %v368 = vrcp.pop %v366
    %v369 = vmul.f32 1.0, %v368
    %v370 = vrcp.pop %v367
    %v371 = vmul.f32 1.0, %v370
    %v372 = vmul.f32 %v354, %v369
    %v373 = vmul.f32 %v357, %v371
    %v374 = vpack.c.bf16 %v373, %v372
    %v375 = vld [vmem:[%s15] sm:$0xf]
    %v376 = vld [vmem:[%s15 + $0x4] sm:$0xf]
    %v377 = vld [vmem:[%s15 + $0x8] sm:$0xf]
    %v378 = vld [vmem:[%s15 + $0xc] sm:$0xf]
    %v379 = vld [vmem:[%s15 + $0x10] sm:$0xf]
    %v380 = vld [vmem:[%s15 + $0x14] sm:$0xf]
    %v381 = vld [vmem:[%s15 + $0x18] sm:$0xf]
    %v382 = vld [vmem:[%s15 + $0x1c] sm:$0xf]
    %v383 = vld [vmem:[#allocation11] sm:$0x1]
    %v385 = vlaneseq
    %v386 = vshrl.u32 %v385, 7
    %v387 = vsub.s32 0, %v386
    %v388 = vrot.slane %v383, %v387
    %v398 = vunpack.c.l.b16 %v375
    %v399 = vunpack.c.l.b16 %v376
    %v400 = vunpack.c.l.b16 %v377
    %v401 = vunpack.c.l.b16 %v378
    %v402 = vunpack.c.l.b16 %v379
    %v403 = vunpack.c.l.b16 %v380
    %v404 = vunpack.c.l.b16 %v381
    %v405 = vunpack.c.l.b16 %v382
    %v406 = vpack.c.b16 %v399, %v398
    %v407 = vpack.c.b16 %v401, %v400
    %v408 = vpack.c.b16 %v403, %v402
    %v409 = vpack.c.b16 %v405, %v404
    %vm414 = vcmask 523264
    %v416 = vsel %vm414, %v374, 0
    %418 = vmatprep.subr.bf16.mxu0 0
    %419 = vmatpush1.bf16.msra.mxu0 %v406
    %420 = vmatprep.subr.bf16.mxu0 0
    %421 = vmatpush1.bf16.msra.mxu0 %v407
    %422 = vmatprep.subr.bf16.mxu0 0
    %423 = vmatpush1.bf16.msra.mxu0 %v408
    %424 = vmatprep.subr.bf16.mxu0 0
    %425 = vmatpush1.bf16.msra.mxu0 %v409
    %426 = vmatprep.subr.bf16.mxu0 0
    %427 = vmatpush1.bf16.msra.mxu0 0
    %428 = vmatprep.subr.bf16.mxu0 0
    %429 = vmatpush1.bf16.msra.mxu0 0
    %430 = vmatprep.subr.bf16.mxu0 0
    %431 = vmatpush1.bf16.msra.mxu0 0
    %432 = vmatprep.subr.bf16.mxu0 0
    %433 = vmatpush1.bf16.msra.mxu0 0
    %434 = vmatprep.subr.bf16.mxu0 0
    %435 = vmatpush1.bf16.msra.mxu0 0
    %436 = vmatprep.subr.bf16.mxu0 0
    %437 = vmatpush1.bf16.msra.mxu0 0
    %438 = vmatprep.subr.bf16.mxu0 0
    %439 = vmatpush1.bf16.msra.mxu0 0
    %440 = vmatprep.subr.bf16.mxu0 0
    %441 = vmatpush1.bf16.msra.mxu0 0
    %442 = vmatprep.subr.bf16.mxu0 0
    %443 = vmatpush1.bf16.msra.mxu0 0
    %444 = vmatprep.subr.bf16.mxu0 0
    %445 = vmatpush1.bf16.msra.mxu0 0
    %446 = vmatprep.subr.bf16.mxu0 0
    %447 = vmatpush1.bf16.msra.mxu0 0
    %448 = vmatprep.subr.bf16.mxu0 0
    %449 = vmatpush1.bf16.msra.mxu0 0
    %450 = vmatprep.mubr.bf16.mxu0 0
    %451 = vmatmul.mubr.bf16.gmra.mrb[0].mxu0 %v416
    %v452 = vpop.f32.mrb[0].mxu0
    %v453 = vadd.f32 %v388, %v452
    %v454 = vpop.f32.mrb[0].mxu0
    %v455 = vpop.f32.mrb[0].mxu0
    %v456 = vadd.f32 %v388, %v455
    %v457 = vpop.f32.mrb[0].mxu0
    %458 = vdwg.mxu0
    %v459 = vmul.f32 %v453, 0.5
    %v460 = vmul.f32 %v456, 0.5
    %v461 = vadd.f32 %v459, %v244
    %v462 = vadd.f32 %v460, %v245
    %v463 = vld [vmem:[#allocation13] sm:$0x1]
    %v464 = vld [vmem:[#allocation14] sm:$0x1]
    %v465 = vsel %vm248, %v461, 0.0
    %466 = vadd.xlane.f32.xlu0 %v465
    %v467 = vpop.xlane.xlu0 %466
    %v468 = vsel %vm248, %v462, 0.0
    %469 = vadd.xlane.f32.xlu0 %v468
    %v470 = vpop.xlane.xlu0 %469
    %v471 = vmul.f32 %v467, %v255
    %v472 = vmul.f32 %v470, %v255
    %v473 = vsub.f32 %v461, %v471
    %v474 = vsub.f32 %v462, %v472
    %v475 = vmul.f32 %v473, %v473
    %v476 = vmul.f32 %v474, %v474
    %v477 = vsel %vm248, %v475, 0.0
    %478 = vadd.xlane.f32.xlu0 %v477
    %v479 = vpop.xlane.xlu0 %478
    %v480 = vsel %vm248, %v476, 0.0
    %481 = vadd.xlane.f32.xlu0 %v480
    %v482 = vpop.xlane.xlu0 %481
    %v483 = vmul.f32 %v479, %v255
    %v484 = vmul.f32 %v482, %v255
    %v485 = vadd.f32 %v483, 1e-05
    %v486 = vadd.f32 %v484, 1e-05
    %v487 = vrsqrt.pop %v485
    %v488 = vrsqrt.pop %v486
    %v489 = vmul.f32 %v473, %v487
    %v490 = vmul.f32 %v474, %v488
    %v492 = vlaneseq
    %v493 = vshrl.u32 %v492, 7
    %v494 = vsub.s32 0, %v493
    %v495 = vrot.slane %v463, %v494
    %v497 = vmul.f32 %v489, %v495
    %v498 = vmul.f32 %v490, %v495
    %v500 = vlaneseq
    %v501 = vshrl.u32 %v500, 7
    %v502 = vsub.s32 0, %v501
    %v503 = vrot.slane %v464, %v502
    %v505 = vadd.f32 %v497, %v503
    %v506 = vadd.f32 %v498, %v503
    %v507 = vpack.c.bf16 %v506, %v505
    %v508 = vld [vmem:[%s23] sm:$0xf]
    %v509 = vld [vmem:[%s23 + $0x4] sm:$0xf]
    %v510 = vld [vmem:[%s23 + $0x8] sm:$0xf]
    %v511 = vld [vmem:[%s23 + $0xc] sm:$0xf]
    %v512 = vld [vmem:[#allocation16] sm:$0x1]
    %v514 = vlaneseq
    %v515 = vshrl.u32 %v514, 7
    %v516 = vsub.s32 0, %v515
    %v517 = vrot.slane %v512, %v516
    %v523 = vunpack.c.l.b16 %v508
    %v524 = vunpack.c.l.b16 %v509
    %v525 = vunpack.c.l.b16 %v510
    %v526 = vunpack.c.l.b16 %v511
    %v527 = vpack.c.b16 %v524, %v523
    %v528 = vpack.c.b16 %v526, %v525
    %v532 = vsel %vm248, %v507, 0
    %534 = vmatprep.subr.bf16.mxu0 0
    %535 = vmatpush1.bf16.msra.mxu0 %v527
    %536 = vmatprep.subr.bf16.mxu0 0
    %537 = vmatpush1.bf16.msra.mxu0 %v528
    %538 = vmatprep.subr.bf16.mxu0 0
    %539 = vmatpush1.bf16.msra.mxu0 0
    %540 = vmatprep.subr.bf16.mxu0 0
    %541 = vmatpush1.bf16.msra.mxu0 0
    %542 = vmatprep.subr.bf16.mxu0 0
    %543 = vmatpush1.bf16.msra.mxu0 0
    %544 = vmatprep.subr.bf16.mxu0 0
    %545 = vmatpush1.bf16.msra.mxu0 0
    %546 = vmatprep.subr.bf16.mxu0 0
    %547 = vmatpush1.bf16.msra.mxu0 0
    %548 = vmatprep.subr.bf16.mxu0 0
    %549 = vmatpush1.bf16.msra.mxu0 0
    %550 = vmatprep.subr.bf16.mxu0 0
    %551 = vmatpush1.bf16.msra.mxu0 0
    %552 = vmatprep.subr.bf16.mxu0 0
    %553 = vmatpush1.bf16.msra.mxu0 0
    %554 = vmatprep.subr.bf16.mxu0 0
    %555 = vmatpush1.bf16.msra.mxu0 0
    %556 = vmatprep.subr.bf16.mxu0 0
    %557 = vmatpush1.bf16.msra.mxu0 0
    %558 = vmatprep.subr.bf16.mxu0 0
    %559 = vmatpush1.bf16.msra.mxu0 0
    %560 = vmatprep.subr.bf16.mxu0 0
    %561 = vmatpush1.bf16.msra.mxu0 0
    %562 = vmatprep.subr.bf16.mxu0 0
    %563 = vmatpush1.bf16.msra.mxu0 0
    %564 = vmatprep.subr.bf16.mxu0 0
    %565 = vmatpush1.bf16.msra.mxu0 0
    %566 = vmatprep.mubr.bf16.mxu0 0
    %567 = vmatmul.mubr.bf16.gmra.mrb[0].mxu0 %v532
    %v568 = vpop.f32.mrb[0].mxu0
    %v569 = vadd.f32 %v517, %v568
    %v570 = vpop.f32.mrb[0].mxu0
    %v571 = vpop.f32.mrb[0].mxu0
    %v572 = vadd.f32 %v517, %v571
    %v573 = vpop.f32.mrb[0].mxu0
    %574 = vdwg.mxu0
    %v575 = vld [vmem:[#allocation2] sm:$0xff]
    %v576 = vld [vmem:[#allocation5] sm:$0xff]
    %v577 = vmul.f32 %v569, %v575
    %v578 = vmul.f32 %v572, %v575
    %v579 = vsub.f32 0.0, %v569
    %v580 = vsub.f32 0.0, %v572
    %583 = vrot.lane.b32.xlu0 %v579, 124
    %v584 = vpop.permute.xlu0 %583
    %585 = vrot.lane.b32.xlu0 %v580, 124
    %v586 = vpop.permute.xlu0 %585
    %591 = vrot.lane.b32.xlu0 %v569, 4
    %v592 = vpop.permute.xlu0 %591
    %593 = vrot.lane.b32.xlu0 %v572, 4
    %v594 = vpop.permute.xlu0 %593
    %vm597 = vcmask 31744
    %v598 = vsel %vm597, %v584, %v592
    %v599 = vsel %vm597, %v586, %v594
    %v600 = vmul.f32 %v598, %v576
    %v601 = vmul.f32 %v599, %v576
    %v602 = vadd.f32 %v577, %v600
    %v603 = vadd.f32 %v578, %v601
    %605 = vrot.lane.b32.xlu0 %v575, 32
    %v606 = vpop.permute.xlu0 %605
    %v608 = vmul.f32 %v569, %v606
    %v609 = vmul.f32 %v572, %v606
    %610 = vrot.lane.b32.xlu0 %v579, 92
    %v611 = vpop.permute.xlu0 %610
    %612 = vrot.lane.b32.xlu0 %v580, 92
    %v613 = vpop.permute.xlu0 %612
    %616 = vrot.lane.b32.xlu0 %v569, 100
    %v617 = vpop.permute.xlu0 %616
    %618 = vrot.lane.b32.xlu0 %v572, 100
    %v619 = vpop.permute.xlu0 %618
    %v622 = vsel %vm597, %v611, %v617
    %v623 = vsel %vm597, %v613, %v619
    %v624 = vmul.f32 %v622, %v576
    %v625 = vmul.f32 %v623, %v576
    %628 = vrot.lane.b32.xlu0 %v624, 32
    %v629 = vpop.permute.xlu0 %628
    %630 = vrot.lane.b32.xlu0 %v625, 32
    %v631 = vpop.permute.xlu0 %630
    %v634 = vadd.f32 %v608, %v629
    %v635 = vadd.f32 %v609, %v631
    %v636 = vpack.c.bf16 %v602, %v602
    %v637 = vpack.c.bf16 %v603, %v603
    %v638 = vpack.c.bf16 %v634, %v634
    %v639 = vpack.c.bf16 %v635, %v635
    %641 = vrot.lane.b32.xlu0 %v638, 96
    %v642 = vpop.permute.xlu0 %641
    %vm643 = vcmask 64512
    %v645 = vsel %vm643, %v636, 0
    %v648 = vsel %vm643, %v642, 0
    %650 = vmatprep.subr.bf16.mxu0 0
    %651 = vmatpush1.bf16.xpose.msra.mxu0 %v648
    %652 = vmatprep.subr.bf16.mxu0 0
    %653 = vmatpush1.bf16.xpose.msra.mxu0 0
    %654 = vmatprep.subr.bf16.mxu0 0
    %655 = vmatpush1.bf16.xpose.msra.mxu0 0
    %656 = vmatprep.subr.bf16.mxu0 0
    %657 = vmatpush1.bf16.xpose.msra.mxu0 0
    %658 = vmatprep.subr.bf16.mxu0 0
    %659 = vmatpush1.bf16.xpose.msra.mxu0 0
    %660 = vmatprep.subr.bf16.mxu0 0
    %661 = vmatpush1.bf16.xpose.msra.mxu0 0
    %662 = vmatprep.subr.bf16.mxu0 0
    %663 = vmatpush1.bf16.xpose.msra.mxu0 0
    %664 = vmatprep.subr.bf16.mxu0 0
    %665 = vmatpush1.bf16.xpose.msra.mxu0 0
    %666 = vmatprep.subr.bf16.mxu0 0
    %667 = vmatpush1.bf16.xpose.msra.mxu0 0
    %668 = vmatprep.subr.bf16.mxu0 0
    %669 = vmatpush1.bf16.xpose.msra.mxu0 0
    %670 = vmatprep.subr.bf16.mxu0 0
    %671 = vmatpush1.bf16.xpose.msra.mxu0 0
    %672 = vmatprep.subr.bf16.mxu0 0
    %673 = vmatpush1.bf16.xpose.msra.mxu0 0
    %674 = vmatprep.subr.bf16.mxu0 0
    %675 = vmatpush1.bf16.xpose.msra.mxu0 0
    %676 = vmatprep.subr.bf16.mxu0 0
    %677 = vmatpush1.bf16.xpose.msra.mxu0 0
    %678 = vmatprep.subr.bf16.mxu0 0
    %679 = vmatpush1.bf16.xpose.msra.mxu0 0
    %680 = vmatprep.subr.bf16.mxu0 0
    %681 = vmatpush1.bf16.xpose.msra.mxu0 0
    %682 = vmatprep.mubr.bf16.mxu0 0
    %683 = vmatmul.mubr.bf16.gmra.mrb[0].mxu0 %v645
    %v684 = vpop.f32.mrb[0].mxu0
    %v685 = vadd.f32 0.0, %v684
    %v686 = vpop.f32.mrb[0].mxu0
    %v687 = vpop.f32.mrb[0].mxu0
    %v688 = vpop.f32.mrb[0].mxu0
    %689 = vdwg.mxu0
    %691 = vrot.lane.b32.xlu0 %v639, 96
    %v692 = vpop.permute.xlu0 %691
    %v694 = vsel %vm643, %v637, 0
    %v697 = vsel %vm643, %v692, 0
    %699 = vmatprep.subr.bf16.mxu0 0
    %700 = vmatpush1.bf16.xpose.msra.mxu0 %v697
    %701 = vmatprep.subr.bf16.mxu0 0
    %702 = vmatpush1.bf16.xpose.msra.mxu0 0
    %703 = vmatprep.subr.bf16.mxu0 0
    %704 = vmatpush1.bf16.xpose.msra.mxu0 0
    %705 = vmatprep.subr.bf16.mxu0 0
    %706 = vmatpush1.bf16.xpose.msra.mxu0 0
    %707 = vmatprep.subr.bf16.mxu0 0
    %708 = vmatpush1.bf16.xpose.msra.mxu0 0
    %709 = vmatprep.subr.bf16.mxu0 0
    %710 = vmatpush1.bf16.xpose.msra.mxu0 0
    %711 = vmatprep.subr.bf16.mxu0 0
    %712 = vmatpush1.bf16.xpose.msra.mxu0 0
    %713 = vmatprep.subr.bf16.mxu0 0
    %714 = vmatpush1.bf16.xpose.msra.mxu0 0
    %715 = vmatprep.subr.bf16.mxu0 0
    %716 = vmatpush1.bf16.xpose.msra.mxu0 0
    %717 = vmatprep.subr.bf16.mxu0 0
    %718 = vmatpush1.bf16.xpose.msra.mxu0 0
    %719 = vmatprep.subr.bf16.mxu0 0
    %720 = vmatpush1.bf16.xpose.msra.mxu0 0
    %721 = vmatprep.subr.bf16.mxu0 0
    %722 = vmatpush1.bf16.xpose.msra.mxu0 0
    %723 = vmatprep.subr.bf16.mxu0 0
    %724 = vmatpush1.bf16.xpose.msra.mxu0 0
    %725 = vmatprep.subr.bf16.mxu0 0
    %726 = vmatpush1.bf16.xpose.msra.mxu0 0
    %727 = vmatprep.subr.bf16.mxu0 0
    %728 = vmatpush1.bf16.xpose.msra.mxu0 0
    %729 = vmatprep.subr.bf16.mxu0 0
    %730 = vmatpush1.bf16.xpose.msra.mxu0 0
    %731 = vmatprep.mubr.bf16.mxu0 0
    %732 = vmatmul.mubr.bf16.gmra.mrb[0].mxu0 %v694
    %v733 = vpop.f32.mrb[0].mxu0
    %v734 = vadd.f32 0.0, %v733
    %v735 = vpop.f32.mrb[0].mxu0
    %v736 = vpop.f32.mrb[0].mxu0
    %v737 = vpop.f32.mrb[0].mxu0
    %738 = vdwg.mxu0
    %v739 = vrcp.pop 0.35355338
    %v740 = vmul.f32 %v685, %v739
    %v741 = vmul.f32 %v734, %v739
    %v742 = vsel %vm643, %v740, -inf
    %743 = vmax.xlane.f32.xlu0 %v742
    %v744 = vpop.xlane.xlu0 %743
    %v745 = vsel %vm643, %v741, -inf
    %746 = vmax.xlane.f32.xlu0 %v745
    %v747 = vpop.xlane.xlu0 %746
    %v748 = vsub.f32 %v740, %v744
    %v749 = vsub.f32 %v741, %v747
    %v750 = vmul.f32 %v748, 1.442695
    %v751 = vpow.pop %v750
    %v752 = vmul.f32 %v749, 1.442695
    %v753 = vpow.pop %v752
    %v754 = vsel %vm643, %v751, 0.0
    %755 = vadd.xlane.f32.xlu0 %v754
    %v756 = vpop.xlane.xlu0 %755
    %v757 = vsel %vm643, %v753, 0.0
    %758 = vadd.xlane.f32.xlu0 %v757
    %v759 = vpop.xlane.xlu0 %758
    %v760 = vrcp.pop %v756
    %v761 = vrcp.pop %v759
    %v762 = vmul.f32 %v751, %v760
    %v763 = vmul.f32 %v753, %v761
    %v764 = vpack.c.bf16 %v762, %v762
    %v765 = vpack.c.bf16 %v763, %v763
    %v766 = vpack.c.bf16 %v569, %v569
    %v767 = vpack.c.bf16 %v572, %v572
    %769 = vrot.lane.b32.xlu0 %v766, 64
    %v770 = vpop.permute.xlu0 %769
    %v772 = vsel %vm643, %v764, 0
    %vm774 = vcmask 1043456
    %v776 = vsel %vm774, %v770, 0
    %778 = vmatprep.subr.bf16.mxu0 0
    %779 = vmatpush1.bf16.msra.mxu0 %v776
    %780 = vmatprep.subr.bf16.mxu0 0
    %781 = vmatpush1.bf16.msra.mxu0 0
    %782 = vmatprep.subr.bf16.mxu0 0
    %783 = vmatpush1.bf16.msra.mxu0 0
    %784 = vmatprep.subr.bf16.mxu0 0
    %785 = vmatpush1.bf16.msra.mxu0 0
    %786 = vmatprep.subr.bf16.mxu0 0
    %787 = vmatpush1.bf16.msra.mxu0 0
    %788 = vmatprep.subr.bf16.mxu0 0
    %789 = vmatpush1.bf16.msra.mxu0 0
    %790 = vmatprep.subr.bf16.mxu0 0
    %791 = vmatpush1.bf16.msra.mxu0 0
    %792 = vmatprep.subr.bf16.mxu0 0
    %793 = vmatpush1.bf16.msra.mxu0 0
    %794 = vmatprep.subr.bf16.mxu0 0
    %795 = vmatpush1.bf16.msra.mxu0 0
    %796 = vmatprep.subr.bf16.mxu0 0
    %797 = vmatpush1.bf16.msra.mxu0 0
    %798 = vmatprep.subr.bf16.mxu0 0
    %799 = vmatpush1.bf16.msra.mxu0 0
    %800 = vmatprep.subr.bf16.mxu0 0
    %801 = vmatpush1.bf16.msra.mxu0 0
    %802 = vmatprep.subr.bf16.mxu0 0
    %803 = vmatpush1.bf16.msra.mxu0 0
    %804 = vmatprep.subr.bf16.mxu0 0
    %805 = vmatpush1.bf16.msra.mxu0 0
    %806 = vmatprep.subr.bf16.mxu0 0
    %807 = vmatpush1.bf16.msra.mxu0 0
    %808 = vmatprep.subr.bf16.mxu0 0
    %809 = vmatpush1.bf16.msra.mxu0 0
    %810 = vmatprep.mubr.bf16.mxu0 0
    %811 = vmatmul.mubr.bf16.gmra.mrb[0].mxu0 %v772
    %v812 = vpop.f32.mrb[0].mxu0
    %v813 = vadd.f32 0.0, %v812
    %v814 = vpop.f32.mrb[0].mxu0
    %v815 = vpop.f32.mrb[0].mxu0
    %v816 = vpop.f32.mrb[0].mxu0
    %817 = vdwg.mxu0
    %819 = vrot.lane.b32.xlu0 %v767, 64
    %v820 = vpop.permute.xlu0 %819
    %v822 = vsel %vm643, %v765, 0
    %v825 = vsel %vm774, %v820, 0
    %827 = vmatprep.subr.bf16.mxu0 0
    %828 = vmatpush1.bf16.msra.mxu0 %v825
    %829 = vmatprep.subr.bf16.mxu0 0
    %830 = vmatpush1.bf16.msra.mxu0 0
    %831 = vmatprep.subr.bf16.mxu0 0
    %832 = vmatpush1.bf16.msra.mxu0 0
    %833 = vmatprep.subr.bf16.mxu0 0
    %834 = vmatpush1.bf16.msra.mxu0 0
    %835 = vmatprep.subr.bf16.mxu0 0
    %836 = vmatpush1.bf16.msra.mxu0 0
    %837 = vmatprep.subr.bf16.mxu0 0
    %838 = vmatpush1.bf16.msra.mxu0 0
    %839 = vmatprep.subr.bf16.mxu0 0
    %840 = vmatpush1.bf16.msra.mxu0 0
    %841 = vmatprep.subr.bf16.mxu0 0
    %842 = vmatpush1.bf16.msra.mxu0 0
    %843 = vmatprep.subr.bf16.mxu0 0
    %844 = vmatpush1.bf16.msra.mxu0 0
    %845 = vmatprep.subr.bf16.mxu0 0
    %846 = vmatpush1.bf16.msra.mxu0 0
    %847 = vmatprep.subr.bf16.mxu0 0
    %848 = vmatpush1.bf16.msra.mxu0 0
    %849 = vmatprep.subr.bf16.mxu0 0
    %850 = vmatpush1.bf16.msra.mxu0 0
    %851 = vmatprep.subr.bf16.mxu0 0
    %852 = vmatpush1.bf16.msra.mxu0 0
    %853 = vmatprep.subr.bf16.mxu0 0
    %854 = vmatpush1.bf16.msra.mxu0 0
    %855 = vmatprep.subr.bf16.mxu0 0
    %856 = vmatpush1.bf16.msra.mxu0 0
    %857 = vmatprep.subr.bf16.mxu0 0
    %858 = vmatpush1.bf16.msra.mxu0 0
    %859 = vmatprep.mubr.bf16.mxu0 0
    %860 = vmatmul.mubr.bf16.gmra.mrb[0].mxu0 %v822
    %v861 = vpop.f32.mrb[0].mxu0
    %v862 = vadd.f32 0.0, %v861
    %v863 = vpop.f32.mrb[0].mxu0
    %v864 = vpop.f32.mrb[0].mxu0
    %v865 = vpop.f32.mrb[0].mxu0
    %866 = vdwg.mxu0
    %867 = vrot.lane.b32.xlu0 %v575, 8
    %v868 = vpop.permute.xlu0 %867
    %v870 = vmul.f32 %v569, %v868
    %v871 = vmul.f32 %v572, %v868
    %872 = vrot.lane.b32.xlu0 %v579, 116
    %v873 = vpop.permute.xlu0 %872
    %874 = vrot.lane.b32.xlu0 %v580, 116
    %v875 = vpop.permute.xlu0 %874
    %878 = vrot.lane.b32.xlu0 %v569, 124
    %v879 = vpop.permute.xlu0 %878
    %880 = vrot.lane.b32.xlu0 %v572, 124
    %v881 = vpop.permute.xlu0 %880
    %v884 = vsel %vm597, %v873, %v879
    %v885 = vsel %vm597, %v875, %v881
    %v886 = vmul.f32 %v884, %v576
    %v887 = vmul.f32 %v885, %v576
    %890 = vrot.lane.b32.xlu0 %v886, 8
    %v891 = vpop.permute.xlu0 %890
    %892 = vrot.lane.b32.xlu0 %v887, 8
    %v893 = vpop.permute.xlu0 %892
    %v896 = vadd.f32 %v870, %v891
    %v897 = vadd.f32 %v871, %v893
    %898 = vrot.lane.b32.xlu0 %v575, 40
    %v899 = vpop.permute.xlu0 %898
    %v901 = vmul.f32 %v569, %v899
    %v902 = vmul.f32 %v572, %v899
    %903 = vrot.lane.b32.xlu0 %v579, 84
    %v904 = vpop.permute.xlu0 %903
    %905 = vrot.lane.b32.xlu0 %v580, 84
    %v906 = vpop.permute.xlu0 %905
    %909 = vrot.lane.b32.xlu0 %v569, 92
    %v910 = vpop.permute.xlu0 %909
    %911 = vrot.lane.b32.xlu0 %v572, 92
    %v912 = vpop.permute.xlu0 %911
    %v915 = vsel %vm597, %v904, %v910
    %v916 = vsel %vm597, %v906, %v912
    %v917 = vmul.f32 %v915, %v576
    %v918 = vmul.f32 %v916, %v576
    %921 = vrot.lane.b32.xlu0 %v917, 40
    %v922 = vpop.permute.xlu0 %921
    %923 = vrot.lane.b32.xlu0 %v918, 40
    %v924 = vpop.permute.xlu0 %923
    %v927 = vadd.f32 %v901, %v922
    %v928 = vadd.f32 %v902, %v924
    %v929 = vpack.c.bf16 %v896, %v896
    %v930 = vpack.c.bf16 %v897, %v897
    %v931 = vpack.c.bf16 %v927, %v927
    %v932 = vpack.c.bf16 %v928, %v928
    %934 = vrot.lane.b32.xlu0 %v929, 120
    %v935 = vpop.permute.xlu0 %934
    %937 = vrot.lane.b32.xlu0 %v931, 88
    %v938 = vpop.permute.xlu0 %937
    %v940 = vsel %vm643, %v935, 0
    %v943 = vsel %vm643, %v938, 0
    %945 = vmatprep.subr.bf16.mxu0 0
    %946 = vmatpush1.bf16.xpose.msra.mxu0 %v943
    %947 = vmatprep.subr.bf16.mxu0 0
    %948 = vmatpush1.bf16.xpose.msra.mxu0 0
    %949 = vmatprep.subr.bf16.mxu0 0
    %950 = vmatpush1.bf16.xpose.msra.mxu0 0
    %951 = vmatprep.subr.bf16.mxu0 0
    %952 = vmatpush1.bf16.xpose.msra.mxu0 0
    %953 = vmatprep.subr.bf16.mxu0 0
    %954 = vmatpush1.bf16.xpose.msra.mxu0 0
    %955 = vmatprep.subr.bf16.mxu0 0
    %956 = vmatpush1.bf16.xpose.msra.mxu0 0
    %957 = vmatprep.subr.bf16.mxu0 0
    %958 = vmatpush1.bf16.xpose.msra.mxu0 0
    %959 = vmatprep.subr.bf16.mxu0 0
    %960 = vmatpush1.bf16.xpose.msra.mxu0 0
    %961 = vmatprep.subr.bf16.mxu0 0
    %962 = vmatpush1.bf16.xpose.msra.mxu0 0
    %963 = vmatprep.subr.bf16.mxu0 0
    %964 = vmatpush1.bf16.xpose.msra.mxu0 0
    %965 = vmatprep.subr.bf16.mxu0 0
    %966 = vmatpush1.bf16.xpose.msra.mxu0 0
    %967 = vmatprep.subr.bf16.mxu0 0
    %968 = vmatpush1.bf16.xpose.msra.mxu0 0
    %969 = vmatprep.subr.bf16.mxu0 0
    %970 = vmatpush1.bf16.xpose.msra.mxu0 0
    %971 = vmatprep.subr.bf16.mxu0 0
    %972 = vmatpush1.bf16.xpose.msra.mxu0 0
    %973 = vmatprep.subr.bf16.mxu0 0
    %974 = vmatpush1.bf16.xpose.msra.mxu0 0
    %975 = vmatprep.subr.bf16.mxu0 0
    %976 = vmatpush1.bf16.xpose.msra.mxu0 0
    %977 = vmatprep.mubr.bf16.mxu0 0
    %978 = vmatmul.mubr.bf16.gmra.mrb[0].mxu0 %v940
    %v979 = vpop.f32.mrb[0].mxu0
    %v980 = vadd.f32 0.0, %v979
    %v981 = vpop.f32.mrb[0].mxu0
    %v982 = vpop.f32.mrb[0].mxu0
    %v983 = vpop.f32.mrb[0].mxu0
    %984 = vdwg.mxu0
    %986 = vrot.lane.b32.xlu0 %v930, 120
    %v987 = vpop.permute.xlu0 %986
    %989 = vrot.lane.b32.xlu0 %v932, 88
    %v990 = vpop.permute.xlu0 %989
    %v992 = vsel %vm643, %v987, 0
    %v995 = vsel %vm643, %v990, 0
    %997 = vmatprep.subr.bf16.mxu0 0
    %998 = vmatpush1.bf16.xpose.msra.mxu0 %v995
    %999 = vmatprep.subr.bf16.mxu0 0
    %1000 = vmatpush1.bf16.xpose.msra.mxu0 0
    %1001 = vmatprep.subr.bf16.mxu0 0
    %1002 = vmatpush1.bf16.xpose.msra.mxu0 0
    %1003 = vmatprep.subr.bf16.mxu0 0
    %1004 = vmatpush1.bf16.xpose.msra.mxu0 0
    %1005 = vmatprep.subr.bf16.mxu0 0
    %1006 = vmatpush1.bf16.xpose.msra.mxu0 0
    %1007 = vmatprep.subr.bf16.mxu0 0
    %1008 = vmatpush1.bf16.xpose.msra.mxu0 0
    %1009 = vmatprep.subr.bf16.mxu0 0
    %1010 = vmatpush1.bf16.xpose.msra.mxu0 0
    %1011 = vmatprep.subr.bf16.mxu0 0
    %1012 = vmatpush1.bf16.xpose.msra.mxu0 0
    %1013 = vmatprep.subr.bf16.mxu0 0
    %1014 = vmatpush1.bf16.xpose.msra.mxu0 0
    %1015 = vmatprep.subr.bf16.mxu0 0
    %1016 = vmatpush1.bf16.xpose.msra.mxu0 0
    %1017 = vmatprep.subr.bf16.mxu0 0
    %1018 = vmatpush1.bf16.xpose.msra.mxu0 0
    %1019 = vmatprep.subr.bf16.mxu0 0
    %1020 = vmatpush1.bf16.xpose.msra.mxu0 0
    %1021 = vmatprep.subr.bf16.mxu0 0
    %1022 = vmatpush1.bf16.xpose.msra.mxu0 0
    %1023 = vmatprep.subr.bf16.mxu0 0
    %1024 = vmatpush1.bf16.xpose.msra.mxu0 0
    %1025 = vmatprep.subr.bf16.mxu0 0
    %1026 = vmatpush1.bf16.xpose.msra.mxu0 0
    %1027 = vmatprep.subr.bf16.mxu0 0
    %1028 = vmatpush1.bf16.xpose.msra.mxu0 0
    %1029 = vmatprep.mubr.bf16.mxu0 0
    %1030 = vmatmul.mubr.bf16.gmra.mrb[0].mxu0 %v992
    %v1031 = vpop.f32.mrb[0].mxu0
    %v1032 = vadd.f32 0.0, %v1031
    %v1033 = vpop.f32.mrb[0].mxu0
    %v1034 = vpop.f32.mrb[0].mxu0
    %v1035 = vpop.f32.mrb[0].mxu0
    %1036 = vdwg.mxu0
    %v1037 = vmul.f32 %v980, %v739
    %v1038 = vmul.f32 %v1032, %v739
    %v1039 = vsel %vm643, %v1037, -inf
    %1040 = vmax.xlane.f32.xlu0 %v1039
    %v1041 = vpop.xlane.xlu0 %1040
    %v1042 = vsel %vm643, %v1038, -inf
    %1043 = vmax.xlane.f32.xlu0 %v1042
    %v1044 = vpop.xlane.xlu0 %1043
    %v1045 = vsub.f32 %v1037, %v1041
    %v1046 = vsub.f32 %v1038, %v1044
    %v1047 = vmul.f32 %v1045, 1.442695
    %v1048 = vpow.pop %v1047
    %v1049 = vmul.f32 %v1046, 1.442695
    %v1050 = vpow.pop %v1049
    %v1051 = vsel %vm643, %v1048, 0.0
    %1052 = vadd.xlane.f32.xlu0 %v1051
    %v1053 = vpop.xlane.xlu0 %1052
    %v1054 = vsel %vm643, %v1050, 0.0
    %1055 = vadd.xlane.f32.xlu0 %v1054
    %v1056 = vpop.xlane.xlu0 %1055
    %v1057 = vrcp.pop %v1053
    %v1058 = vrcp.pop %v1056
    %v1059 = vmul.f32 %v1048, %v1057
    %v1060 = vmul.f32 %v1050, %v1058
    %v1061 = vpack.c.bf16 %v1059, %v1059
    %v1062 = vpack.c.bf16 %v1060, %v1060
    %1063 = vrot.lane.b32.xlu0 %v766, 56
    %v1064 = vpop.permute.xlu0 %1063
    %v1066 = vsel %vm643, %v1061, 0
    %v1069 = vsel %vm774, %v1064, 0
    %1071 = vmatprep.subr.bf16.mxu0 0
    %1072 = vmatpush1.bf16.msra.mxu0 %v1069
    %1073 = vmatprep.subr.bf16.mxu0 0
    %1074 = vmatpush1.bf16.msra.mxu0 0
    %1075 = vmatprep.subr.bf16.mxu0 0
    %1076 = vmatpush1.bf16.msra.mxu0 0
    %1077 = vmatprep.subr.bf16.mxu0 0
    %1078 = vmatpush1.bf16.msra.mxu0 0
    %1079 = vmatprep.subr.bf16.mxu0 0
    %1080 = vmatpush1.bf16.msra.mxu0 0
    %1081 = vmatprep.subr.bf16.mxu0 0
    %1082 = vmatpush1.bf16.msra.mxu0 0
    %1083 = vmatprep.subr.bf16.mxu0 0
    %1084 = vmatpush1.bf16.msra.mxu0 0
    %1085 = vmatprep.subr.bf16.mxu0 0
    %1086 = vmatpush1.bf16.msra.mxu0 0
    %1087 = vmatprep.subr.bf16.mxu0 0
    %1088 = vmatpush1.bf16.msra.mxu0 0
    %1089 = vmatprep.subr.bf16.mxu0 0
    %1090 = vmatpush1.bf16.msra.mxu0 0
    %1091 = vmatprep.subr.bf16.mxu0 0
    %1092 = vmatpush1.bf16.msra.mxu0 0
    %1093 = vmatprep.subr.bf16.mxu0 0
    %1094 = vmatpush1.bf16.msra.mxu0 0
    %1095 = vmatprep.subr.bf16.mxu0 0
    %1096 = vmatpush1.bf16.msra.mxu0 0
    %1097 = vmatprep.subr.bf16.mxu0 0
    %1098 = vmatpush1.bf16.msra.mxu0 0
    %1099 = vmatprep.subr.bf16.mxu0 0
    %1100 = vmatpush1.bf16.msra.mxu0 0
    %1101 = vmatprep.subr.bf16.mxu0 0
    %1102 = vmatpush1.bf16.msra.mxu0 0
    %1103 = vmatprep.mubr.bf16.mxu0 0
    %1104 = vmatmul.mubr.bf16.gmra.mrb[0].mxu0 %v1066
    %v1105 = vpop.f32.mrb[0].mxu0
    %v1106 = vadd.f32 0.0, %v1105
    %v1107 = vpop.f32.mrb[0].mxu0
    %v1108 = vpop.f32.mrb[0].mxu0
    %v1109 = vpop.f32.mrb[0].mxu0
    %1110 = vdwg.mxu0
    %1111 = vrot.lane.b32.xlu0 %v767, 56
    %v1112 = vpop.permute.xlu0 %1111
    %v1114 = vsel %vm643, %v1062, 0
    %v1117 = vsel %vm774, %v1112, 0
    %1119 = vmatprep.subr.bf16.mxu0 0
    %1120 = vmatpush1.bf16.msra.mxu0 %v1117
    %1121 = vmatprep.subr.bf16.mxu0 0
    %1122 = vmatpush1.bf16.msra.mxu0 0
    %1123 = vmatprep.subr.bf16.mxu0 0
    %1124 = vmatpush1.bf16.msra.mxu0 0
    %1125 = vmatprep.subr.bf16.mxu0 0
    %1126 = vmatpush1.bf16.msra.mxu0 0
    %1127 = vmatprep.subr.bf16.mxu0 0
    %1128 = vmatpush1.bf16.msra.mxu0 0
    %1129 = vmatprep.subr.bf16.mxu0 0
    %1130 = vmatpush1.bf16.msra.mxu0 0
    %1131 = vmatprep.subr.bf16.mxu0 0
    %1132 = vmatpush1.bf16.msra.mxu0 0
    %1133 = vmatprep.subr.bf16.mxu0 0
    %1134 = vmatpush1.bf16.msra.mxu0 0
    %1135 = vmatprep.subr.bf16.mxu0 0
    %1136 = vmatpush1.bf16.msra.mxu0 0
    %1137 = vmatprep.subr.bf16.mxu0 0
    %1138 = vmatpush1.bf16.msra.mxu0 0
    %1139 = vmatprep.subr.bf16.mxu0 0
    %1140 = vmatpush1.bf16.msra.mxu0 0
    %1141 = vmatprep.subr.bf16.mxu0 0
    %1142 = vmatpush1.bf16.msra.mxu0 0
    %1143 = vmatprep.subr.bf16.mxu0 0
    %1144 = vmatpush1.bf16.msra.mxu0 0
    %1145 = vmatprep.subr.bf16.mxu0 0
    %1146 = vmatpush1.bf16.msra.mxu0 0
    %1147 = vmatprep.subr.bf16.mxu0 0
    %1148 = vmatpush1.bf16.msra.mxu0 0
    %1149 = vmatprep.subr.bf16.mxu0 0
    %1150 = vmatpush1.bf16.msra.mxu0 0
    %1151 = vmatprep.mubr.bf16.mxu0 0
    %1152 = vmatmul.mubr.bf16.gmra.mrb[0].mxu0 %v1114
    %v1153 = vpop.f32.mrb[0].mxu0
    %v1154 = vadd.f32 0.0, %v1153
    %v1155 = vpop.f32.mrb[0].mxu0
    %v1156 = vpop.f32.mrb[0].mxu0
    %v1157 = vpop.f32.mrb[0].mxu0
    %1158 = vdwg.mxu0
    %1159 = vrot.lane.b32.xlu0 %v575, 16
    %v1160 = vpop.permute.xlu0 %1159
    %v1162 = vmul.f32 %v569, %v1160
    %v1163 = vmul.f32 %v572, %v1160
    %1164 = vrot.lane.b32.xlu0 %v579, 108
    %v1165 = vpop.permute.xlu0 %1164
    %1166 = vrot.lane.b32.xlu0 %v580, 108
    %v1167 = vpop.permute.xlu0 %1166
    %1170 = vrot.lane.b32.xlu0 %v569, 116
    %v1171 = vpop.permute.xlu0 %1170
    %1172 = vrot.lane.b32.xlu0 %v572, 116
    %v1173 = vpop.permute.xlu0 %1172
    %v1176 = vsel %vm597, %v1165, %v1171
    %v1177 = vsel %vm597, %v1167, %v1173
    %v1178 = vmul.f32 %v1176, %v576
    %v1179 = vmul.f32 %v1177, %v576
    %1182 = vrot.lane.b32.xlu0 %v1178, 16
    %v1183 = vpop.permute.xlu0 %1182
    %1184 = vrot.lane.b32.xlu0 %v1179, 16
    %v1185 = vpop.permute.xlu0 %1184
    %v1188 = vadd.f32 %v1162, %v1183
    %v1189 = vadd.f32 %v1163, %v1185
    %1190 = vrot.lane.b32.xlu0 %v575, 48
    %v1191 = vpop.permute.xlu0 %1190
    %v1193 = vmul.f32 %v569, %v1191
    %v1194 = vmul.f32 %v572, %v1191
    %1195 = vrot.lane.b32.xlu0 %v579, 76
    %v1196 = vpop.permute.xlu0 %1195
    %1197 = vrot.lane.b32.xlu0 %v580, 76
    %v1198 = vpop.permute.xlu0 %1197
    %1201 = vrot.lane.b32.xlu0 %v569, 84
    %v1202 = vpop.permute.xlu0 %1201
    %1203 = vrot.lane.b32.xlu0 %v572, 84
    %v1204 = vpop.permute.xlu0 %1203
    %v1207 = vsel %vm597, %v1196, %v1202
    %v1208 = vsel %vm597, %v1198, %v1204
    %v1209 = vmul.f32 %v1207, %v576
    %v1210 = vmul.f32 %v1208, %v576
    %1213 = vrot.lane.b32.xlu0 %v1209, 48
    %v1214 = vpop.permute.xlu0 %1213
    %1215 = vrot.lane.b32.xlu0 %v1210, 48
    %v1216 = vpop.permute.xlu0 %1215
    %v1219 = vadd.f32 %v1193, %v1214
    %v1220 = vadd.f32 %v1194, %v1216
    %v1221 = vpack.c.bf16 %v1188, %v1188
    %v1222 = vpack.c.bf16 %v1189, %v1189
    %v1223 = vpack.c.bf16 %v1219, %v1219
    %v1224 = vpack.c.bf16 %v1220, %v1220
    %1226 = vrot.lane.b32.xlu0 %v1221, 112
    %v1227 = vpop.permute.xlu0 %1226
    %1229 = vrot.lane.b32.xlu0 %v1223, 80
    %v1230 = vpop.permute.xlu0 %1229
    %v1232 = vsel %vm643, %v1227, 0
    %v1235 = vsel %vm643, %v1230, 0
    %1237 = vmatprep.subr.bf16.mxu0 0
    %1238 = vmatpush1.bf16.xpose.msra.mxu0 %v1235
    %1239 = vmatprep.subr.bf16.mxu0 0
    %1240 = vmatpush1.bf16.xpose.msra.mxu0 0
    %1241 = vmatprep.subr.bf16.mxu0 0
    %1242 = vmatpush1.bf16.xpose.msra.mxu0 0
    %1243 = vmatprep.subr.bf16.mxu0 0
    %1244 = vmatpush1.bf16.xpose.msra.mxu0 0
    %1245 = vmatprep.subr.bf16.mxu0 0
    %1246 = vmatpush1.bf16.xpose.msra.mxu0 0
    %1247 = vmatprep.subr.bf16.mxu0 0
    %1248 = vmatpush1.bf16.xpose.msra.mxu0 0
    %1249 = vmatprep.subr.bf16.mxu0 0
    %1250 = vmatpush1.bf16.xpose.msra.mxu0 0
    %1251 = vmatprep.subr.bf16.mxu0 0
    %1252 = vmatpush1.bf16.xpose.msra.mxu0 0
    %1253 = vmatprep.subr.bf16.mxu0 0
    %1254 = vmatpush1.bf16.xpose.msra.mxu0 0
    %1255 = vmatprep.subr.bf16.mxu0 0
    %1256 = vmatpush1.bf16.xpose.msra.mxu0 0
    %1257 = vmatprep.subr.bf16.mxu0 0
    %1258 = vmatpush1.bf16.xpose.msra.mxu0 0
    %1259 = vmatprep.subr.bf16.mxu0 0
    %1260 = vmatpush1.bf16.xpose.msra.mxu0 0
    %1261 = vmatprep.subr.bf16.mxu0 0
    %1262 = vmatpush1.bf16.xpose.msra.mxu0 0
    %1263 = vmatprep.subr.bf16.mxu0 0
    %1264 = vmatpush1.bf16.xpose.msra.mxu0 0
    %1265 = vmatprep.subr.bf16.mxu0 0
    %1266 = vmatpush1.bf16.xpose.msra.mxu0 0
    %1267 = vmatprep.subr.bf16.mxu0 0
    %1268 = vmatpush1.bf16.xpose.msra.mxu0 0
    %1269 = vmatprep.mubr.bf16.mxu0 0
    %1270 = vmatmul.mubr.bf16.gmra.mrb[0].mxu0 %v1232
    %v1271 = vpop.f32.mrb[0].mxu0
    %v1272 = vadd.f32 0.0, %v1271
    %v1273 = vpop.f32.mrb[0].mxu0
    %v1274 = vpop.f32.mrb[0].mxu0
    %v1275 = vpop.f32.mrb[0].mxu0
    %1276 = vdwg.mxu0
    %1278 = vrot.lane.b32.xlu0 %v1222, 112
    %v1279 = vpop.permute.xlu0 %1278
    %1281 = vrot.lane.b32.xlu0 %v1224, 80
    %v1282 = vpop.permute.xlu0 %1281
    %v1284 = vsel %vm643, %v1279, 0
    %v1287 = vsel %vm643, %v1282, 0
    %1289 = vmatprep.subr.bf16.mxu0 0
    %1290 = vmatpush1.bf16.xpose.msra.mxu0 %v1287
    %1291 = vmatprep.subr.bf16.mxu0 0
    %1292 = vmatpush1.bf16.xpose.msra.mxu0 0
    %1293 = vmatprep.subr.bf16.mxu0 0
    %1294 = vmatpush1.bf16.xpose.msra.mxu0 0
    %1295 = vmatprep.subr.bf16.mxu0 0
    %1296 = vmatpush1.bf16.xpose.msra.mxu0 0
    %1297 = vmatprep.subr.bf16.mxu0 0
    %1298 = vmatpush1.bf16.xpose.msra.mxu0 0
    %1299 = vmatprep.subr.bf16.mxu0 0
    %1300 = vmatpush1.bf16.xpose.msra.mxu0 0
    %1301 = vmatprep.subr.bf16.mxu0 0
    %1302 = vmatpush1.bf16.xpose.msra.mxu0 0
    %1303 = vmatprep.subr.bf16.mxu0 0
    %1304 = vmatpush1.bf16.xpose.msra.mxu0 0
    %1305 = vmatprep.subr.bf16.mxu0 0
    %1306 = vmatpush1.bf16.xpose.msra.mxu0 0
    %1307 = vmatprep.subr.bf16.mxu0 0
    %1308 = vmatpush1.bf16.xpose.msra.mxu0 0
    %1309 = vmatprep.subr.bf16.mxu0 0
    %1310 = vmatpush1.bf16.xpose.msra.mxu0 0
    %1311 = vmatprep.subr.bf16.mxu0 0
    %1312 = vmatpush1.bf16.xpose.msra.mxu0 0
    %1313 = vmatprep.subr.bf16.mxu0 0
    %1314 = vmatpush1.bf16.xpose.msra.mxu0 0
    %1315 = vmatprep.subr.bf16.mxu0 0
    %1316 = vmatpush1.bf16.xpose.msra.mxu0 0
    %1317 = vmatprep.subr.bf16.mxu0 0
    %1318 = vmatpush1.bf16.xpose.msra.mxu0 0
    %1319 = vmatprep.subr.bf16.mxu0 0
    %1320 = vmatpush1.bf16.xpose.msra.mxu0 0
    %1321 = vmatprep.mubr.bf16.mxu0 0
    %1322 = vmatmul.mubr.bf16.gmra.mrb[0].mxu0 %v1284
    %v1323 = vpop.f32.mrb[0].mxu0
    %v1324 = vadd.f32 0.0, %v1323
    %v1325 = vpop.f32.mrb[0].mxu0
    %v1326 = vpop.f32.mrb[0].mxu0
    %v1327 = vpop.f32.mrb[0].mxu0
    %1328 = vdwg.mxu0
    %v1329 = vmul.f32 %v1272, %v739
    %v1330 = vmul.f32 %v1324, %v739
    %v1331 = vsel %vm643, %v1329, -inf
    %1332 = vmax.xlane.f32.xlu0 %v1331
    %v1333 = vpop.xlane.xlu0 %1332
    %v1334 = vsel %vm643, %v1330, -inf
    %1335 = vmax.xlane.f32.xlu0 %v1334
    %v1336 = vpop.xlane.xlu0 %1335
    %v1337 = vsub.f32 %v1329, %v1333
    %v1338 = vsub.f32 %v1330, %v1336
    %v1339 = vmul.f32 %v1337, 1.442695
    %v1340 = vpow.pop %v1339
    %v1341 = vmul.f32 %v1338, 1.442695
    %v1342 = vpow.pop %v1341
    %v1343 = vsel %vm643, %v1340, 0.0
    %1344 = vadd.xlane.f32.xlu0 %v1343
    %v1345 = vpop.xlane.xlu0 %1344
    %v1346 = vsel %vm643, %v1342, 0.0
    %1347 = vadd.xlane.f32.xlu0 %v1346
    %v1348 = vpop.xlane.xlu0 %1347
    %v1349 = vrcp.pop %v1345
    %v1350 = vrcp.pop %v1348
    %v1351 = vmul.f32 %v1340, %v1349
    %v1352 = vmul.f32 %v1342, %v1350
    %v1353 = vpack.c.bf16 %v1351, %v1351
    %v1354 = vpack.c.bf16 %v1352, %v1352
    %1355 = vrot.lane.b32.xlu0 %v766, 48
    %v1356 = vpop.permute.xlu0 %1355
    %v1358 = vsel %vm643, %v1353, 0
    %v1361 = vsel %vm774, %v1356, 0
    %1363 = vmatprep.subr.bf16.mxu0 0
    %1364 = vmatpush1.bf16.msra.mxu0 %v1361
    %1365 = vmatprep.subr.bf16.mxu0 0
    %1366 = vmatpush1.bf16.msra.mxu0 0
    %1367 = vmatprep.subr.bf16.mxu0 0
    %1368 = vmatpush1.bf16.msra.mxu0 0
    %1369 = vmatprep.subr.bf16.mxu0 0
    %1370 = vmatpush1.bf16.msra.mxu0 0
    %1371 = vmatprep.subr.bf16.mxu0 0
    %1372 = vmatpush1.bf16.msra.mxu0 0
    %1373 = vmatprep.subr.bf16.mxu0 0
    %1374 = vmatpush1.bf16.msra.mxu0 0
    %1375 = vmatprep.subr.bf16.mxu0 0
    %1376 = vmatpush1.bf16.msra.mxu0 0
    %1377 = vmatprep.subr.bf16.mxu0 0
    %1378 = vmatpush1.bf16.msra.mxu0 0
    %1379 = vmatprep.subr.bf16.mxu0 0
    %1380 = vmatpush1.bf16.msra.mxu0 0
    %1381 = vmatprep.subr.bf16.mxu0 0
    %1382 = vmatpush1.bf16.msra.mxu0 0
    %1383 = vmatprep.subr.bf16.mxu0 0
    %1384 = vmatpush1.bf16.msra.mxu0 0
    %1385 = vmatprep.subr.bf16.mxu0 0
    %1386 = vmatpush1.bf16.msra.mxu0 0
    %1387 = vmatprep.subr.bf16.mxu0 0
    %1388 = vmatpush1.bf16.msra.mxu0 0
    %1389 = vmatprep.subr.bf16.mxu0 0
    %1390 = vmatpush1.bf16.msra.mxu0 0
    %1391 = vmatprep.subr.bf16.mxu0 0
    %1392 = vmatpush1.bf16.msra.mxu0 0
    %1393 = vmatprep.subr.bf16.mxu0 0
    %1394 = vmatpush1.bf16.msra.mxu0 0
    %1395 = vmatprep.mubr.bf16.mxu0 0
    %1396 = vmatmul.mubr.bf16.gmra.mrb[0].mxu0 %v1358
    %v1397 = vpop.f32.mrb[0].mxu0
    %v1398 = vadd.f32 0.0, %v1397
    %v1399 = vpop.f32.mrb[0].mxu0
    %v1400 = vpop.f32.mrb[0].mxu0
    %v1401 = vpop.f32.mrb[0].mxu0
    %1402 = vdwg.mxu0
    %1403 = vrot.lane.b32.xlu0 %v767, 48
    %v1404 = vpop.permute.xlu0 %1403
    %v1406 = vsel %vm643, %v1354, 0
    %v1409 = vsel %vm774, %v1404, 0
    %1411 = vmatprep.subr.bf16.mxu0 0
    %1412 = vmatpush1.bf16.msra.mxu0 %v1409
    %1413 = vmatprep.subr.bf16.mxu0 0
    %1414 = vmatpush1.bf16.msra.mxu0 0
    %1415 = vmatprep.subr.bf16.mxu0 0
    %1416 = vmatpush1.bf16.msra.mxu0 0
    %1417 = vmatprep.subr.bf16.mxu0 0
    %1418 = vmatpush1.bf16.msra.mxu0 0
    %1419 = vmatprep.subr.bf16.mxu0 0
    %1420 = vmatpush1.bf16.msra.mxu0 0
    %1421 = vmatprep.subr.bf16.mxu0 0
    %1422 = vmatpush1.bf16.msra.mxu0 0
    %1423 = vmatprep.subr.bf16.mxu0 0
    %1424 = vmatpush1.bf16.msra.mxu0 0
    %1425 = vmatprep.subr.bf16.mxu0 0
    %1426 = vmatpush1.bf16.msra.mxu0 0
    %1427 = vmatprep.subr.bf16.mxu0 0
    %1428 = vmatpush1.bf16.msra.mxu0 0
    %1429 = vmatprep.subr.bf16.mxu0 0
    %1430 = vmatpush1.bf16.msra.mxu0 0
    %1431 = vmatprep.subr.bf16.mxu0 0
    %1432 = vmatpush1.bf16.msra.mxu0 0
    %1433 = vmatprep.subr.bf16.mxu0 0
    %1434 = vmatpush1.bf16.msra.mxu0 0
    %1435 = vmatprep.subr.bf16.mxu0 0
    %1436 = vmatpush1.bf16.msra.mxu0 0
    %1437 = vmatprep.subr.bf16.mxu0 0
    %1438 = vmatpush1.bf16.msra.mxu0 0
    %1439 = vmatprep.subr.bf16.mxu0 0
    %1440 = vmatpush1.bf16.msra.mxu0 0
    %1441 = vmatprep.subr.bf16.mxu0 0
    %1442 = vmatpush1.bf16.msra.mxu0 0
    %1443 = vmatprep.mubr.bf16.mxu0 0
    %1444 = vmatmul.mubr.bf16.gmra.mrb[0].mxu0 %v1406
    %v1445 = vpop.f32.mrb[0].mxu0
    %v1446 = vadd.f32 0.0, %v1445
    %v1447 = vpop.f32.mrb[0].mxu0
    %v1448 = vpop.f32.mrb[0].mxu0
    %v1449 = vpop.f32.mrb[0].mxu0
    %1450 = vdwg.mxu0
    %1451 = vrot.lane.b32.xlu0 %v575, 24
    %v1452 = vpop.permute.xlu0 %1451
    %v1454 = vmul.f32 %v569, %v1452
    %v1455 = vmul.f32 %v572, %v1452
    %1456 = vrot.lane.b32.xlu0 %v579, 100
    %v1457 = vpop.permute.xlu0 %1456
    %1458 = vrot.lane.b32.xlu0 %v580, 100
    %v1459 = vpop.permute.xlu0 %1458
    %1462 = vrot.lane.b32.xlu0 %v569, 108
    %v1463 = vpop.permute.xlu0 %1462
    %1464 = vrot.lane.b32.xlu0 %v572, 108
    %v1465 = vpop.permute.xlu0 %1464
    %v1468 = vsel %vm597, %v1457, %v1463
    %v1469 = vsel %vm597, %v1459, %v1465
    %v1470 = vmul.f32 %v1468, %v576
    %v1471 = vmul.f32 %v1469, %v576
    %1474 = vrot.lane.b32.xlu0 %v1470, 24
    %v1475 = vpop.permute.xlu0 %1474
    %1476 = vrot.lane.b32.xlu0 %v1471, 24
    %v1477 = vpop.permute.xlu0 %1476
    %v1480 = vadd.f32 %v1454, %v1475
    %v1481 = vadd.f32 %v1455, %v1477
    %1482 = vrot.lane.b32.xlu0 %v575, 56
    %v1483 = vpop.permute.xlu0 %1482
    %v1485 = vmul.f32 %v569, %v1483
    %v1486 = vmul.f32 %v572, %v1483
    %1487 = vrot.lane.b32.xlu0 %v579, 68
    %v1488 = vpop.permute.xlu0 %1487
    %1489 = vrot.lane.b32.xlu0 %v580, 68
    %v1490 = vpop.permute.xlu0 %1489
    %1493 = vrot.lane.b32.xlu0 %v569, 76
    %v1494 = vpop.permute.xlu0 %1493
    %1495 = vrot.lane.b32.xlu0 %v572, 76
    %v1496 = vpop.permute.xlu0 %1495
    %v1499 = vsel %vm597, %v1488, %v1494
    %v1500 = vsel %vm597, %v1490, %v1496
    %v1501 = vmul.f32 %v1499, %v576
    %v1502 = vmul.f32 %v1500, %v576
    %1505 = vrot.lane.b32.xlu0 %v1501, 56
    %v1506 = vpop.permute.xlu0 %1505
    %1507 = vrot.lane.b32.xlu0 %v1502, 56
    %v1508 = vpop.permute.xlu0 %1507
    %v1511 = vadd.f32 %v1485, %v1506
    %v1512 = vadd.f32 %v1486, %v1508
    %v1513 = vpack.c.bf16 %v1480, %v1480
    %v1514 = vpack.c.bf16 %v1481, %v1481
    %v1515 = vpack.c.bf16 %v1511, %v1511
    %v1516 = vpack.c.bf16 %v1512, %v1512
    %1518 = vrot.lane.b32.xlu0 %v1513, 104
    %v1519 = vpop.permute.xlu0 %1518
    %1521 = vrot.lane.b32.xlu0 %v1515, 72
    %v1522 = vpop.permute.xlu0 %1521
    %v1524 = vsel %vm643, %v1519, 0
    %v1527 = vsel %vm643, %v1522, 0
    %1529 = vmatprep.subr.bf16.mxu0 0
    %1530 = vmatpush1.bf16.xpose.msra.mxu0 %v1527
    %1531 = vmatprep.subr.bf16.mxu0 0
    %1532 = vmatpush1.bf16.xpose.msra.mxu0 0
    %1533 = vmatprep.subr.bf16.mxu0 0
    %1534 = vmatpush1.bf16.xpose.msra.mxu0 0
    %1535 = vmatprep.subr.bf16.mxu0 0
    %1536 = vmatpush1.bf16.xpose.msra.mxu0 0
    %1537 = vmatprep.subr.bf16.mxu0 0
    %1538 = vmatpush1.bf16.xpose.msra.mxu0 0
    %1539 = vmatprep.subr.bf16.mxu0 0
    %1540 = vmatpush1.bf16.xpose.msra.mxu0 0
    %1541 = vmatprep.subr.bf16.mxu0 0
    %1542 = vmatpush1.bf16.xpose.msra.mxu0 0
    %1543 = vmatprep.subr.bf16.mxu0 0
    %1544 = vmatpush1.bf16.xpose.msra.mxu0 0
    %1545 = vmatprep.subr.bf16.mxu0 0
    %1546 = vmatpush1.bf16.xpose.msra.mxu0 0
    %1547 = vmatprep.subr.bf16.mxu0 0
    %1548 = vmatpush1.bf16.xpose.msra.mxu0 0
    %1549 = vmatprep.subr.bf16.mxu0 0
    %1550 = vmatpush1.bf16.xpose.msra.mxu0 0
    %1551 = vmatprep.subr.bf16.mxu0 0
    %1552 = vmatpush1.bf16.xpose.msra.mxu0 0
    %1553 = vmatprep.subr.bf16.mxu0 0
    %1554 = vmatpush1.bf16.xpose.msra.mxu0 0
    %1555 = vmatprep.subr.bf16.mxu0 0
    %1556 = vmatpush1.bf16.xpose.msra.mxu0 0
    %1557 = vmatprep.subr.bf16.mxu0 0
    %1558 = vmatpush1.bf16.xpose.msra.mxu0 0
    %1559 = vmatprep.subr.bf16.mxu0 0
    %1560 = vmatpush1.bf16.xpose.msra.mxu0 0
    %1561 = vmatprep.mubr.bf16.mxu0 0
    %1562 = vmatmul.mubr.bf16.gmra.mrb[0].mxu0 %v1524
    %v1563 = vpop.f32.mrb[0].mxu0
    %v1564 = vadd.f32 0.0, %v1563
    %v1565 = vpop.f32.mrb[0].mxu0
    %v1566 = vpop.f32.mrb[0].mxu0
    %v1567 = vpop.f32.mrb[0].mxu0
    %1568 = vdwg.mxu0
    %1570 = vrot.lane.b32.xlu0 %v1514, 104
    %v1571 = vpop.permute.xlu0 %1570
    %1573 = vrot.lane.b32.xlu0 %v1516, 72
    %v1574 = vpop.permute.xlu0 %1573
    %v1576 = vsel %vm643, %v1571, 0
    %v1579 = vsel %vm643, %v1574, 0
    %1581 = vmatprep.subr.bf16.mxu0 0
    %1582 = vmatpush1.bf16.xpose.msra.mxu0 %v1579
    %1583 = vmatprep.subr.bf16.mxu0 0
    %1584 = vmatpush1.bf16.xpose.msra.mxu0 0
    %1585 = vmatprep.subr.bf16.mxu0 0
    %1586 = vmatpush1.bf16.xpose.msra.mxu0 0
    %1587 = vmatprep.subr.bf16.mxu0 0
    %1588 = vmatpush1.bf16.xpose.msra.mxu0 0
    %1589 = vmatprep.subr.bf16.mxu0 0
    %1590 = vmatpush1.bf16.xpose.msra.mxu0 0
    %1591 = vmatprep.subr.bf16.mxu0 0
    %1592 = vmatpush1.bf16.xpose.msra.mxu0 0
    %1593 = vmatprep.subr.bf16.mxu0 0
    %1594 = vmatpush1.bf16.xpose.msra.mxu0 0
    %1595 = vmatprep.subr.bf16.mxu0 0
    %1596 = vmatpush1.bf16.xpose.msra.mxu0 0
    %1597 = vmatprep.subr.bf16.mxu0 0
    %1598 = vmatpush1.bf16.xpose.msra.mxu0 0
    %1599 = vmatprep.subr.bf16.mxu0 0
    %1600 = vmatpush1.bf16.xpose.msra.mxu0 0
    %1601 = vmatprep.subr.bf16.mxu0 0
    %1602 = vmatpush1.bf16.xpose.msra.mxu0 0
    %1603 = vmatprep.subr.bf16.mxu0 0
    %1604 = vmatpush1.bf16.xpose.msra.mxu0 0
    %1605 = vmatprep.subr.bf16.mxu0 0
    %1606 = vmatpush1.bf16.xpose.msra.mxu0 0
    %1607 = vmatprep.subr.bf16.mxu0 0
    %1608 = vmatpush1.bf16.xpose.msra.mxu0 0
    %1609 = vmatprep.subr.bf16.mxu0 0
    %1610 = vmatpush1.bf16.xpose.msra.mxu0 0
    %1611 = vmatprep.subr.bf16.mxu0 0
    %1612 = vmatpush1.bf16.xpose.msra.mxu0 0
    %1613 = vmatprep.mubr.bf16.mxu0 0
    %1614 = vmatmul.mubr.bf16.gmra.mrb[0].mxu0 %v1576
    %v1615 = vpop.f32.mrb[0].mxu0
    %v1616 = vadd.f32 0.0, %v1615
    %v1617 = vpop.f32.mrb[0].mxu0
    %v1618 = vpop.f32.mrb[0].mxu0
    %v1619 = vpop.f32.mrb[0].mxu0
    %1620 = vdwg.mxu0
    %v1621 = vmul.f32 %v1564, %v739
    %v1622 = vmul.f32 %v1616, %v739
    %v1623 = vsel %vm643, %v1621, -inf
    %1624 = vmax.xlane.f32.xlu0 %v1623
    %v1625 = vpop.xlane.xlu0 %1624
    %v1626 = vsel %vm643, %v1622, -inf
    %1627 = vmax.xlane.f32.xlu0 %v1626
    %v1628 = vpop.xlane.xlu0 %1627
    %v1629 = vsub.f32 %v1621, %v1625
    %v1630 = vsub.f32 %v1622, %v1628
    %v1631 = vmul.f32 %v1629, 1.442695
    %v1632 = vpow.pop %v1631
    %v1633 = vmul.f32 %v1630, 1.442695
    %v1634 = vpow.pop %v1633
    %v1635 = vsel %vm643, %v1632, 0.0
    %1636 = vadd.xlane.f32.xlu0 %v1635
    %v1637 = vpop.xlane.xlu0 %1636
    %v1638 = vsel %vm643, %v1634, 0.0
    %1639 = vadd.xlane.f32.xlu0 %v1638
    %v1640 = vpop.xlane.xlu0 %1639
    %v1641 = vrcp.pop %v1637
    %v1642 = vrcp.pop %v1640
    %v1643 = vmul.f32 %v1632, %v1641
    %v1644 = vmul.f32 %v1634, %v1642
    %v1645 = vpack.c.bf16 %v1643, %v1643
    %v1646 = vpack.c.bf16 %v1644, %v1644
    %1647 = vrot.lane.b32.xlu0 %v766, 40
    %v1648 = vpop.permute.xlu0 %1647
    %v1650 = vsel %vm643, %v1645, 0
    %v1653 = vsel %vm774, %v1648, 0
    %1655 = vmatprep.subr.bf16.mxu0 0
    %1656 = vmatpush1.bf16.msra.mxu0 %v1653
    %1657 = vmatprep.subr.bf16.mxu0 0
    %1658 = vmatpush1.bf16.msra.mxu0 0
    %1659 = vmatprep.subr.bf16.mxu0 0
    %1660 = vmatpush1.bf16.msra.mxu0 0
    %1661 = vmatprep.subr.bf16.mxu0 0
    %1662 = vmatpush1.bf16.msra.mxu0 0
    %1663 = vmatprep.subr.bf16.mxu0 0
    %1664 = vmatpush1.bf16.msra.mxu0 0
    %1665 = vmatprep.subr.bf16.mxu0 0
    %1666 = vmatpush1.bf16.msra.mxu0 0
    %1667 = vmatprep.subr.bf16.mxu0 0
    %1668 = vmatpush1.bf16.msra.mxu0 0
    %1669 = vmatprep.subr.bf16.mxu0 0
    %1670 = vmatpush1.bf16.msra.mxu0 0
    %1671 = vmatprep.subr.bf16.mxu0 0
    %1672 = vmatpush1.bf16.msra.mxu0 0
    %1673 = vmatprep.subr.bf16.mxu0 0
    %1674 = vmatpush1.bf16.msra.mxu0 0
    %1675 = vmatprep.subr.bf16.mxu0 0
    %1676 = vmatpush1.bf16.msra.mxu0 0
    %1677 = vmatprep.subr.bf16.mxu0 0
    %1678 = vmatpush1.bf16.msra.mxu0 0
    %1679 = vmatprep.subr.bf16.mxu0 0
    %1680 = vmatpush1.bf16.msra.mxu0 0
    %1681 = vmatprep.subr.bf16.mxu0 0
    %1682 = vmatpush1.bf16.msra.mxu0 0
    %1683 = vmatprep.subr.bf16.mxu0 0
    %1684 = vmatpush1.bf16.msra.mxu0 0
    %1685 = vmatprep.subr.bf16.mxu0 0
    %1686 = vmatpush1.bf16.msra.mxu0 0
    %1687 = vmatprep.mubr.bf16.mxu0 0
    %1688 = vmatmul.mubr.bf16.gmra.mrb[0].mxu0 %v1650
    %v1689 = vpop.f32.mrb[0].mxu0
    %v1690 = vadd.f32 0.0, %v1689
    %v1691 = vpop.f32.mrb[0].mxu0
    %v1692 = vpop.f32.mrb[0].mxu0
    %v1693 = vpop.f32.mrb[0].mxu0
    %1694 = vdwg.mxu0
    %1695 = vrot.lane.b32.xlu0 %v767, 40
    %v1696 = vpop.permute.xlu0 %1695
    %v1698 = vsel %vm643, %v1646, 0
    %v1701 = vsel %vm774, %v1696, 0
    %1703 = vmatprep.subr.bf16.mxu0 0
    %1704 = vmatpush1.bf16.msra.mxu0 %v1701
    %1705 = vmatprep.subr.bf16.mxu0 0
    %1706 = vmatpush1.bf16.msra.mxu0 0
    %1707 = vmatprep.subr.bf16.mxu0 0
    %1708 = vmatpush1.bf16.msra.mxu0 0
    %1709 = vmatprep.subr.bf16.mxu0 0
    %1710 = vmatpush1.bf16.msra.mxu0 0
    %1711 = vmatprep.subr.bf16.mxu0 0
    %1712 = vmatpush1.bf16.msra.mxu0 0
    %1713 = vmatprep.subr.bf16.mxu0 0
    %1714 = vmatpush1.bf16.msra.mxu0 0
    %1715 = vmatprep.subr.bf16.mxu0 0
    %1716 = vmatpush1.bf16.msra.mxu0 0
    %1717 = vmatprep.subr.bf16.mxu0 0
    %1718 = vmatpush1.bf16.msra.mxu0 0
    %1719 = vmatprep.subr.bf16.mxu0 0
    %1720 = vmatpush1.bf16.msra.mxu0 0
    %1721 = vmatprep.subr.bf16.mxu0 0
    %1722 = vmatpush1.bf16.msra.mxu0 0
    %1723 = vmatprep.subr.bf16.mxu0 0
    %1724 = vmatpush1.bf16.msra.mxu0 0
    %1725 = vmatprep.subr.bf16.mxu0 0
    %1726 = vmatpush1.bf16.msra.mxu0 0
    %1727 = vmatprep.subr.bf16.mxu0 0
    %1728 = vmatpush1.bf16.msra.mxu0 0
    %1729 = vmatprep.subr.bf16.mxu0 0
    %1730 = vmatpush1.bf16.msra.mxu0 0
    %1731 = vmatprep.subr.bf16.mxu0 0
    %1732 = vmatpush1.bf16.msra.mxu0 0
    %1733 = vmatprep.subr.bf16.mxu0 0
    %1734 = vmatpush1.bf16.msra.mxu0 0
    %1735 = vmatprep.mubr.bf16.mxu0 0
    %1736 = vmatmul.mubr.bf16.gmra.mrb[0].mxu0 %v1698
    %v1737 = vpop.f32.mrb[0].mxu0
    %v1738 = vadd.f32 0.0, %v1737
    %v1739 = vpop.f32.mrb[0].mxu0
    %v1740 = vpop.f32.mrb[0].mxu0
    %v1741 = vpop.f32.mrb[0].mxu0
    %1742 = vdwg.mxu0
    %1745 = vrot.lane.b32.xlu0 %v1059, 8
    %v1746 = vpop.permute.xlu0 %1745
    %1747 = vrot.lane.b32.xlu0 %v1060, 8
    %v1748 = vpop.permute.xlu0 %1747
    %1753 = vrot.lane.b32.xlu0 %v1351, 16
    %v1754 = vpop.permute.xlu0 %1753
    %1755 = vrot.lane.b32.xlu0 %v1352, 16
    %v1756 = vpop.permute.xlu0 %1755
    %1761 = vrot.lane.b32.xlu0 %v1643, 24
    %v1762 = vpop.permute.xlu0 %1761
    %1763 = vrot.lane.b32.xlu0 %v1644, 24
    %v1764 = vpop.permute.xlu0 %1763
    %v1767 = vsel %vm643, %v762, %v1746
    %v1768 = vsel %vm643, %v763, %v1748
    %vm1769 = vcmask 130048
    %v1770 = vsel %vm1769, %v1767, %v1754
    %v1771 = vsel %vm1769, %v1768, %v1756
    %vm1772 = vcmask 195584
    %v1773 = vsel %vm1772, %v1770, %v1762
    %v1774 = vsel %vm1772, %v1771, %v1764
    %1775 = vst.msk [vmem:[#allocation20] sm:$0xff] %vm248, %v1773
    %1776 = vst.msk [vmem:[#allocation20 + $0x8] sm:$0xff] %vm248, %v1774
    %1779 = vrot.lane.b32.xlu0 %v1106, 8
    %v1780 = vpop.permute.xlu0 %1779
    %1781 = vrot.lane.b32.xlu0 %v1154, 8
    %v1782 = vpop.permute.xlu0 %1781
    %1787 = vrot.lane.b32.xlu0 %v1398, 16
    %v1788 = vpop.permute.xlu0 %1787
    %1789 = vrot.lane.b32.xlu0 %v1446, 16
    %v1790 = vpop.permute.xlu0 %1789
    %1795 = vrot.lane.b32.xlu0 %v1690, 24
    %v1796 = vpop.permute.xlu0 %1795
    %1797 = vrot.lane.b32.xlu0 %v1738, 24
    %v1798 = vpop.permute.xlu0 %1797
    %v1801 = vsel %vm643, %v813, %v1780
    %v1802 = vsel %vm643, %v862, %v1782
    %v1803 = vsel %vm1769, %v1801, %v1788
    %v1804 = vsel %vm1769, %v1802, %v1790
    %v1805 = vsel %vm1772, %v1803, %v1796
    %v1806 = vsel %vm1772, %v1804, %v1798
    %v1807 = vpack.c.bf16 %v1806, %v1805
    %v1808 = vld [vmem:[%s27] sm:$0xf]
    %v1809 = vld [vmem:[%s27 + $0x4] sm:$0xf]
    %v1810 = vld [vmem:[%s27 + $0x8] sm:$0xf]
    %v1811 = vld [vmem:[%s27 + $0xc] sm:$0xf]
    %v1812 = vld [vmem:[#allocation17] sm:$0x1]
    %v1814 = vlaneseq
    %v1815 = vshrl.u32 %v1814, 7
    %v1816 = vsub.s32 0, %v1815
    %v1817 = vrot.slane %v1812, %v1816
    %v1823 = vunpack.c.l.b16 %v1808
    %v1824 = vunpack.c.l.b16 %v1809
    %v1825 = vunpack.c.l.b16 %v1810
    %v1826 = vunpack.c.l.b16 %v1811
    %v1827 = vpack.c.b16 %v1824, %v1823
    %v1828 = vpack.c.b16 %v1826, %v1825
    %v1832 = vsel %vm248, %v1807, 0
    %1834 = vmatprep.subr.bf16.mxu0 0
    %1835 = vmatpush1.bf16.msra.mxu0 %v1827
    %1836 = vmatprep.subr.bf16.mxu0 0
    %1837 = vmatpush1.bf16.msra.mxu0 %v1828
    %1838 = vmatprep.subr.bf16.mxu0 0
    %1839 = vmatpush1.bf16.msra.mxu0 0
    %1840 = vmatprep.subr.bf16.mxu0 0
    %1841 = vmatpush1.bf16.msra.mxu0 0
    %1842 = vmatprep.subr.bf16.mxu0 0
    %1843 = vmatpush1.bf16.msra.mxu0 0
    %1844 = vmatprep.subr.bf16.mxu0 0
    %1845 = vmatpush1.bf16.msra.mxu0 0
    %1846 = vmatprep.subr.bf16.mxu0 0
    %1847 = vmatpush1.bf16.msra.mxu0 0
    %1848 = vmatprep.subr.bf16.mxu0 0
    %1849 = vmatpush1.bf16.msra.mxu0 0
    %1850 = vmatprep.subr.bf16.mxu0 0
    %1851 = vmatpush1.bf16.msra.mxu0 0
    %1852 = vmatprep.subr.bf16.mxu0 0
    %1853 = vmatpush1.bf16.msra.mxu0 0
    %1854 = vmatprep.subr.bf16.mxu0 0
    %1855 = vmatpush1.bf16.msra.mxu0 0
    %1856 = vmatprep.subr.bf16.mxu0 0
    %1857 = vmatpush1.bf16.msra.mxu0 0
    %1858 = vmatprep.subr.bf16.mxu0 0
    %1859 = vmatpush1.bf16.msra.mxu0 0
    %1860 = vmatprep.subr.bf16.mxu0 0
    %1861 = vmatpush1.bf16.msra.mxu0 0
    %1862 = vmatprep.subr.bf16.mxu0 0
    %1863 = vmatpush1.bf16.msra.mxu0 0
    %1864 = vmatprep.subr.bf16.mxu0 0
    %1865 = vmatpush1.bf16.msra.mxu0 0
    %1866 = vmatprep.mubr.bf16.mxu0 0
    %1867 = vmatmul.mubr.bf16.gmra.mrb[0].mxu0 %v1832
    %v1868 = vpop.f32.mrb[0].mxu0
    %v1869 = vadd.f32 %v1817, %v1868
    %v1870 = vpop.f32.mrb[0].mxu0
    %v1871 = vpop.f32.mrb[0].mxu0
    %v1872 = vadd.f32 %v1817, %v1871
    %v1873 = vpop.f32.mrb[0].mxu0
    %1874 = vdwg.mxu0
    %v1875 = vadd.f32 %v1869, %v461
    %v1876 = vadd.f32 %v1872, %v462
    %v1877 = vld [vmem:[%s31] sm:$0x1]
    %v1878 = vld [vmem:[%s33] sm:$0x1]
    %v1879 = vsel %vm248, %v1875, 0.0
    %1880 = vadd.xlane.f32.xlu0 %v1879
    %v1881 = vpop.xlane.xlu0 %1880
    %v1882 = vsel %vm248, %v1876, 0.0
    %1883 = vadd.xlane.f32.xlu0 %v1882
    %v1884 = vpop.xlane.xlu0 %1883
    %v1885 = vmul.f32 %v1881, %v255
    %v1886 = vmul.f32 %v1884, %v255
    %v1887 = vsub.f32 %v1875, %v1885
    %v1888 = vsub.f32 %v1876, %v1886
    %v1889 = vmul.f32 %v1887, %v1887
    %v1890 = vmul.f32 %v1888, %v1888
    %v1891 = vsel %vm248, %v1889, 0.0
    %1892 = vadd.xlane.f32.xlu0 %v1891
    %v1893 = vpop.xlane.xlu0 %1892
    %v1894 = vsel %vm248, %v1890, 0.0
    %1895 = vadd.xlane.f32.xlu0 %v1894
    %v1896 = vpop.xlane.xlu0 %1895
    %v1897 = vmul.f32 %v1893, %v255
    %v1898 = vmul.f32 %v1896, %v255
    %v1899 = vadd.f32 %v1897, 1e-05
    %v1900 = vadd.f32 %v1898, 1e-05
    %v1901 = vrsqrt.pop %v1899
    %v1902 = vrsqrt.pop %v1900
    %v1903 = vmul.f32 %v1887, %v1901
    %v1904 = vmul.f32 %v1888, %v1902
    %v1906 = vlaneseq
    %v1907 = vshrl.u32 %v1906, 7
    %v1908 = vsub.s32 0, %v1907
    %v1909 = vrot.slane %v1877, %v1908
    %v1911 = vmul.f32 %v1903, %v1909
    %v1912 = vmul.f32 %v1904, %v1909
    %v1914 = vlaneseq
    %v1915 = vshrl.u32 %v1914, 7
    %v1916 = vsub.s32 0, %v1915
    %v1917 = vrot.slane %v1878, %v1916
    %v1919 = vadd.f32 %v1911, %v1917
    %v1920 = vadd.f32 %v1912, %v1917
    %v1921 = vpack.c.bf16 %v1920, %v1919
    %v1922 = vld [vmem:[%s35] sm:$0xf]
    %v1923 = vld [vmem:[%s35 + $0x4] sm:$0xf]
    %v1924 = vld [vmem:[%s35 + $0x8] sm:$0xf]
    %v1925 = vld [vmem:[%s35 + $0xc] sm:$0xf]
    %v1930 = vunpack.c.l.b16 %v1922
    %v1931 = vunpack.c.l.b16 %v1923
    %v1932 = vunpack.c.l.b16 %v1924
    %v1933 = vunpack.c.l.b16 %v1925
    %v1934 = vpack.c.b16 %v1931, %v1930
    %v1935 = vpack.c.b16 %v1933, %v1932
    %v1939 = vsel %vm248, %v1921, 0
    %1941 = vmatprep.subr.bf16.mxu0 0
    %1942 = vmatpush1.bf16.msra.mxu0 %v1934
    %1943 = vmatprep.subr.bf16.mxu0 0
    %1944 = vmatpush1.bf16.msra.mxu0 %v1935
    %1945 = vmatprep.subr.bf16.mxu0 0
    %1946 = vmatpush1.bf16.msra.mxu0 0
    %1947 = vmatprep.subr.bf16.mxu0 0
    %1948 = vmatpush1.bf16.msra.mxu0 0
    %1949 = vmatprep.subr.bf16.mxu0 0
    %1950 = vmatpush1.bf16.msra.mxu0 0
    %1951 = vmatprep.subr.bf16.mxu0 0
    %1952 = vmatpush1.bf16.msra.mxu0 0
    %1953 = vmatprep.subr.bf16.mxu0 0
    %1954 = vmatpush1.bf16.msra.mxu0 0
    %1955 = vmatprep.subr.bf16.mxu0 0
    %1956 = vmatpush1.bf16.msra.mxu0 0
    %1957 = vmatprep.subr.bf16.mxu0 0
    %1958 = vmatpush1.bf16.msra.mxu0 0
    %1959 = vmatprep.subr.bf16.mxu0 0
    %1960 = vmatpush1.bf16.msra.mxu0 0
    %1961 = vmatprep.subr.bf16.mxu0 0
    %1962 = vmatpush1.bf16.msra.mxu0 0
    %1963 = vmatprep.subr.bf16.mxu0 0
    %1964 = vmatpush1.bf16.msra.mxu0 0
    %1965 = vmatprep.subr.bf16.mxu0 0
    %1966 = vmatpush1.bf16.msra.mxu0 0
    %1967 = vmatprep.subr.bf16.mxu0 0
    %1968 = vmatpush1.bf16.msra.mxu0 0
    %1969 = vmatprep.subr.bf16.mxu0 0
    %1970 = vmatpush1.bf16.msra.mxu0 0
    %1971 = vmatprep.subr.bf16.mxu0 0
    %1972 = vmatpush1.bf16.msra.mxu0 0
    %1973 = vmatprep.mubr.bf16.mxu0 0
    %1974 = vmatmul.mubr.bf16.gmra.mrb[0].mxu0 %v1939
    %v1975 = vpop.f32.mrb[0].mxu0
    %v1976 = vadd.f32 0.0, %v1975
    %v1977 = vpop.f32.mrb[0].mxu0
    %v1978 = vpop.f32.mrb[0].mxu0
    %v1979 = vadd.f32 0.0, %v1978
    %v1980 = vpop.f32.mrb[0].mxu0
    %1981 = vdwg.mxu0
    %v1982 = vxor.u32 %v1976, 2147483648
    %v1983 = vxor.u32 %v1979, 2147483648
    %v1984 = vmul.f32 %v1982, 1.442695
    %v1985 = vpow.pop %v1984
    %v1986 = vmul.f32 %v1983, 1.442695
    %v1987 = vpow.pop %v1986
    %v1988 = vadd.f32 %v1985, 1.0
    %v1989 = vadd.f32 %v1987, 1.0
    %v1990 = vrcp.pop %v1988
    %v1991 = vmul.f32 1.0, %v1990
    %v1992 = vrcp.pop %v1989
    %v1993 = vmul.f32 1.0, %v1992
    %1996 = vrot.lane.b32.xlu0 %v1991, 96
    %v1997 = vpop.permute.xlu0 %1996
    %1998 = vrot.lane.b32.xlu0 %v1993, 96
    %v1999 = vpop.permute.xlu0 %1998
    %v2002 = vmul.f32 %v1976, %v1997
    %v2003 = vmul.f32 %v1979, %v1999
    %v2006 = vrot.slane %v2002, 6
    %v2007 = vrot.slane %v2003, 6
    %vm2010 = vcmask 1041408
    %v2011 = vsel %vm2010, 0.0, %v2006
    %v2012 = vsel %vm2010, 0.0, %v2007
    %v2013 = vsel %vm2010, %v2006, 0.0
    %v2014 = vsel %vm2010, %v2007, 0.0
    %v2015 = vld [vmem:[%s37] sm:$0x1]
    %v2016 = vld [vmem:[%s37 + $0x1] sm:$0x1]
    %v2017 = vld [vmem:[%s37 + $0x2] sm:$0x1]
    %v2018 = vld [vmem:[%s37 + $0x3] sm:$0x1]
    %v2019 = vld [vmem:[%s37 + $0x4] sm:$0x1]
    %v2021 = vlaneseq
    %v2022 = vshrl.u32 %v2021, 7
    %v2023 = vsub.s32 0, %v2022
    %v2024 = vrot.slane %v2015, %v2023
    %v2026 = vmul.f32 %v2011, %v2024
    %v2027 = vmul.f32 %v2012, %v2024
    %v2028 = vadd.f32 %v2026, 0.0
    %v2029 = vadd.f32 %v2027, 0.0
    %v2031 = vlaneseq
    %v2032 = vshrl.u32 %v2031, 7
    %v2033 = vsub.s32 0, %v2032
    %v2034 = vrot.slane %v2016, %v2033
    %v2036 = vmul.f32 %v2011, %v2034
    %v2037 = vmul.f32 %v2013, %v2034
    %v2038 = vmul.f32 %v2012, %v2034
    %v2039 = vmul.f32 %v2014, %v2034
    %vm2044 = vcmask 1046528
    %v2045 = vrot.slane %v2036, 1
    %v2046 = vrot.slane %v2037, 1
    %v2047 = vsel %vm2044, %v2045, %v2046
    %v2048 = vrot.slane %v2038, 1
    %v2049 = vrot.slane %v2039, 1
    %v2050 = vsel %vm2044, %v2048, %v2049
    %v2053 = vadd.f32 %v2028, %v2047
    %v2054 = vadd.f32 %v2029, %v2050
    %v2056 = vlaneseq
    %v2057 = vshrl.u32 %v2056, 7
    %v2058 = vsub.s32 0, %v2057
    %v2059 = vrot.slane %v2017, %v2058
    %v2061 = vmul.f32 %v2011, %v2059
    %v2062 = vmul.f32 %v2013, %v2059
    %v2063 = vmul.f32 %v2012, %v2059
    %v2064 = vmul.f32 %v2014, %v2059
    %vm2069 = vcmask 1045504
    %v2070 = vrot.slane %v2061, 2
    %v2071 = vrot.slane %v2062, 2
    %v2072 = vsel %vm2069, %v2070, %v2071
    %v2073 = vrot.slane %v2063, 2
    %v2074 = vrot.slane %v2064, 2
    %v2075 = vsel %vm2069, %v2073, %v2074
    %v2078 = vadd.f32 %v2053, %v2072
    %v2079 = vadd.f32 %v2054, %v2075
    %v2081 = vlaneseq
    %v2082 = vshrl.u32 %v2081, 7
    %v2083 = vsub.s32 0, %v2082
    %v2084 = vrot.slane %v2018, %v2083
    %v2086 = vmul.f32 %v2011, %v2084
    %v2087 = vmul.f32 %v2013, %v2084
    %v2088 = vmul.f32 %v2012, %v2084
    %v2089 = vmul.f32 %v2014, %v2084
    %vm2094 = vcmask 1044480
    %v2095 = vrot.slane %v2086, 3
    %v2096 = vrot.slane %v2087, 3
    %v2097 = vsel %vm2094, %v2095, %v2096
    %v2098 = vrot.slane %v2088, 3
    %v2099 = vrot.slane %v2089, 3
    %v2100 = vsel %vm2094, %v2098, %v2099
    %v2103 = vadd.f32 %v2078, %v2097
    %v2104 = vadd.f32 %v2079, %v2100
    %v2106 = vlaneseq
    %v2107 = vshrl.u32 %v2106, 7
    %v2108 = vsub.s32 0, %v2107
    %v2109 = vrot.slane %v2019, %v2108
    %v2111 = vmul.f32 %v2011, %v2109
    %v2112 = vmul.f32 %v2013, %v2109
    %v2113 = vmul.f32 %v2012, %v2109
    %v2114 = vmul.f32 %v2014, %v2109
    %v2119 = vrot.slane %v2111, 4
    %v2120 = vrot.slane %v2112, 4
    %v2121 = vsel %vm774, %v2119, %v2120
    %v2122 = vrot.slane %v2113, 4
    %v2123 = vrot.slane %v2114, 4
    %v2124 = vsel %vm774, %v2122, %v2123
    %v2127 = vadd.f32 %v2103, %v2121
    %v2128 = vadd.f32 %v2104, %v2124
    %v2129 = vld [vmem:[%s39] sm:$0x1]
    %v2131 = vlaneseq
    %v2132 = vshrl.u32 %v2131, 7
    %v2133 = vsub.s32 0, %v2132
    %v2134 = vrot.slane %v2129, %v2133
    %v2136 = vadd.f32 %v2127, %v2134
    %v2137 = vadd.f32 %v2128, %v2134
    %v2138 = vxor.u32 %v2136, 2147483648
    %v2139 = vxor.u32 %v2137, 2147483648
    %v2140 = vmul.f32 %v2138, 1.442695
    %v2141 = vpow.pop %v2140
    %v2142 = vmul.f32 %v2139, 1.442695
    %v2143 = vpow.pop %v2142
    %v2144 = vadd.f32 %v2141, 1.0
    %v2145 = vadd.f32 %v2143, 1.0
    %v2146 = vrcp.pop %v2144
    %v2147 = vmul.f32 1.0, %v2146
    %v2148 = vrcp.pop %v2145
    %v2149 = vmul.f32 1.0, %v2148
    %v2150 = vmul.f32 %v2136, %v2147
    %v2151 = vmul.f32 %v2137, %v2149
    %v2152 = vpack.c.bf16 %v2151, %v2150
    %v2153 = vld [vmem:[%s41] sm:$0xf]
    %v2154 = vld [vmem:[%s41 + $0x4] sm:$0xf]
    %v2155 = vld [vmem:[%s41 + $0x8] sm:$0xf]
    %v2156 = vld [vmem:[%s41 + $0xc] sm:$0xf]
    %v2161 = vunpack.c.l.b16 %v2153
    %v2162 = vunpack.c.l.b16 %v2154
    %v2163 = vunpack.c.l.b16 %v2155
    %v2164 = vunpack.c.l.b16 %v2156
    %v2165 = vpack.c.b16 %v2162, %v2161
    %v2166 = vpack.c.b16 %v2164, %v2163
    %v2170 = vsel %vm248, %v2152, 0
    %2172 = vmatprep.subr.bf16.mxu0 0
    %2173 = vmatpush1.bf16.msra.mxu0 %v2165
    %2174 = vmatprep.subr.bf16.mxu0 0
    %2175 = vmatpush1.bf16.msra.mxu0 %v2166
    %2176 = vmatprep.subr.bf16.mxu0 0
    %2177 = vmatpush1.bf16.msra.mxu0 0
    %2178 = vmatprep.subr.bf16.mxu0 0
    %2179 = vmatpush1.bf16.msra.mxu0 0
    %2180 = vmatprep.subr.bf16.mxu0 0
    %2181 = vmatpush1.bf16.msra.mxu0 0
    %2182 = vmatprep.subr.bf16.mxu0 0
    %2183 = vmatpush1.bf16.msra.mxu0 0
    %2184 = vmatprep.subr.bf16.mxu0 0
    %2185 = vmatpush1.bf16.msra.mxu0 0
    %2186 = vmatprep.subr.bf16.mxu0 0
    %2187 = vmatpush1.bf16.msra.mxu0 0
    %2188 = vmatprep.subr.bf16.mxu0 0
    %2189 = vmatpush1.bf16.msra.mxu0 0
    %2190 = vmatprep.subr.bf16.mxu0 0
    %2191 = vmatpush1.bf16.msra.mxu0 0
    %2192 = vmatprep.subr.bf16.mxu0 0
    %2193 = vmatpush1.bf16.msra.mxu0 0
    %2194 = vmatprep.subr.bf16.mxu0 0
    %2195 = vmatpush1.bf16.msra.mxu0 0
    %2196 = vmatprep.subr.bf16.mxu0 0
    %2197 = vmatpush1.bf16.msra.mxu0 0
    %2198 = vmatprep.subr.bf16.mxu0 0
    %2199 = vmatpush1.bf16.msra.mxu0 0
    %2200 = vmatprep.subr.bf16.mxu0 0
    %2201 = vmatpush1.bf16.msra.mxu0 0
    %2202 = vmatprep.subr.bf16.mxu0 0
    %2203 = vmatpush1.bf16.msra.mxu0 0
    %2204 = vmatprep.mubr.bf16.mxu0 0
    %2205 = vmatmul.mubr.bf16.gmra.mrb[0].mxu0 %v2170
    %v2206 = vpop.f32.mrb[0].mxu0
    %v2207 = vadd.f32 0.0, %v2206
    %v2208 = vpop.f32.mrb[0].mxu0
    %v2209 = vpop.f32.mrb[0].mxu0
    %v2210 = vadd.f32 0.0, %v2209
    %v2211 = vpop.f32.mrb[0].mxu0
    %2212 = vdwg.mxu0
    %v2213 = vadd.f32 %v1875, %v2207
    %v2214 = vadd.f32 %v1876, %v2210
    %v2215 = vld [vmem:[%s43] sm:$0x1]
    %v2216 = vld [vmem:[%s45] sm:$0x1]
    %v2217 = vsel %vm248, %v2213, 0.0
    %2218 = vadd.xlane.f32.xlu0 %v2217
    %v2219 = vpop.xlane.xlu0 %2218
    %v2220 = vsel %vm248, %v2214, 0.0
    %2221 = vadd.xlane.f32.xlu0 %v2220
    %v2222 = vpop.xlane.xlu0 %2221
    %v2223 = vmul.f32 %v2219, %v255
    %v2224 = vmul.f32 %v2222, %v255
    %v2225 = vsub.f32 %v2213, %v2223
    %v2226 = vsub.f32 %v2214, %v2224
    %v2227 = vmul.f32 %v2225, %v2225
    %v2228 = vmul.f32 %v2226, %v2226
    %v2229 = vsel %vm248, %v2227, 0.0
    %2230 = vadd.xlane.f32.xlu0 %v2229
    %v2231 = vpop.xlane.xlu0 %2230
    %v2232 = vsel %vm248, %v2228, 0.0
    %2233 = vadd.xlane.f32.xlu0 %v2232
    %v2234 = vpop.xlane.xlu0 %2233
    %v2235 = vmul.f32 %v2231, %v255
    %v2236 = vmul.f32 %v2234, %v255
    %v2237 = vadd.f32 %v2235, 1e-05
    %v2238 = vadd.f32 %v2236, 1e-05
    %v2239 = vrsqrt.pop %v2237
    %v2240 = vrsqrt.pop %v2238
    %v2241 = vmul.f32 %v2225, %v2239
    %v2242 = vmul.f32 %v2226, %v2240
    %v2244 = vlaneseq
    %v2245 = vshrl.u32 %v2244, 7
    %v2246 = vsub.s32 0, %v2245
    %v2247 = vrot.slane %v2215, %v2246
    %v2249 = vmul.f32 %v2241, %v2247
    %v2250 = vmul.f32 %v2242, %v2247
    %v2252 = vlaneseq
    %v2253 = vshrl.u32 %v2252, 7
    %v2254 = vsub.s32 0, %v2253
    %v2255 = vrot.slane %v2216, %v2254
    %v2257 = vadd.f32 %v2249, %v2255
    %v2258 = vadd.f32 %v2250, %v2255
    %v2259 = vpack.c.bf16 %v2258, %v2257
    %v2260 = vld [vmem:[%s47] sm:$0xf]
    %v2261 = vld [vmem:[%s47 + $0x4] sm:$0xf]
    %v2262 = vld [vmem:[%s47 + $0x8] sm:$0xf]
    %v2263 = vld [vmem:[%s47 + $0xc] sm:$0xf]
    %v2264 = vld [vmem:[%s49] sm:$0x1]
    %v2266 = vlaneseq
    %v2267 = vshrl.u32 %v2266, 7
    %v2268 = vsub.s32 0, %v2267
    %v2269 = vrot.slane %v2264, %v2268
    %v2275 = vunpack.c.l.b16 %v2260
    %v2276 = vunpack.c.l.b16 %v2261
    %v2277 = vunpack.c.l.b16 %v2262
    %v2278 = vunpack.c.l.b16 %v2263
    %v2279 = vpack.c.b16 %v2276, %v2275
    %v2280 = vpack.c.b16 %v2278, %v2277
    %v2284 = vsel %vm248, %v2259, 0
    %2286 = vmatprep.subr.bf16.mxu0 0
    %2287 = vmatpush1.bf16.msra.mxu0 %v2279
    %2288 = vmatprep.subr.bf16.mxu0 0
    %2289 = vmatpush1.bf16.msra.mxu0 %v2280
    %2290 = vmatprep.subr.bf16.mxu0 0
    %2291 = vmatpush1.bf16.msra.mxu0 0
    %2292 = vmatprep.subr.bf16.mxu0 0
    %2293 = vmatpush1.bf16.msra.mxu0 0
    %2294 = vmatprep.subr.bf16.mxu0 0
    %2295 = vmatpush1.bf16.msra.mxu0 0
    %2296 = vmatprep.subr.bf16.mxu0 0
    %2297 = vmatpush1.bf16.msra.mxu0 0
    %2298 = vmatprep.subr.bf16.mxu0 0
    %2299 = vmatpush1.bf16.msra.mxu0 0
    %2300 = vmatprep.subr.bf16.mxu0 0
    %2301 = vmatpush1.bf16.msra.mxu0 0
    %2302 = vmatprep.subr.bf16.mxu0 0
    %2303 = vmatpush1.bf16.msra.mxu0 0
    %2304 = vmatprep.subr.bf16.mxu0 0
    %2305 = vmatpush1.bf16.msra.mxu0 0
    %2306 = vmatprep.subr.bf16.mxu0 0
    %2307 = vmatpush1.bf16.msra.mxu0 0
    %2308 = vmatprep.subr.bf16.mxu0 0
    %2309 = vmatpush1.bf16.msra.mxu0 0
    %2310 = vmatprep.subr.bf16.mxu0 0
    %2311 = vmatpush1.bf16.msra.mxu0 0
    %2312 = vmatprep.subr.bf16.mxu0 0
    %2313 = vmatpush1.bf16.msra.mxu0 0
    %2314 = vmatprep.subr.bf16.mxu0 0
    %2315 = vmatpush1.bf16.msra.mxu0 0
    %2316 = vmatprep.subr.bf16.mxu0 0
    %2317 = vmatpush1.bf16.msra.mxu0 0
    %2318 = vmatprep.mubr.bf16.mxu0 0
    %2319 = vmatmul.mubr.bf16.gmra.mrb[0].mxu0 %v2284
    %v2320 = vpop.f32.mrb[0].mxu0
    %v2321 = vadd.f32 %v2269, %v2320
    %v2322 = vpop.f32.mrb[0].mxu0
    %v2323 = vpop.f32.mrb[0].mxu0
    %v2324 = vadd.f32 %v2269, %v2323
    %v2325 = vpop.f32.mrb[0].mxu0
    %2326 = vdwg.mxu0
    %v2327 = vxor.u32 %v2321, 2147483648
    %v2328 = vxor.u32 %v2324, 2147483648
    %v2329 = vmul.f32 %v2327, 1.442695
    %v2330 = vpow.pop %v2329
    %v2331 = vmul.f32 %v2328, 1.442695
    %v2332 = vpow.pop %v2331
    %v2333 = vadd.f32 %v2330, 1.0
    %v2334 = vadd.f32 %v2332, 1.0
    %v2335 = vrcp.pop %v2333
    %v2336 = vmul.f32 1.0, %v2335
    %v2337 = vrcp.pop %v2334
    %v2338 = vmul.f32 1.0, %v2337
    %v2339 = vmul.f32 %v2321, %v2336
    %v2340 = vmul.f32 %v2324, %v2338
    %v2341 = vpack.c.bf16 %v2340, %v2339
    %v2342 = vld [vmem:[%s51] sm:$0xf]
    %v2343 = vld [vmem:[%s51 + $0x4] sm:$0xf]
    %v2344 = vld [vmem:[%s51 + $0x8] sm:$0xf]
    %v2345 = vld [vmem:[%s51 + $0xc] sm:$0xf]
    %v2346 = vld [vmem:[%s51 + $0x10] sm:$0xf]
    %v2347 = vld [vmem:[%s51 + $0x14] sm:$0xf]
    %v2348 = vld [vmem:[%s51 + $0x18] sm:$0xf]
    %v2349 = vld [vmem:[%s51 + $0x1c] sm:$0xf]
    %v2350 = vld [vmem:[%s53] sm:$0x1]
    %v2352 = vlaneseq
    %v2353 = vshrl.u32 %v2352, 7
    %v2354 = vsub.s32 0, %v2353
    %v2355 = vrot.slane %v2350, %v2354
    %v2365 = vunpack.c.l.b16 %v2342
    %v2366 = vunpack.c.l.b16 %v2343
    %v2367 = vunpack.c.l.b16 %v2344
    %v2368 = vunpack.c.l.b16 %v2345
    %v2369 = vunpack.c.l.b16 %v2346
    %v2370 = vunpack.c.l.b16 %v2347
    %v2371 = vunpack.c.l.b16 %v2348
    %v2372 = vunpack.c.l.b16 %v2349
    %v2373 = vpack.c.b16 %v2366, %v2365
    %v2374 = vpack.c.b16 %v2368, %v2367
    %v2375 = vpack.c.b16 %v2370, %v2369
    %v2376 = vpack.c.b16 %v2372, %v2371
    %v2382 = vsel %vm414, %v2341, 0
    %2384 = vmatprep.subr.bf16.mxu0 0
    %2385 = vmatpush1.bf16.msra.mxu0 %v2373
    %2386 = vmatprep.subr.bf16.mxu0 0
    %2387 = vmatpush1.bf16.msra.mxu0 %v2374
    %2388 = vmatprep.subr.bf16.mxu0 0
    %2389 = vmatpush1.bf16.msra.mxu0 %v2375
    %2390 = vmatprep.subr.bf16.mxu0 0
    %2391 = vmatpush1.bf16.msra.mxu0 %v2376
    %2392 = vmatprep.subr.bf16.mxu0 0
    %2393 = vmatpush1.bf16.msra.mxu0 0
    %2394 = vmatprep.subr.bf16.mxu0 0
    %2395 = vmatpush1.bf16.msra.mxu0 0
    %2396 = vmatprep.subr.bf16.mxu0 0
    %2397 = vmatpush1.bf16.msra.mxu0 0
    %2398 = vmatprep.subr.bf16.mxu0 0
    %2399 = vmatpush1.bf16.msra.mxu0 0
    %2400 = vmatprep.subr.bf16.mxu0 0
    %2401 = vmatpush1.bf16.msra.mxu0 0
    %2402 = vmatprep.subr.bf16.mxu0 0
    %2403 = vmatpush1.bf16.msra.mxu0 0
    %2404 = vmatprep.subr.bf16.mxu0 0
    %2405 = vmatpush1.bf16.msra.mxu0 0
    %2406 = vmatprep.subr.bf16.mxu0 0
    %2407 = vmatpush1.bf16.msra.mxu0 0
    %2408 = vmatprep.subr.bf16.mxu0 0
    %2409 = vmatpush1.bf16.msra.mxu0 0
    %2410 = vmatprep.subr.bf16.mxu0 0
    %2411 = vmatpush1.bf16.msra.mxu0 0
    %2412 = vmatprep.subr.bf16.mxu0 0
    %2413 = vmatpush1.bf16.msra.mxu0 0
    %2414 = vmatprep.subr.bf16.mxu0 0
    %2415 = vmatpush1.bf16.msra.mxu0 0
    %2416 = vmatprep.mubr.bf16.mxu0 0
    %2417 = vmatmul.mubr.bf16.gmra.mrb[0].mxu0 %v2382
    %v2418 = vpop.f32.mrb[0].mxu0
    %v2419 = vadd.f32 %v2355, %v2418
    %v2420 = vpop.f32.mrb[0].mxu0
    %v2421 = vpop.f32.mrb[0].mxu0
    %v2422 = vadd.f32 %v2355, %v2421
    %v2423 = vpop.f32.mrb[0].mxu0
    %2424 = vdwg.mxu0
    %v2425 = vmul.f32 %v2419, 0.5
    %v2426 = vmul.f32 %v2422, 0.5
    %v2427 = vadd.f32 %v2425, %v2213
    %v2428 = vadd.f32 %v2426, %v2214
    %v2429 = vld [vmem:[%s55] sm:$0x1]
    %v2430 = vld [vmem:[%s57] sm:$0x1]
    %v2431 = vsel %vm248, %v2427, 0.0
    %2432 = vadd.xlane.f32.xlu0 %v2431
    %v2433 = vpop.xlane.xlu0 %2432
    %v2434 = vsel %vm248, %v2428, 0.0
    %2435 = vadd.xlane.f32.xlu0 %v2434
    %v2436 = vpop.xlane.xlu0 %2435
    %v2437 = vmul.f32 %v2433, %v255
    %v2438 = vmul.f32 %v2436, %v255
    %v2439 = vsub.f32 %v2427, %v2437
    %v2440 = vsub.f32 %v2428, %v2438
    %v2441 = vmul.f32 %v2439, %v2439
    %v2442 = vmul.f32 %v2440, %v2440
    %v2443 = vsel %vm248, %v2441, 0.0
    %2444 = vadd.xlane.f32.xlu0 %v2443
    %v2445 = vpop.xlane.xlu0 %2444
    %v2446 = vsel %vm248, %v2442, 0.0
    %2447 = vadd.xlane.f32.xlu0 %v2446
    %v2448 = vpop.xlane.xlu0 %2447
    %v2449 = vmul.f32 %v2445, %v255
    %v2450 = vmul.f32 %v2448, %v255
    %v2451 = vadd.f32 %v2449, 1e-05
    %v2452 = vadd.f32 %v2450, 1e-05
    %v2453 = vrsqrt.pop %v2451
    %v2454 = vrsqrt.pop %v2452
    %v2455 = vmul.f32 %v2439, %v2453
    %v2456 = vmul.f32 %v2440, %v2454
    %v2458 = vlaneseq
    %v2459 = vshrl.u32 %v2458, 7
    %v2460 = vsub.s32 0, %v2459
    %v2461 = vrot.slane %v2429, %v2460
    %v2463 = vmul.f32 %v2455, %v2461
    %v2464 = vmul.f32 %v2456, %v2461
    %v2466 = vlaneseq
    %v2467 = vshrl.u32 %v2466, 7
    %v2468 = vsub.s32 0, %v2467
    %v2469 = vrot.slane %v2430, %v2468
    %v2471 = vadd.f32 %v2463, %v2469
    %v2472 = vadd.f32 %v2464, %v2469
    %2473 = vst.msk [vmem:[#allocation19] sm:$0xff] %vm248, %v2471
    %2474 = vst.msk [vmem:[#allocation19 + $0x8] sm:$0xff] %vm248, %v2472
    // Predicated region
    $region158: #{tpu_custom_call.1} parent=1 // pred_check
      _
    $region159: #{tpu_custom_call.1} parent=1 // pred_check_branch
      %2476 = sbr.rel (0) target = $region161
    $region160: #{tpu_custom_call.1} parent=1 // pred_region
      %s2478 = ssub.s32 256, 256
      %2479 = vsyncadd [#allocation4], %s2478
      %s2480 = sshll.u32 [#allocation19], 4
      %s2481 = int_to_ptr.vmem [resolvable:$true] %s2480
      %2486 = dma.vmem_to_hbm [thread:$0]  %s2481, 256, %s59, [#allocation4], 128, 128, 8
    $region161: #{tpu_custom_call.1} parent=1 // pred_fallthru
      _
    // Predicated region
    $region162: #{tpu_custom_call.1} parent=1 // pred_check
      _
    $region163: #{tpu_custom_call.1} parent=1 // pred_check_branch
      %2488 = sbr.rel (0) target = $region165
    $region164: #{tpu_custom_call.1} parent=1 // pred_region
      %s2490 = ssub.s32 256, 256
      %2491 = vsyncadd [#allocation21], %s2490
      %s2492 = sshll.u32 [#allocation20], 4
      %s2493 = int_to_ptr.vmem [resolvable:$true] %s2492
      %2498 = dma.vmem_to_hbm [thread:$0]  %s2493, 256, %s61, [#allocation21], 128, 128, 8
    $region165: #{tpu_custom_call.1} parent=1 // pred_fallthru
      _
    // Predicated region
    $region166: #{tpu_custom_call.1} parent=1 // pred_check
      _
    $region167: #{tpu_custom_call.1} parent=1 // pred_check_branch
      %2500 = sbr.rel (0) target = $region169
    $region168: #{tpu_custom_call.1} parent=1 // pred_region
      %2501 = dma.done [#allocation4], 256
    $region169: #{tpu_custom_call.1} parent=1 // pred_fallthru
      _
    // Predicated region
    $region170: #{tpu_custom_call.1} parent=1 // pred_check
      _
    $region171: #{tpu_custom_call.1} parent=1 // pred_check_branch
      %2503 = sbr.rel (0) target = $region173
    $region172: #{tpu_custom_call.1} parent=1 // pred_region
      %2504 = dma.done [#allocation21], 256
    $region173: #{tpu_custom_call.1} parent=1 // pred_fallthru
      _
    %2505 = vsyncpa [#allocation3], 1
    %2506 = vsyncpa [#allocation6], 1
    %2507 = vsyncpa [#allocation9], 1
    %2508 = vsyncpa [#allocation12], 1
    %2509 = vsyncpa [#allocation15], 1
    %2510 = vsyncpa [#allocation18], 1
    %2511 = vsyncpa [#allocation4], 1
    %2512 = vsyncpa [#allocation21], 1

</llo_original>
